<compile_context>
chip_gen: v5e
topology: v5e:2x2
jax: 0.10.0
libtpu: 0.0.40
codegen_flags: <defaults>
</compile_context>

<pallas_src>
import functools

import jax
import jax.numpy as jnp
from jax import lax
from jax.experimental import pallas as pl
from jax.experimental.pallas import tpu as pltpu

LANE = 128     # lane width (channel padding target)
SUB = 16       # bf16 sublane tile; padded widths are multiples of this


def _round_up(x, m):
    return ((x + m - 1) // m) * m


def _pad_to_lane(c):
    return max(LANE, _round_up(c, LANE))


def _pick_row_block(Ho, stride, Wp, chid_p, budget_bytes=6 << 20):
    """Largest divisor TR of Ho whose expanded (bf16) window fits the budget."""
    if stride != 1:
        # The stride-2 path uses a de-interleaved input layout that currently
        # covers the whole image in a single grid step.
        return Ho
    for tr in range(Ho, 0, -1):
        if Ho % tr:
            continue
        if (tr + 2) * Wp * chid_p * 2 <= budget_bytes:
            return tr
    return 1


# ----------------------------------------------------------------------------
# Fused Pallas kernel
# ----------------------------------------------------------------------------

def _make_fused_kernel(*, stride, use_res, H, W, TR, TR_in, Wo, nblocks):
    s = stride
    if s == 1:
        roff = (0, 1, 2)
        coff = (0, 1, 2)
    else:
        # Input is pre-de-interleaved into [even rows | odd rows] and
        # [even cols | odd cols]; each 3x3 stride-2 tap is a unit-stride slice.
        roff = (0, TR + 1, 1)
        coff = (0, Wo + 1, 1)
    # Does the (last) window's last row land on the bottom spatial-halo row?
    bottom_halo = ((nblocks - 1) * TR * s + TR_in - 1) == (H + 1)

    def kernel(x_ref, w1_ref, b1_ref, wd_ref, bd_ref, w2_ref, b2_ref,
               o_ref, h_ref):
        j = pl.program_id(1)
        row0 = pl.multiple_of(j * (TR * s), TR * s)

        Wp = x_ref.shape[1]
        cin_p = x_ref.shape[-1]
        chid_p = w1_ref.shape[1]
        cout_p = o_ref.shape[-1]

        # ---- stage 1: 1x1 expand conv (BN folded) + ReLU6 -> bf16 scratch ---
        xwin = x_ref[pl.ds(row0, TR_in), :, :]              # (TR_in, Wp, Cin) bf16
        y1 = jnp.dot(xwin.reshape(TR_in * Wp, cin_p), w1_ref[...],
                     preferred_element_type=jnp.float32)
        y1 = jnp.clip(y1 + b1_ref[...], 0.0, 6.0).reshape(TR_in, Wp, chid_p)
        # Halo / alignment-pad columns must be exact zeros for the depthwise
        # "same" padding (after the bias add they hold clip(b1, 0, 6)).
        cid = lax.broadcasted_iota(jnp.int32, (1, Wp, chid_p), 1)
        col_ok = (cid >= 1) & (cid <= W)
        h_ref[...] = jnp.where(col_ok, y1, 0.0).astype(h_ref.dtype)

        # Vertical halo rows (only where the window actually contains them).
        @pl.when(j == 0)
        def _():
            h_ref[0] = jnp.zeros((Wp, chid_p), h_ref.dtype)

        if bottom_halo:
            @pl.when(j == nblocks - 1)
            def _():
                h_ref[TR_in - 1] = jnp.zeros((Wp, chid_p), h_ref.dtype)

        # ---- stage 2: 3x3 depthwise conv (BN folded) + ReLU6 ----------------
        wd = wd_ref[...]                                    # (3, 3, Chid) f32
        acc = None
        for dh in range(3):
            for dw in range(3):
                tap = h_ref[roff[dh]:roff[dh] + TR, coff[dw]:coff[dw] + Wo, :]
                t = tap.astype(jnp.float32) * wd[dh, dw].reshape(1, 1, chid_p)
                acc = t if acc is None else acc + t
        z = jnp.clip(acc + bd_ref[...].reshape(1, 1, chid_p), 0.0, 6.0)

        # ---- stage 3: 1x1 project conv (BN folded) [+ residual] -------------
        z2 = z.reshape(TR * Wo, chid_p).astype(jnp.bfloat16)
        y3 = jnp.dot(z2, w2_ref[...], preferred_element_type=jnp.float32)
        y3 = y3 + b2_ref[...]
        if use_res:
            # stride == 1 here: the residual is the interior of the resident
            # padded input window (bf16-rounded, like the streamed operand).
            xres = x_ref[pl.ds(row0 + 1, TR), 1:1 + Wo, :]
            y3 = y3 + xres.astype(jnp.float32).reshape(TR * Wo, cin_p)
        o_ref[...] = y3.reshape(TR, Wo, cout_p).astype(o_ref.dtype)

    return kernel


def _fused_call(xp, w1s, b1, wds, bd, w2s, b2, *, stride, use_res, H, W, Ho, Wo):
    N, HPX, WPX, cin_p = xp.shape
    chid_p = w1s.shape[1]
    cout_p = w2s.shape[1]
    TR = _pick_row_block(Ho, stride, WPX, chid_p)
    TR_in = (TR - 1) * stride + 3
    nb = Ho // TR

    kernel = _make_fused_kernel(stride=stride, use_res=use_res, H=H, W=W,
                                TR=TR, TR_in=TR_in, Wo=Wo, nblocks=nb)

    return pl.pallas_call(
        kernel,
        out_shape=jax.ShapeDtypeStruct((N, Ho, Wo, cout_p), jnp.bfloat16),
        grid=(N, nb),
        in_specs=[
            # Whole padded image per batch element; constant in j, so it stays
            # resident in VMEM across the row blocks of one image.
            pl.BlockSpec((None, HPX, WPX, cin_p), lambda n, j: (n, 0, 0, 0)),
            pl.BlockSpec((cin_p, chid_p), lambda n, j: (0, 0)),
            pl.BlockSpec((1, chid_p), lambda n, j: (0, 0)),
            pl.BlockSpec((3, 3, chid_p), lambda n, j: (0, 0, 0)),
            pl.BlockSpec((1, chid_p), lambda n, j: (0, 0)),
            pl.BlockSpec((chid_p, cout_p), lambda n, j: (0, 0)),
            pl.BlockSpec((1, cout_p), lambda n, j: (0, 0)),
        ],
        out_specs=pl.BlockSpec((None, TR, Wo, cout_p), lambda n, j: (n, j, 0, 0)),
        scratch_shapes=[pltpu.VMEM((TR_in, WPX, chid_p), jnp.bfloat16)],
        compiler_params=pltpu.CompilerParams(
            dimension_semantics=("parallel", "arbitrary"),
            vmem_limit_bytes=32 * 1024 * 1024),
    )(xp, w1s, b1, wds, bd, w2s, b2)


# ----------------------------------------------------------------------------
# PyTorch-facing wrapper (NCHW in / NCHW out, eval-mode BatchNorm folded)
# ----------------------------------------------------------------------------

def inverted_residual_bottleneck(x_nchw, params, *, stride, inp, oup):
    use_res = (stride == 1 and inp == oup)
    hid = params["w1"].shape[1]
    cin_p, chid_p, cout_p = _pad_to_lane(inp), _pad_to_lane(hid), _pad_to_lane(oup)

    N, _, H, W = x_nchw.shape
    Ho = (H - 1) // stride + 1
    Wo = (W - 1) // stride + 1

    x = jnp.transpose(x_nchw, (0, 2, 3, 1)).astype(jnp.float32)      # NHWC

    if stride == 1:
        Wk = _round_up(W + 2, SUB)
        xp = jnp.pad(x, ((0, 0), (1, 1), (1, Wk - W - 1), (0, 0)))
    else:
        # TODO(synk): stride-2 path assumes even H/W (true for MobileNet maps).
        assert stride == 2 and H % 2 == 0 and W % 2 == 0
        xpad = jnp.pad(x, ((0, 0), (1, 1), (1, 1), (0, 0)))
        # De-interleave rows/cols into [even | odd] (a 1x1 conv commutes with
        # spatial permutations) so the kernel's taps are unit-stride slices.
        xg = jnp.concatenate(
            [xpad[:, 0:2 * Ho + 1:2], xpad[:, 1:2 * Ho:2]], axis=1)
        xg = jnp.concatenate(
            [xg[:, :, 0:2 * Wo + 1:2], xg[:, :, 1:2 * Wo:2]], axis=2)
        Wk = _round_up(2 * Wo + 1, SUB)
        xp = jnp.pad(xg, ((0, 0), (0, 0), (0, Wk - (2 * Wo + 1)), (0, 0)))
    xp = jnp.pad(xp, ((0, 0), (0, 0), (0, 0), (0, cin_p - inp))).astype(jnp.bfloat16)

    # Fold BN scale into the conv weights; lane-pad; bf16 for MXU operands.
    w1s = jnp.pad(params["w1"] * params["s1"][None, :],
                  ((0, cin_p - inp), (0, chid_p - hid))).astype(jnp.bfloat16)
    b1 = jnp.pad(params["b1"], (0, chid_p - hid)).reshape(1, chid_p)
    wds = jnp.pad(params["wd"] * params["sd"][None, None, :],
                  ((0, 0), (0, 0), (0, chid_p - hid)))
    bd = jnp.pad(params["bd"], (0, chid_p - hid)).reshape(1, chid_p)
    w2s = jnp.pad(params["w2"] * params["s2"][None, :],
                  ((0, chid_p - hid), (0, cout_p - oup))).astype(jnp.bfloat16)
    b2 = jnp.pad(params["b2"], (0, cout_p - oup)).reshape(1, cout_p)

    out = _fused_call(xp, w1s, b1, wds, bd, w2s, b2, stride=stride,
                      use_res=use_res, H=H, W=W, Ho=Ho, Wo=Wo)
    # Slice off lane padding, NHWC -> NCHW, back to f32.
    return jnp.transpose(out[..., :oup], (0, 3, 1, 2)).astype(jnp.float32)


# ----------------------------------------------------------------------------
# Deterministic parameter construction (folds BN into scale/bias)
# ----------------------------------------------------------------------------

def _fold_bn(gamma, beta, mean, var, eps=1e-5):
    scale = gamma / jnp.sqrt(var + eps)
    bias = beta - mean * scale
    return scale, bias


def make_params(key, inp, oup, expand_ratio):
    hid = inp * expand_ratio
    ks = jax.random.split(key, 15)

    def bn(kg, kb, km, kv, c):
        gamma = 0.5 + jax.random.uniform(kg, (c,), jnp.float32)
        beta = 0.1 * jax.random.normal(kb, (c,), jnp.float32)
        mean = 0.1 * jax.random.normal(km, (c,), jnp.float32)
        var = 0.5 + jax.random.uniform(kv, (c,), jnp.float32)
        return _fold_bn(gamma, beta, mean, var)

    w1 = 0.2 * jax.random.normal(ks[0], (inp, hid), jnp.float32)    # 1x1 expand
    wd = 0.2 * jax.random.normal(ks[1], (3, 3, hid), jnp.float32)   # depthwise
    w2 = 0.2 * jax.random.normal(ks[2], (hid, oup), jnp.float32)    # 1x1 project
    s1, b1 = bn(ks[3], ks[4], ks[5], ks[6], hid)
    sd, bd = bn(ks[7], ks[8], ks[9], ks[10], hid)
    s2, b2 = bn(ks[11], ks[12], ks[13], ks[14], oup)
    return dict(w1=w1, s1=s1, b1=b1, wd=wd, sd=sd, bd=bd, w2=w2, s2=s2, b2=b2)


# ----------------------------------------------------------------------------
# References for correctness checks
# ----------------------------------------------------------------------------

def reference_f32(x_nchw, params, *, stride, inp, oup):
    """PyTorch eval-mode semantics in pure f32 (loose sanity check)."""
    use_res = (stride == 1 and inp == oup)
    x = jnp.transpose(x_nchw, (0, 2, 3, 1)).astype(jnp.float32)
    hid = params["w1"].shape[1]
    dn = ("NHWC", "HWIO", "NHWC")
    hp = lax.Precision.HIGHEST
    h = lax.conv_general_dilated(x, params["w1"].reshape(1, 1, inp, hid),
                                 (1, 1), "VALID", dimension_numbers=dn,
                                 precision=hp)
    h = jnp.clip(h * params["s1"] + params["b1"], 0.0, 6.0)
    h = lax.conv_general_dilated(h, params["wd"].reshape(3, 3, 1, hid),
                                 (stride, stride), ((1, 1), (1, 1)),
                                 dimension_numbers=dn, feature_group_count=hid,
                                 precision=hp)
    h = jnp.clip(h * params["sd"] + params["bd"], 0.0, 6.0)
    o = lax.conv_general_dilated(h, params["w2"].reshape(1, 1, hid, oup),
                                 (1, 1), "VALID", dimension_numbers=dn,
                                 precision=hp)
    o = o * params["s2"] + params["b2"]
    if use_res:
        o = o + x
    return jnp.transpose(o, (0, 3, 1, 2))


def reference_matched(x_nchw, params, *, stride, inp, oup):
    """Same numerics as the Pallas kernel (bf16 MXU operands / intermediates,
    f32 accumulation, bf16 output)."""
    use_res = (stride == 1 and inp == oup)
    x = jnp.transpose(x_nchw, (0, 2, 3, 1)).astype(jnp.float32)
    xb = x.astype(jnp.bfloat16)
    hid = params["w1"].shape[1]
    dn = ("NHWC", "HWIO", "NHWC")
    hp = lax.Precision.HIGHEST
    w1s = (params["w1"] * params["s1"][None, :]).astype(jnp.bfloat16)
    wds = params["wd"] * params["sd"][None, None, :]
    w2s = (params["w2"] * params["s2"][None, :]).astype(jnp.bfloat16)

    h = lax.conv_general_dilated(xb, w1s.reshape(1, 1, inp, hid), (1, 1),
                                 "VALID", dimension_numbers=dn, precision=hp,
                                 preferred_element_type=jnp.float32)
    h = jnp.clip(h + params["b1"], 0.0, 6.0)
    h = h.astype(jnp.bfloat16).astype(jnp.float32)    # kernel's bf16 scratch
    h = lax.conv_general_dilated(h, wds.reshape(3, 3, 1, hid), (stride, stride),
                                 ((1, 1), (1, 1)), dimension_numbers=dn,
                                 feature_group_count=hid, precision=hp)
    h = jnp.clip(h + params["bd"], 0.0, 6.0)
    o = lax.conv_general_dilated(h.astype(jnp.bfloat16),
                                 w2s.reshape(1, 1, hid, oup), (1, 1), "VALID",
                                 dimension_numbers=dn, precision=hp,
                                 preferred_element_type=jnp.float32)
    o = o + params["b2"]
    if use_res:
        o = o + xb.astype(jnp.float32)
    o = o.astype(jnp.bfloat16).astype(jnp.float32)    # kernel writes bf16
    return jnp.transpose(o, (0, 3, 1, 2))


# ----------------------------------------------------------------------------

if __name__ == "__main__":
    key = jax.random.PRNGKey(0)
    kx, kp = jax.random.split(key)

    configs = [
        dict(inp=4, oup=4, stride=1, expand_ratio=6),   # residual branch
        dict(inp=4, oup=8, stride=1, expand_ratio=6),   # no residual branch
        dict(inp=4, oup=8, stride=2, expand_ratio=6),   # strided branch
    ]
    for cfg in configs:
        inp, oup = cfg["inp"], cfg["oup"]
        stride, expand_ratio = cfg["stride"], cfg["expand_ratio"]

        x = jax.random.normal(kx, (2, inp, 16, 16), jnp.float32)    # NCHW
        params = make_params(kp, inp, oup, expand_ratio)

        fwd = jax.jit(functools.partial(inverted_residual_bottleneck,
                                        stride=stride, inp=inp, oup=oup))
        out = jax.block_until_ready(fwd(x, params))

        ho = (16 - 1) // stride + 1
        assert out.shape == (2, oup, ho, ho), out.shape

        ref_m = reference_matched(x, params, stride=stride, inp=inp, oup=oup)
        ref_f = reference_f32(x, params, stride=stride, inp=inp, oup=oup)
        err_m = float(jnp.max(jnp.abs(out - ref_m)))
        err_f = float(jnp.max(jnp.abs(out - ref_f)))
        # Tight check vs a reference with the kernel's bf16/f32 mix.  Residual
        # differences are f32 accumulation-order plus at most one bf16 ulp of
        # the (bf16) output where a rounding boundary flips.
        tol_m = 2e-2 + float(jnp.max(jnp.abs(ref_m))) / 128.0
        assert err_m < tol_m, f"matched-precision max err {err_m} (tol {tol_m})"
        # Loose sanity check vs pure-f32 PyTorch semantics (difference is just
        # bf16 rounding of the streamed operands/intermediates/output).
        assert err_f < 5e-1, f"f32-reference max err {err_f}"

    print("KERNEL_OK")
</pallas_src>

<mosaic_0001>
module attributes {stable_mosaic.version = 11 : i64} {
  func.func @kernel(%arg0: i32, %arg1: i32, %arg2: memref<1x18x32x128xbf16, #tpu.memory_space<vmem>>, %arg3: memref<128x128xbf16, #tpu.memory_space<vmem>>, %arg4: memref<1x128xf32, #tpu.memory_space<vmem>>, %arg5: memref<3x3x128xf32, #tpu.memory_space<vmem>>, %arg6: memref<1x128xf32, #tpu.memory_space<vmem>>, %arg7: memref<128x128xbf16, #tpu.memory_space<vmem>>, %arg8: memref<1x128xf32, #tpu.memory_space<vmem>>, %arg9: memref<1x16x16x128xbf16, #tpu.memory_space<vmem>>, %arg10: memref<18x32x128xbf16, #tpu.memory_space<vmem>>) attributes {dimension_semantics = [#tpu.dimension_semantics<parallel>, #tpu.dimension_semantics<arbitrary>], iteration_bounds = array<i64: 2, 1>, scalar_prefetch = 0 : i64, scratch_operands = 1 : i64, tpu.core_type = #tpu.core_type<tc>, window_params = [{transform_indices = @transform_0, window_bounds = array<i64: 1, 18, 32, 128>}, {pipeline_mode = #tpu.pipeline_mode<synchronous>, transform_indices = @transform_1, window_bounds = array<i64: 128, 128>}, {pipeline_mode = #tpu.pipeline_mode<synchronous>, transform_indices = @transform_2, window_bounds = array<i64: 1, 128>}, {pipeline_mode = #tpu.pipeline_mode<synchronous>, transform_indices = @transform_3, window_bounds = array<i64: 3, 3, 128>}, {pipeline_mode = #tpu.pipeline_mode<synchronous>, transform_indices = @transform_4, window_bounds = array<i64: 1, 128>}, {pipeline_mode = #tpu.pipeline_mode<synchronous>, transform_indices = @transform_5, window_bounds = array<i64: 128, 128>}, {pipeline_mode = #tpu.pipeline_mode<synchronous>, transform_indices = @transform_6, window_bounds = array<i64: 1, 128>}, {transform_indices = @transform_7, window_bounds = array<i64: 1, 16, 16, 128>}]} {
    %c16_i32 = arith.constant 16 : i32
    %0 = arith.muli %arg1, %c16_i32 : i32
    %1 = tpu.assume_multiple %0, 16 : i32
    %c0 = arith.constant 0 : index
    %2 = arith.index_cast %1 : i32 to index
    %c0_0 = arith.constant 0 : index
    %c0_1 = arith.constant 0 : index
    %3 = vector.load %arg2[%c0, %2, %c0_0, %c0_1] : memref<1x18x32x128xbf16, #tpu.memory_space<vmem>>, vector<1x18x32x128xbf16>
    %4 = vector.shape_cast %3 : vector<1x18x32x128xbf16> to vector<18x32x128xbf16>
    %5 = vector.shape_cast %4 : vector<18x32x128xbf16> to vector<576x128xbf16>
    %c0_2 = arith.constant 0 : index
    %c0_3 = arith.constant 0 : index
    %6 = vector.load %arg3[%c0_2, %c0_3] : memref<128x128xbf16, #tpu.memory_space<vmem>>, vector<128x128xbf16>
    %cst = arith.constant dense<0.000000e+00> : vector<576x128xf32>
    %7 = tpu.matmul %5, %6, %cst {dimension_numbers = #tpu.dot_dimension_numbers<[1], [0], [0], [1], [0, 0, 1, 1], [], []>} : vector<576x128xbf16>, vector<128x128xbf16>, vector<576x128xf32> -> vector<576x128xf32>
    %c0_4 = arith.constant 0 : index
    %c0_5 = arith.constant 0 : index
    %8 = vector.load %arg4[%c0_4, %c0_5] : memref<1x128xf32, #tpu.memory_space<vmem>>, vector<1x128xf32>
    %9 = vector.broadcast %8 : vector<1x128xf32> to vector<576x128xf32>
    %10 = arith.addf %7, %9 : vector<576x128xf32>
    %cst_6 = arith.constant 0.000000e+00 : f32
    %cst_7 = arith.constant 6.000000e+00 : f32
    %11 = vector.broadcast %cst_6 : f32 to vector<576x128xf32>
    %12 = arith.maximumf %11, %10 : vector<576x128xf32>
    %13 = vector.broadcast %cst_7 : f32 to vector<576x128xf32>
    %14 = arith.minimumf %13, %12 : vector<576x128xf32>
    %15 = vector.shape_cast %14 : vector<576x128xf32> to vector<18x32x128xf32>
    %16 = tpu.iota {dimensions = array<i32: 1>} : vector<1x32x128xi32>
    %c1_i32 = arith.constant 1 : i32
    %17 = vector.broadcast %c1_i32 : i32 to vector<1x32x128xi32>
    %18 = arith.cmpi sge, %16, %17 : vector<1x32x128xi32>
    %c16_i32_8 = arith.constant 16 : i32
    %19 = vector.broadcast %c16_i32_8 : i32 to vector<1x32x128xi32>
    %20 = arith.cmpi sle, %16, %19 : vector<1x32x128xi32>
    %21 = arith.andi %18, %20 : vector<1x32x128xi1>
    %cst_9 = arith.constant 0.000000e+00 : f32
    %22 = vector.shape_cast %21 : vector<1x32x128xi1> to vector<1x32x128xi1>
    %23 = vector.broadcast %22 : vector<1x32x128xi1> to vector<18x32x128xi1>
    %24 = vector.broadcast %cst_9 : f32 to vector<18x32x128xf32>
    %25 = arith.select %23, %15, %24 : vector<18x32x128xi1>, vector<18x32x128xf32>
    %26 = arith.truncf %25 : vector<18x32x128xf32> to vector<18x32x128xbf16>
    %c0_10 = arith.constant 0 : index
    %c0_11 = arith.constant 0 : index
    %c0_12 = arith.constant 0 : index
    %27 = vector.load %arg10[%c0_10, %c0_11, %c0_12] : memref<18x32x128xbf16, #tpu.memory_space<vmem>>, vector<18x32x128xbf16>
    tpu.vector_store %arg10[%c0_10, %c0_11, %c0_12], %26 {strides = array<i32>} : memref<18x32x128xbf16, #tpu.memory_space<vmem>>, vector<18x32x128xbf16>,
    %c0_i32 = arith.constant 0 : i32
    %28 = arith.cmpi eq, %arg1, %c0_i32 : i32
    %29 = arith.extui %28 : i1 to i32
    %c0_i32_13 = arith.constant 0 : i32
    %30 = arith.cmpi ne, %29, %c0_i32_13 : i32
    scf.if %30 {
      %cst_61 = arith.constant 0.000000e+00 : bf16
      %133 = vector.broadcast %cst_61 : bf16 to vector<32x128xbf16>
      %c0_62 = arith.constant 0 : index
      %c0_63 = arith.constant 0 : index
      %c0_64 = arith.constant 0 : index
      %134 = vector.load %arg10[%c0_62, %c0_63, %c0_64] : memref<18x32x128xbf16, #tpu.memory_space<vmem>>, vector<1x32x128xbf16>
      %135 = vector.shape_cast %134 : vector<1x32x128xbf16> to vector<32x128xbf16>
      %136 = vector.shape_cast %133 : vector<32x128xbf16> to vector<1x32x128xbf16>
      tpu.vector_store %arg10[%c0_62, %c0_63, %c0_64], %136 {strides = array<i32>} : memref<18x32x128xbf16, #tpu.memory_space<vmem>>, vector<1x32x128xbf16>,
    } else {
    }
    %c0_i32_14 = arith.constant 0 : i32
    %31 = arith.cmpi eq, %arg1, %c0_i32_14 : i32
    %32 = arith.extui %31 : i1 to i32
    %c0_i32_15 = arith.constant 0 : i32
    %33 = arith.cmpi ne, %32, %c0_i32_15 : i32
    scf.if %33 {
      %cst_61 = arith.constant 0.000000e+00 : bf16
      %133 = vector.broadcast %cst_61 : bf16 to vector<32x128xbf16>
      %c17 = arith.constant 17 : index
      %c0_62 = arith.constant 0 : index
      %c0_63 = arith.constant 0 : index
      %134 = vector.load %arg10[%c17, %c0_62, %c0_63] : memref<18x32x128xbf16, #tpu.memory_space<vmem>>, vector<1x32x128xbf16>
      %135 = vector.shape_cast %134 : vector<1x32x128xbf16> to vector<32x128xbf16>
      %136 = vector.shape_cast %133 : vector<32x128xbf16> to vector<1x32x128xbf16>
      tpu.vector_store %arg10[%c17, %c0_62, %c0_63], %136 {strides = array<i32>} : memref<18x32x128xbf16, #tpu.memory_space<vmem>>, vector<1x32x128xbf16>,
    } else {
    }
    %c0_16 = arith.constant 0 : index
    %c0_17 = arith.constant 0 : index
    %c0_18 = arith.constant 0 : index
    %34 = vector.load %arg5[%c0_16, %c0_17, %c0_18] : memref<3x3x128xf32, #tpu.memory_space<vmem>>, vector<3x3x128xf32>
    %c0_19 = arith.constant 0 : index
    %c0_20 = arith.constant 0 : index
    %c0_21 = arith.constant 0 : index
    %35 = vector.load %arg10[%c0_19, %c0_20, %c0_21] : memref<18x32x128xbf16, #tpu.memory_space<vmem>>, vector<16x16x128xbf16>
    %36 = arith.extf %35 : vector<16x16x128xbf16> to vector<16x16x128xf32>
    %37 = vector.extract_strided_slice %34 {offsets = [0, 0, 0], sizes = [1, 1, 128], strides = [1, 1, 1]} : vector<3x3x128xf32> to vector<1x1x128xf32>
    %38 = vector.shape_cast %37 : vector<1x1x128xf32> to vector<128xf32>
    %39 = vector.shape_cast %38 : vector<128xf32> to vector<1x1x128xf32>
    %40 = vector.broadcast %39 : vector<1x1x128xf32> to vector<16x16x128xf32>
    %41 = arith.mulf %36, %40 : vector<16x16x128xf32>
    %c0_22 = arith.constant 0 : index
    %c1 = arith.constant 1 : index
    %c0_23 = arith.constant 0 : index
    %42 = vector.load %arg10[%c0_22, %c1, %c0_23] : memref<18x32x128xbf16, #tpu.memory_space<vmem>>, vector<16x16x128xbf16>
    %43 = arith.extf %42 : vector<16x16x128xbf16> to vector<16x16x128xf32>
    %44 = vector.extract_strided_slice %34 {offsets = [0, 1, 0], sizes = [1, 1, 128], strides = [1, 1, 1]} : vector<3x3x128xf32> to vector<1x1x128xf32>
    %45 = vector.shape_cast %44 : vector<1x1x128xf32> to vector<128xf32>
    %46 = vector.shape_cast %45 : vector<128xf32> to vector<1x1x128xf32>
    %47 = vector.broadcast %46 : vector<1x1x128xf32> to vector<16x16x128xf32>
    %48 = arith.mulf %43, %47 : vector<16x16x128xf32>
    %49 = arith.addf %41, %48 : vector<16x16x128xf32>
    %c0_24 = arith.constant 0 : index
    %c2 = arith.constant 2 : index
    %c0_25 = arith.constant 0 : index
    %50 = vector.load %arg10[%c0_24, %c2, %c0_25] : memref<18x32x128xbf16, #tpu.memory_space<vmem>>, vector<16x16x128xbf16>
    %51 = arith.extf %50 : vector<16x16x128xbf16> to vector<16x16x128xf32>
    %52 = vector.extract_strided_slice %34 {offsets = [0, 2, 0], sizes = [1, 1, 128], strides = [1, 1, 1]} : vector<3x3x128xf32> to vector<1x1x128xf32>
    %53 = vector.shape_cast %52 : vector<1x1x128xf32> to vector<128xf32>
    %54 = vector.shape_cast %53 : vector<128xf32> to vector<1x1x128xf32>
    %55 = vector.broadcast %54 : vector<1x1x128xf32> to vector<16x16x128xf32>
    %56 = arith.mulf %51, %55 : vector<16x16x128xf32>
    %57 = arith.addf %49, %56 : vector<16x16x128xf32>
    %c1_26 = arith.constant 1 : index
    %c0_27 = arith.constant 0 : index
    %c0_28 = arith.constant 0 : index
    %58 = vector.load %arg10[%c1_26, %c0_27, %c0_28] : memref<18x32x128xbf16, #tpu.memory_space<vmem>>, vector<16x16x128xbf16>
    %59 = arith.extf %58 : vector<16x16x128xbf16> to vector<16x16x128xf32>
    %60 = vector.extract_strided_slice %34 {offsets = [1, 0, 0], sizes = [1, 1, 128], strides = [1, 1, 1]} : vector<3x3x128xf32> to vector<1x1x128xf32>
    %61 = vector.shape_cast %60 : vector<1x1x128xf32> to vector<128xf32>
    %62 = vector.shape_cast %61 : vector<128xf32> to vector<1x1x128xf32>
    %63 = vector.broadcast %62 : vector<1x1x128xf32> to vector<16x16x128xf32>
    %64 = arith.mulf %59, %63 : vector<16x16x128xf32>
    %65 = arith.addf %57, %64 : vector<16x16x128xf32>
    %c1_29 = arith.constant 1 : index
    %c1_30 = arith.constant 1 : index
    %c0_31 = arith.constant 0 : index
    %66 = vector.load %arg10[%c1_29, %c1_30, %c0_31] : memref<18x32x128xbf16, #tpu.memory_space<vmem>>, vector<16x16x128xbf16>
    %67 = arith.extf %66 : vector<16x16x128xbf16> to vector<16x16x128xf32>
    %68 = vector.extract_strided_slice %34 {offsets = [1, 1, 0], sizes = [1, 1, 128], strides = [1, 1, 1]} : vector<3x3x128xf32> to vector<1x1x128xf32>
    %69 = vector.shape_cast %68 : vector<1x1x128xf32> to vector<128xf32>
    %70 = vector.shape_cast %69 : vector<128xf32> to vector<1x1x128xf32>
    %71 = vector.broadcast %70 : vector<1x1x128xf32> to vector<16x16x128xf32>
    %72 = arith.mulf %67, %71 : vector<16x16x128xf32>
    %73 = arith.addf %65, %72 : vector<16x16x128xf32>
    %c1_32 = arith.constant 1 : index
    %c2_33 = arith.constant 2 : index
    %c0_34 = arith.constant 0 : index
    %74 = vector.load %arg10[%c1_32, %c2_33, %c0_34] : memref<18x32x128xbf16, #tpu.memory_space<vmem>>, vector<16x16x128xbf16>
    %75 = arith.extf %74 : vector<16x16x128xbf16> to vector<16x16x128xf32>
    %76 = vector.extract_strided_slice %34 {offsets = [1, 2, 0], sizes = [1, 1, 128], strides = [1, 1, 1]} : vector<3x3x128xf32> to vector<1x1x128xf32>
    %77 = vector.shape_cast %76 : vector<1x1x128xf32> to vector<128xf32>
    %78 = vector.shape_cast %77 : vector<128xf32> to vector<1x1x128xf32>
    %79 = vector.broadcast %78 : vector<1x1x128xf32> to vector<16x16x128xf32>
    %80 = arith.mulf %75, %79 : vector<16x16x128xf32>
    %81 = arith.addf %73, %80 : vector<16x16x128xf32>
    %c2_35 = arith.constant 2 : index
    %c0_36 = arith.constant 0 : index
    %c0_37 = arith.constant 0 : index
    %82 = vector.load %arg10[%c2_35, %c0_36, %c0_37] : memref<18x32x128xbf16, #tpu.memory_space<vmem>>, vector<16x16x128xbf16>
    %83 = arith.extf %82 : vector<16x16x128xbf16> to vector<16x16x128xf32>
    %84 = vector.extract_strided_slice %34 {offsets = [2, 0, 0], sizes = [1, 1, 128], strides = [1, 1, 1]} : vector<3x3x128xf32> to vector<1x1x128xf32>
    %85 = vector.shape_cast %84 : vector<1x1x128xf32> to vector<128xf32>
    %86 = vector.shape_cast %85 : vector<128xf32> to vector<1x1x128xf32>
    %87 = vector.broadcast %86 : vector<1x1x128xf32> to vector<16x16x128xf32>
    %88 = arith.mulf %83, %87 : vector<16x16x128xf32>
    %89 = arith.addf %81, %88 : vector<16x16x128xf32>
    %c2_38 = arith.constant 2 : index
    %c1_39 = arith.constant 1 : index
    %c0_40 = arith.constant 0 : index
    %90 = vector.load %arg10[%c2_38, %c1_39, %c0_40] : memref<18x32x128xbf16, #tpu.memory_space<vmem>>, vector<16x16x128xbf16>
    %91 = arith.extf %90 : vector<16x16x128xbf16> to vector<16x16x128xf32>
    %92 = vector.extract_strided_slice %34 {offsets = [2, 1, 0], sizes = [1, 1, 128], strides = [1, 1, 1]} : vector<3x3x128xf32> to vector<1x1x128xf32>
    %93 = vector.shape_cast %92 : vector<1x1x128xf32> to vector<128xf32>
    %94 = vector.shape_cast %93 : vector<128xf32> to vector<1x1x128xf32>
    %95 = vector.broadcast %94 : vector<1x1x128xf32> to vector<16x16x128xf32>
    %96 = arith.mulf %91, %95 : vector<16x16x128xf32>
    %97 = arith.addf %89, %96 : vector<16x16x128xf32>
    %c2_41 = arith.constant 2 : index
    %c2_42 = arith.constant 2 : index
    %c0_43 = arith.constant 0 : index
    %98 = vector.load %arg10[%c2_41, %c2_42, %c0_43] : memref<18x32x128xbf16, #tpu.memory_space<vmem>>, vector<16x16x128xbf16>
    %99 = arith.extf %98 : vector<16x16x128xbf16> to vector<16x16x128xf32>
    %100 = vector.extract_strided_slice %34 {offsets = [2, 2, 0], sizes = [1, 1, 128], strides = [1, 1, 1]} : vector<3x3x128xf32> to vector<1x1x128xf32>
    %101 = vector.shape_cast %100 : vector<1x1x128xf32> to vector<128xf32>
    %102 = vector.shape_cast %101 : vector<128xf32> to vector<1x1x128xf32>
    %103 = vector.broadcast %102 : vector<1x1x128xf32> to vector<16x16x128xf32>
    %104 = arith.mulf %99, %103 : vector<16x16x128xf32>
    %105 = arith.addf %97, %104 : vector<16x16x128xf32>
    %c0_44 = arith.constant 0 : index
    %c0_45 = arith.constant 0 : index
    %106 = vector.load %arg6[%c0_44, %c0_45] : memref<1x128xf32, #tpu.memory_space<vmem>>, vector<1x128xf32>
    %107 = vector.shape_cast %106 : vector<1x128xf32> to vector<1x1x128xf32>
    %108 = vector.broadcast %107 : vector<1x1x128xf32> to vector<16x16x128xf32>
    %109 = arith.addf %105, %108 : vector<16x16x128xf32>
    %cst_46 = arith.constant 0.000000e+00 : f32
    %cst_47 = arith.constant 6.000000e+00 : f32
    %110 = vector.broadcast %cst_46 : f32 to vector<16x16x128xf32>
    %111 = arith.maximumf %110, %109 : vector<16x16x128xf32>
    %112 = vector.broadcast %cst_47 : f32 to vector<16x16x128xf32>
    %113 = arith.minimumf %112, %111 : vector<16x16x128xf32>
    %114 = vector.shape_cast %113 : vector<16x16x128xf32> to vector<256x128xf32>
    %115 = arith.truncf %114 : vector<256x128xf32> to vector<256x128xbf16>
    %c0_48 = arith.constant 0 : index
    %c0_49 = arith.constant 0 : index
    %116 = vector.load %arg7[%c0_48, %c0_49] : memref<128x128xbf16, #tpu.memory_space<vmem>>, vector<128x128xbf16>
    %cst_50 = arith.constant dense<0.000000e+00> : vector<256x128xf32>
    %117 = tpu.matmul %115, %116, %cst_50 {dimension_numbers = #tpu.dot_dimension_numbers<[1], [0], [0], [1], [0, 0, 1, 1], [], []>} : vector<256x128xbf16>, vector<128x128xbf16>, vector<256x128xf32> -> vector<256x128xf32>
    %c0_51 = arith.constant 0 : index
    %c0_52 = arith.constant 0 : index
    %118 = vector.load %arg8[%c0_51, %c0_52] : memref<1x128xf32, #tpu.memory_space<vmem>>, vector<1x128xf32>
    %119 = vector.broadcast %118 : vector<1x128xf32> to vector<256x128xf32>
    %120 = arith.addf %117, %119 : vector<256x128xf32>
    %c1_i32_53 = arith.constant 1 : i32
    %121 = arith.addi %1, %c1_i32_53 : i32
    %c0_54 = arith.constant 0 : index
    %122 = arith.index_cast %121 : i32 to index
    %c1_55 = arith.constant 1 : index
    %c0_56 = arith.constant 0 : index
    %123 = vector.load %arg2[%c0_54, %122, %c1_55, %c0_56] : memref<1x18x32x128xbf16, #tpu.memory_space<vmem>>, vector<1x16x16x128xbf16>
    %124 = vector.shape_cast %123 : vector<1x16x16x128xbf16> to vector<16x16x128xbf16>
    %125 = arith.extf %124 : vector<16x16x128xbf16> to vector<16x16x128xf32>
    %126 = vector.shape_cast %125 : vector<16x16x128xf32> to vector<256x128xf32>
    %127 = arith.addf %120, %126 : vector<256x128xf32>
    %128 = vector.shape_cast %127 : vector<256x128xf32> to vector<16x16x128xf32>
    %129 = arith.truncf %128 : vector<16x16x128xf32> to vector<16x16x128xbf16>
    %c0_57 = arith.constant 0 : index
    %c0_58 = arith.constant 0 : index
    %c0_59 = arith.constant 0 : index
    %c0_60 = arith.constant 0 : index
    %130 = vector.load %arg9[%c0_57, %c0_58, %c0_59, %c0_60] : memref<1x16x16x128xbf16, #tpu.memory_space<vmem>>, vector<1x16x16x128xbf16>
    %131 = vector.shape_cast %130 : vector<1x16x16x128xbf16> to vector<16x16x128xbf16>
    %132 = vector.shape_cast %129 : vector<16x16x128xbf16> to vector<1x16x16x128xbf16>
    tpu.vector_store %arg9[%c0_57, %c0_58, %c0_59, %c0_60], %132 {strides = array<i32>} : memref<1x16x16x128xbf16, #tpu.memory_space<vmem>>, vector<1x16x16x128xbf16>,
    return
  }
  func.func @transform_0(%arg0: i32, %arg1: i32) -> (i32, i32, i32, i32) {
    %c0_i32 = arith.constant 0 : i32
    %c0_i32_0 = arith.constant 0 : i32
    %c0_i32_1 = arith.constant 0 : i32
    %c0_i32_2 = arith.constant 0 : i32
    return %arg0, %c0_i32, %c0_i32_0, %c0_i32_1 : i32, i32, i32, i32
  }
  func.func @transform_1(%arg0: i32, %arg1: i32) -> (i32, i32) {
    %c0_i32 = arith.constant 0 : i32
    %c0_i32_0 = arith.constant 0 : i32
    %c0_i32_1 = arith.constant 0 : i32
    return %c0_i32, %c0_i32_0 : i32, i32
  }
  func.func @transform_2(%arg0: i32, %arg1: i32) -> (i32, i32) {
    %c0_i32 = arith.constant 0 : i32
    %c0_i32_0 = arith.constant 0 : i32
    %c0_i32_1 = arith.constant 0 : i32
    return %c0_i32, %c0_i32_0 : i32, i32
  }
  func.func @transform_3(%arg0: i32, %arg1: i32) -> (i32, i32, i32) {
    %c0_i32 = arith.constant 0 : i32
    %c0_i32_0 = arith.constant 0 : i32
    %c0_i32_1 = arith.constant 0 : i32
    %c0_i32_2 = arith.constant 0 : i32
    return %c0_i32, %c0_i32_0, %c0_i32_1 : i32, i32, i32
  }
  func.func @transform_4(%arg0: i32, %arg1: i32) -> (i32, i32) {
    %c0_i32 = arith.constant 0 : i32
    %c0_i32_0 = arith.constant 0 : i32
    %c0_i32_1 = arith.constant 0 : i32
    return %c0_i32, %c0_i32_0 : i32, i32
  }
  func.func @transform_5(%arg0: i32, %arg1: i32) -> (i32, i32) {
    %c0_i32 = arith.constant 0 : i32
    %c0_i32_0 = arith.constant 0 : i32
    %c0_i32_1 = arith.constant 0 : i32
    return %c0_i32, %c0_i32_0 : i32, i32
  }
  func.func @transform_6(%arg0: i32, %arg1: i32) -> (i32, i32) {
    %c0_i32 = arith.constant 0 : i32
    %c0_i32_0 = arith.constant 0 : i32
    %c0_i32_1 = arith.constant 0 : i32
    return %c0_i32, %c0_i32_0 : i32, i32
  }
  func.func @transform_7(%arg0: i32, %arg1: i32) -> (i32, i32, i32, i32) {
    %c0_i32 = arith.constant 0 : i32
    %c0_i32_0 = arith.constant 0 : i32
    %c0_i32_1 = arith.constant 0 : i32
    return %arg0, %arg1, %c0_i32, %c0_i32_0 : i32, i32, i32, i32
  }
}

</mosaic_0001>

<llo_original>
// kernel: inverted_residual_bottleneck.1
$region0: #{inverted_residual_bottleneck.1}
  #allocation0 [shape = 'u32[]', space=smem, size = 0x4, offset = 0x4, fixed_abs, tag = 'smem constant byte address 0x4 - core index']
  #allocation1 [shape = 'u32[72,128]{1,0:T(1,128)}', space=vmem, size = 0x9000, scoped, tag = 'internal scratch']
  #allocation2 [shape = 'bf16[18,32,128]{2,1,0:T(8,128)(2,1)}', space=vmem, size = 0x24000, scoped, tag = 'scratch operand']
  %s0 = inlined_call_operand.vmem [shape: bf16[2,18,32,128], index: 0, kind: input, shape index: {}]
  %s1 = inlined_call_operand.vmem [shape: bf16[128,128], index: 1, kind: input, shape index: {}]
  %s2 = inlined_call_operand.vmem [shape: f32[1,128], index: 2, kind: input, shape index: {}]
  %s3 = inlined_call_operand.vmem [shape: f32[3,3,128], index: 3, kind: input, shape index: {}]
  %s4 = inlined_call_operand.vmem [shape: f32[1,128], index: 4, kind: input, shape index: {}]
  %s5 = inlined_call_operand.vmem [shape: bf16[128,128], index: 5, kind: input, shape index: {}]
  %s6 = inlined_call_operand.vmem [shape: f32[1,128], index: 6, kind: input, shape index: {}]
  %s7 = inlined_call_operand.vmem [shape: bf16[2,16,16,128], index: 7, kind: output, shape index: {}]
  %s8 = sld [smem:[#allocation0]]
  $region65: #{inverted_residual_bottleneck.1} parent=0
    _
  %s10 = ssub.s32 1, %s8
  %s11 = scalar_select 0, %s10, %s8
  loop: start=0, step=1, limit=4
  $region2: #{inverted_residual_bottleneck.1} parent=0 // loop_pre_header
    _
  $region3: #{inverted_residual_bottleneck.1} parent=0 // loop_header
    %s13 = sphi 0, %s17
    %p14 = scmp.ge.s32.totalorder %s13, 4
    %s20 = sphi 0, %s32
    %s21 = sphi 0, %s28
    %s22 = sphi 0, %s20
    %s23 = sphi 0, %s21
    %s24 = sphi 0, %s22
    %s25 = sphi 0, %s23
    %s35 = sphi 0, %s37
    %s38 = sphi 0, %s35
    %s39 = sphi 0, %s38
    %s55 = sphi 0, %s39
    %s59 = sphi 0, %s59
    %s61 = sphi 0, %s59
    %s62 = sphi 0, %s61
    %s76 = sphi 0, %s62
    %s80 = sphi 0, %s80
    %s82 = sphi 0, %s80
    %s83 = sphi 0, %s82
    %s97 = sphi 0, %s83
    %s101 = sphi 0, %s101
    %s103 = sphi 0, %s101
    %s104 = sphi 0, %s103
    %s118 = sphi 0, %s104
    %s122 = sphi 0, %s122
    %s124 = sphi 0, %s122
    %s125 = sphi 0, %s124
    %s139 = sphi 0, %s125
    %s143 = sphi 0, %s143
    %s145 = sphi 0, %s143
    %s146 = sphi 0, %s145
    %s160 = sphi 0, %s146
    %s164 = sphi 0, %s164
    %s166 = sphi 0, %s164
    %s167 = sphi 0, %s166
    %s181 = sphi 0, %s167
    %s189 = sphi 0, %s191
    %s192 = sphi 0, %s189
    %s193 = sphi 0, %s192
    %s209 = sphi 0, %s193
  $region4: #{inverted_residual_bottleneck.1} parent=0 // loop_header_branch
    %16 = sbr.rel (%p14) target = $region8
  $region5: #{inverted_residual_bottleneck.1} parent=0 // loop_body
    %s18 = ssub.s32 %s13, 1
    %s19 = ssub.s32 %s13, 2
    %s26 = sadd.s32 1, %s21
    %p27 = scmp.ge.s32.totalorder %s26, 1
    %s28 = scalar_select %p27, 0, %s26
    %s29 = sadd.s32 1, %s20
    %s30 = scalar_select %p27, %s29, %s20
    %p31 = scmp.ge.s32.totalorder %s30, 2
    %s32 = scalar_select %p31, 0, %s30
    %s33 = ssub.s32 %s20, %s32
    %p34 = scmp.eq.s32.totalorder %s33, 0
    %s36 = sadd.s32 %s35, 1
    %s37 = scalar_select %p34, %s35, %s36
    %p40 = pneg %p34
    %p41 = scmp.eq.s32.totalorder %s13, 1
    %p42 = por %p40, %p41
    %p43 = scmp.ne.s32.totalorder %s35, %s38
    %p44 = scmp.eq.s32.totalorder %s13, 0
    %p45 = por %p43, %p44
    %p46 = scmp.ne.s32.totalorder %s35, %s38
    %p47 = scmp.eq.s32.totalorder %s18, 1
    %p48 = por %p46, %p47
    %p49 = scmp.ne.s32.totalorder %s38, %s39
    %p50 = scmp.eq.s32.totalorder %s18, 0
    %p51 = por %p49, %p50
    %p52 = scmp.ne.s32.totalorder %s38, %s39
    %p53 = scmp.eq.s32.totalorder %s19, 1
    %p54 = por %p52, %p53
    %p56 = scmp.ne.s32.totalorder %s39, %s55
    %p57 = scmp.eq.s32.totalorder %s19, 0
    %p58 = por %p56, %p57
    %s60 = sadd.s32 %s59, 1
    %p63 = scmp.eq.s32.totalorder %s13, 1
    %p64 = scmp.ne.s32.totalorder %s59, %s61
    %p65 = scmp.eq.s32.totalorder %s13, 0
    %p66 = por %p64, %p65
    %p67 = scmp.ne.s32.totalorder %s59, %s61
    %p68 = scmp.eq.s32.totalorder %s18, 1
    %p69 = por %p67, %p68
    %p70 = scmp.ne.s32.totalorder %s61, %s62
    %p71 = scmp.eq.s32.totalorder %s18, 0
    %p72 = por %p70, %p71
    %p73 = scmp.ne.s32.totalorder %s61, %s62
    %p74 = scmp.eq.s32.totalorder %s19, 1
    %p75 = por %p73, %p74
    %p77 = scmp.ne.s32.totalorder %s62, %s76
    %p78 = scmp.eq.s32.totalorder %s19, 0
    %p79 = por %p77, %p78
    %s81 = sadd.s32 %s80, 1
    %p84 = scmp.eq.s32.totalorder %s13, 1
    %p85 = scmp.ne.s32.totalorder %s80, %s82
    %p86 = scmp.eq.s32.totalorder %s13, 0
    %p87 = por %p85, %p86
    %p88 = scmp.ne.s32.totalorder %s80, %s82
    %p89 = scmp.eq.s32.totalorder %s18, 1
    %p90 = por %p88, %p89
    %p91 = scmp.ne.s32.totalorder %s82, %s83
    %p92 = scmp.eq.s32.totalorder %s18, 0
    %p93 = por %p91, %p92
    %p94 = scmp.ne.s32.totalorder %s82, %s83
    %p95 = scmp.eq.s32.totalorder %s19, 1
    %p96 = por %p94, %p95
    %p98 = scmp.ne.s32.totalorder %s83, %s97
    %p99 = scmp.eq.s32.totalorder %s19, 0
    %p100 = por %p98, %p99
    %s102 = sadd.s32 %s101, 1
    %p105 = scmp.eq.s32.totalorder %s13, 1
    %p106 = scmp.ne.s32.totalorder %s101, %s103
    %p107 = scmp.eq.s32.totalorder %s13, 0
    %p108 = por %p106, %p107
    %p109 = scmp.ne.s32.totalorder %s101, %s103
    %p110 = scmp.eq.s32.totalorder %s18, 1
    %p111 = por %p109, %p110
    %p112 = scmp.ne.s32.totalorder %s103, %s104
    %p113 = scmp.eq.s32.totalorder %s18, 0
    %p114 = por %p112, %p113
    %p115 = scmp.ne.s32.totalorder %s103, %s104
    %p116 = scmp.eq.s32.totalorder %s19, 1
    %p117 = por %p115, %p116
    %p119 = scmp.ne.s32.totalorder %s104, %s118
    %p120 = scmp.eq.s32.totalorder %s19, 0
    %p121 = por %p119, %p120
    %s123 = sadd.s32 %s122, 1
    %p126 = scmp.eq.s32.totalorder %s13, 1
    %p127 = scmp.ne.s32.totalorder %s122, %s124
    %p128 = scmp.eq.s32.totalorder %s13, 0
    %p129 = por %p127, %p128
    %p130 = scmp.ne.s32.totalorder %s122, %s124
    %p131 = scmp.eq.s32.totalorder %s18, 1
    %p132 = por %p130, %p131
    %p133 = scmp.ne.s32.totalorder %s124, %s125
    %p134 = scmp.eq.s32.totalorder %s18, 0
    %p135 = por %p133, %p134
    %p136 = scmp.ne.s32.totalorder %s124, %s125
    %p137 = scmp.eq.s32.totalorder %s19, 1
    %p138 = por %p136, %p137
    %p140 = scmp.ne.s32.totalorder %s125, %s139
    %p141 = scmp.eq.s32.totalorder %s19, 0
    %p142 = por %p140, %p141
    %s144 = sadd.s32 %s143, 1
    %p147 = scmp.eq.s32.totalorder %s13, 1
    %p148 = scmp.ne.s32.totalorder %s143, %s145
    %p149 = scmp.eq.s32.totalorder %s13, 0
    %p150 = por %p148, %p149
    %p151 = scmp.ne.s32.totalorder %s143, %s145
    %p152 = scmp.eq.s32.totalorder %s18, 1
    %p153 = por %p151, %p152
    %p154 = scmp.ne.s32.totalorder %s145, %s146
    %p155 = scmp.eq.s32.totalorder %s18, 0
    %p156 = por %p154, %p155
    %p157 = scmp.ne.s32.totalorder %s145, %s146
    %p158 = scmp.eq.s32.totalorder %s19, 1
    %p159 = por %p157, %p158
    %p161 = scmp.ne.s32.totalorder %s146, %s160
    %p162 = scmp.eq.s32.totalorder %s19, 0
    %p163 = por %p161, %p162
    %s165 = sadd.s32 %s164, 1
    %p168 = scmp.eq.s32.totalorder %s13, 1
    %p169 = scmp.ne.s32.totalorder %s164, %s166
    %p170 = scmp.eq.s32.totalorder %s13, 0
    %p171 = por %p169, %p170
    %p172 = scmp.ne.s32.totalorder %s164, %s166
    %p173 = scmp.eq.s32.totalorder %s18, 1
    %p174 = por %p172, %p173
    %p175 = scmp.ne.s32.totalorder %s166, %s167
    %p176 = scmp.eq.s32.totalorder %s18, 0
    %p177 = por %p175, %p176
    %p178 = scmp.ne.s32.totalorder %s166, %s167
    %p179 = scmp.eq.s32.totalorder %s19, 1
    %p180 = por %p178, %p179
    %p182 = scmp.ne.s32.totalorder %s167, %s181
    %p183 = scmp.eq.s32.totalorder %s19, 0
    %p184 = por %p182, %p183
    %s185 = ssub.s32 %s20, %s32
    %s186 = ssub.s32 %s21, %s28
    %s187 = sor.u32 %s185, %s186
    %p188 = scmp.eq.s32.totalorder %s187, 0
    %s190 = sadd.s32 %s189, 1
    %s191 = scalar_select %p188, %s189, %s190
    %p194 = pneg %p188
    %p195 = scmp.eq.s32.totalorder %s13, 1
    %p196 = por %p194, %p195
    %p197 = scmp.ne.s32.totalorder %s189, %s192
    %p198 = scmp.eq.s32.totalorder %s13, 0
    %p199 = por %p197, %p198
    %p200 = scmp.ne.s32.totalorder %s189, %s192
    %p201 = scmp.eq.s32.totalorder %s18, 1
    %p202 = por %p200, %p201
    %p203 = scmp.ne.s32.totalorder %s192, %s193
    %p204 = scmp.eq.s32.totalorder %s18, 0
    %p205 = por %p203, %p204
    %p206 = scmp.ne.s32.totalorder %s192, %s193
    %p207 = scmp.eq.s32.totalorder %s19, 1
    %p208 = por %p206, %p207
    %p210 = scmp.ne.s32.totalorder %s193, %s209
    %p211 = scmp.eq.s32.totalorder %s19, 0
    %p212 = por %p210, %p211
    %p213 = scmp.le.s32.totalorder 1, %s13
    %p214 = scmp.lt.s32.totalorder %s13, 3
    %p215 = pnand %p213, %p214
    %p216 = pneg %p215
    // Predicated region
    $region9: #{inverted_residual_bottleneck.1} parent=5 // pred_check
      _
    $region10: #{inverted_residual_bottleneck.1} parent=5 // pred_check_branch
      %218 = sbr.rel (%p215) target = $region12
    $region11: #{inverted_residual_bottleneck.1} parent=5 // pred_region
      %s219 = ssub.s32 %s13, 1
      // Predicated region
      $region13: #{inverted_residual_bottleneck.1} parent=11 // pred_check
        %p220 = pneg %p72
      $region14: #{inverted_residual_bottleneck.1} parent=11 // pred_check_branch
        %222 = sbr.rel (%p220) target = $region16
      $region15: #{inverted_residual_bottleneck.1} parent=11 // pred_region
        _
      $region16: #{inverted_residual_bottleneck.1} parent=11 // pred_fallthru
        _
      // Predicated region
      $region17: #{inverted_residual_bottleneck.1} parent=11 // pred_check
        %p223 = pneg %p93
      $region18: #{inverted_residual_bottleneck.1} parent=11 // pred_check_branch
        %225 = sbr.rel (%p223) target = $region20
      $region19: #{inverted_residual_bottleneck.1} parent=11 // pred_region
        _
      $region20: #{inverted_residual_bottleneck.1} parent=11 // pred_fallthru
        _
      // Predicated region
      $region21: #{inverted_residual_bottleneck.1} parent=11 // pred_check
        %p226 = pneg %p114
      $region22: #{inverted_residual_bottleneck.1} parent=11 // pred_check_branch
        %228 = sbr.rel (%p226) target = $region24
      $region23: #{inverted_residual_bottleneck.1} parent=11 // pred_region
        _
      $region24: #{inverted_residual_bottleneck.1} parent=11 // pred_fallthru
        _
      // Predicated region
      $region25: #{inverted_residual_bottleneck.1} parent=11 // pred_check
        %p229 = pneg %p135
      $region26: #{inverted_residual_bottleneck.1} parent=11 // pred_check_branch
        %231 = sbr.rel (%p229) target = $region28
      $region27: #{inverted_residual_bottleneck.1} parent=11 // pred_region
        _
      $region28: #{inverted_residual_bottleneck.1} parent=11 // pred_fallthru
        _
      // Predicated region
      $region29: #{inverted_residual_bottleneck.1} parent=11 // pred_check
        %p232 = pneg %p156
      $region30: #{inverted_residual_bottleneck.1} parent=11 // pred_check_branch
        %234 = sbr.rel (%p232) target = $region32
      $region31: #{inverted_residual_bottleneck.1} parent=11 // pred_region
        _
      $region32: #{inverted_residual_bottleneck.1} parent=11 // pred_fallthru
        _
      // Predicated region
      $region33: #{inverted_residual_bottleneck.1} parent=11 // pred_check
        %p235 = pneg %p177
      $region34: #{inverted_residual_bottleneck.1} parent=11 // pred_check_branch
        %237 = sbr.rel (%p235) target = $region36
      $region35: #{inverted_residual_bottleneck.1} parent=11 // pred_region
        _
      $region36: #{inverted_residual_bottleneck.1} parent=11 // pred_fallthru
        _
    $region12: #{inverted_residual_bottleneck.1} parent=5 // pred_fallthru
      _
    %p238 = scmp.lt.s32.totalorder %s13, 2
    // Predicated region
    $region37: #{inverted_residual_bottleneck.1} parent=5 // pred_check
      %p239 = pneg %p238
    $region38: #{inverted_residual_bottleneck.1} parent=5 // pred_check_branch
      %241 = sbr.rel (%p239) target = $region40
    $region39: #{inverted_residual_bottleneck.1} parent=5 // pred_region
      // Predicated region
      $region41: #{inverted_residual_bottleneck.1} parent=39 // pred_check
        %p242 = pneg %p45
      $region42: #{inverted_residual_bottleneck.1} parent=39 // pred_check_branch
        %244 = sbr.rel (%p242) target = $region44
      $region43: #{inverted_residual_bottleneck.1} parent=39 // pred_region
        %p245 = scmp.lt.s32.totalorder %s20, 1
        %s246 = scalar_select %p245, %s20, 1
        %s247 = smul.addr %s246, 72
        %s248 = smul.addr %s247, 4
        %s249 = scalar_lea.vmem %s0, %s248
      $region44: #{inverted_residual_bottleneck.1} parent=39 // pred_fallthru
        _
    $region40: #{inverted_residual_bottleneck.1} parent=5 // pred_fallthru
      _
    %p250 = scmp.le.s32.totalorder 1, %s13
    %p251 = scmp.lt.s32.totalorder %s13, 3
    %p252 = pnand %p250, %p251
    %p253 = pneg %p252
    // Predicated region
    $region45: #{inverted_residual_bottleneck.1} parent=5 // pred_check
      _
    $region46: #{inverted_residual_bottleneck.1} parent=5 // pred_check_branch
      %255 = sbr.rel (%p252) target = $region48
    $region47: #{inverted_residual_bottleneck.1} parent=5 // pred_region
      %s256 = ssub.s32 %s13, 1
      %p257 = scmp.lt.s32.totalorder %s22, 1
      %s258 = scalar_select %p257, %s22, 1
      %s259 = smul.addr %s258, 72
      %s260 = smul.addr %s259, 4
      %s261 = scalar_lea.vmem %s0, %s260
      %p262 = pneg %p51
      %p263 = pneg %p48
      %p264 = pneg %p72
      %p265 = pneg %p69
      %p266 = pneg %p93
      %p267 = pneg %p90
      %p268 = pneg %p114
      %p269 = pneg %p111
      %p270 = pneg %p135
      %p271 = pneg %p132
      %p272 = pneg %p156
      %p273 = pneg %p153
      %p274 = pneg %p177
      %p275 = pneg %p174
      %p276 = pneg %p205
      %p277 = pneg %p202
      %s278 = smul.u32 16, %s23
      %p279 = scmp.lt.s32.totalorder %s22, 1
      %s280 = scalar_select %p279, %s22, 1
      %p281 = scmp.lt.s32.totalorder %s278, 15
      %s282 = scalar_select %p281, %s278, 15
      %s283 = smul.addr %s282, 2
      %s284 = smul.addr %s280, 32
      %s285 = sadd.s32 %s283, %s284
      %s286 = smul.addr %s285, 4
      %s287 = scalar_lea.vmem %s7, %s286
      %p288 = scmp.lt.s32.totalorder %s22, 1
      %s289 = scalar_select %p288, %s22, 1
      %s290 = smul.addr %s289, 72
      %s291 = smul.addr %s290, 4
      %s292 = scalar_lea.vmem %s0, %s291
      %s293 = smul.u32 16, %s23
      %p294 = scmp.lt.s32.totalorder %s22, 1
      %s295 = scalar_select %p294, %s22, 1
      %p296 = scmp.lt.s32.totalorder %s293, 15
      %s297 = scalar_select %p296, %s293, 15
      %s298 = smul.addr %s297, 2
      %s299 = smul.addr %s295, 32
      %s300 = sadd.s32 %s298, %s299
      %s301 = smul.addr %s300, 4
      %s302 = scalar_lea.vmem %s7, %s301
      %s303 = smul.u32 16, %s23
      %s305 = smul.u32 %s23, 16
      %s306 = smul.u32 %s305, 4
      %s307 = smul.addr %s306, 4
      %s308 = scalar_lea.vmem %s292, %s307
      %v309 = vld [vmem:[%s308] sm:$0xf]
      %v310 = vld [vmem:[%s308 + $0x4] sm:$0xf]
      %v311 = vld [vmem:[%s308 + $0x8] sm:$0xf]
      %v312 = vld [vmem:[%s308 + $0xc] sm:$0xf]
      %v313 = vld [vmem:[%s308 + $0x10] sm:$0xf]
      %v314 = vld [vmem:[%s308 + $0x14] sm:$0xf]
      %v315 = vld [vmem:[%s308 + $0x18] sm:$0xf]
      %v316 = vld [vmem:[%s308 + $0x1c] sm:$0xf]
      %v317 = vld [vmem:[%s308 + $0x20] sm:$0xf]
      %v318 = vld [vmem:[%s308 + $0x24] sm:$0xf]
      %v319 = vld [vmem:[%s308 + $0x28] sm:$0xf]
      %v320 = vld [vmem:[%s308 + $0x2c] sm:$0xf]
      %v321 = vld [vmem:[%s308 + $0x30] sm:$0xf]
      %v322 = vld [vmem:[%s308 + $0x34] sm:$0xf]
      %v323 = vld [vmem:[%s308 + $0x38] sm:$0xf]
      %v324 = vld [vmem:[%s308 + $0x3c] sm:$0xf]
      %v325 = vld [vmem:[%s308 + $0x40] sm:$0xf]
      %v326 = vld [vmem:[%s308 + $0x44] sm:$0xf]
      %v327 = vld [vmem:[%s308 + $0x48] sm:$0xf]
      %v328 = vld [vmem:[%s308 + $0x4c] sm:$0xf]
      %v329 = vld [vmem:[%s308 + $0x50] sm:$0xf]
      %v330 = vld [vmem:[%s308 + $0x54] sm:$0xf]
      %v331 = vld [vmem:[%s308 + $0x58] sm:$0xf]
      %v332 = vld [vmem:[%s308 + $0x5c] sm:$0xf]
      %v333 = vld [vmem:[%s308 + $0x60] sm:$0xf]
      %v334 = vld [vmem:[%s308 + $0x64] sm:$0xf]
      %v335 = vld [vmem:[%s308 + $0x68] sm:$0xf]
      %v336 = vld [vmem:[%s308 + $0x6c] sm:$0xf]
      %v337 = vld [vmem:[%s308 + $0x70] sm:$0xf]
      %v338 = vld [vmem:[%s308 + $0x74] sm:$0xf]
      %v339 = vld [vmem:[%s308 + $0x78] sm:$0xf]
      %v340 = vld [vmem:[%s308 + $0x7c] sm:$0xf]
      %v341 = vld [vmem:[%s308 + $0x80] sm:$0xf]
      %v342 = vld [vmem:[%s308 + $0x84] sm:$0xf]
      %v343 = vld [vmem:[%s308 + $0x88] sm:$0xf]
      %v344 = vld [vmem:[%s308 + $0x8c] sm:$0xf]
      %v345 = vld [vmem:[%s308 + $0x90] sm:$0xf]
      %v346 = vld [vmem:[%s308 + $0x94] sm:$0xf]
      %v347 = vld [vmem:[%s308 + $0x98] sm:$0xf]
      %v348 = vld [vmem:[%s308 + $0x9c] sm:$0xf]
      %v349 = vld [vmem:[%s308 + $0xa0] sm:$0xf]
      %v350 = vld [vmem:[%s308 + $0xa4] sm:$0xf]
      %v351 = vld [vmem:[%s308 + $0xa8] sm:$0xf]
      %v352 = vld [vmem:[%s308 + $0xac] sm:$0xf]
      %v353 = vld [vmem:[%s308 + $0xb0] sm:$0xf]
      %v354 = vld [vmem:[%s308 + $0xb4] sm:$0xf]
      %v355 = vld [vmem:[%s308 + $0xb8] sm:$0xf]
      %v356 = vld [vmem:[%s308 + $0xbc] sm:$0xf]
      %v357 = vld [vmem:[%s308 + $0xc0] sm:$0xf]
      %v358 = vld [vmem:[%s308 + $0xc4] sm:$0xf]
      %v359 = vld [vmem:[%s308 + $0xc8] sm:$0xf]
      %v360 = vld [vmem:[%s308 + $0xcc] sm:$0xf]
      %v361 = vld [vmem:[%s308 + $0xd0] sm:$0xf]
      %v362 = vld [vmem:[%s308 + $0xd4] sm:$0xf]
      %v363 = vld [vmem:[%s308 + $0xd8] sm:$0xf]
      %v364 = vld [vmem:[%s308 + $0xdc] sm:$0xf]
      %v365 = vld [vmem:[%s308 + $0xe0] sm:$0xf]
      %v366 = vld [vmem:[%s308 + $0xe4] sm:$0xf]
      %v367 = vld [vmem:[%s308 + $0xe8] sm:$0xf]
      %v368 = vld [vmem:[%s308 + $0xec] sm:$0xf]
      %v369 = vld [vmem:[%s308 + $0xf0] sm:$0xf]
      %v370 = vld [vmem:[%s308 + $0xf4] sm:$0xf]
      %v371 = vld [vmem:[%s308 + $0xf8] sm:$0xf]
      %v372 = vld [vmem:[%s308 + $0xfc] sm:$0xf]
      %v373 = vld [vmem:[%s308 + $0x100] sm:$0xf]
      %v374 = vld [vmem:[%s308 + $0x104] sm:$0xf]
      %v375 = vld [vmem:[%s308 + $0x108] sm:$0xf]
      %v376 = vld [vmem:[%s308 + $0x10c] sm:$0xf]
      %v377 = vld [vmem:[%s308 + $0x110] sm:$0xf]
      %v378 = vld [vmem:[%s308 + $0x114] sm:$0xf]
      %v379 = vld [vmem:[%s308 + $0x118] sm:$0xf]
      %v380 = vld [vmem:[%s308 + $0x11c] sm:$0xf]
      %v381 = vld [vmem:[%s1] sm:$0xf]
      %v382 = vld [vmem:[%s1 + $0x4] sm:$0xf]
      %v383 = vld [vmem:[%s1 + $0x8] sm:$0xf]
      %v384 = vld [vmem:[%s1 + $0xc] sm:$0xf]
      %v385 = vld [vmem:[%s1 + $0x10] sm:$0xf]
      %v386 = vld [vmem:[%s1 + $0x14] sm:$0xf]
      %v387 = vld [vmem:[%s1 + $0x18] sm:$0xf]
      %v388 = vld [vmem:[%s1 + $0x1c] sm:$0xf]
      %v389 = vld [vmem:[%s1 + $0x20] sm:$0xf]
      %v390 = vld [vmem:[%s1 + $0x24] sm:$0xf]
      %v391 = vld [vmem:[%s1 + $0x28] sm:$0xf]
      %v392 = vld [vmem:[%s1 + $0x2c] sm:$0xf]
      %v393 = vld [vmem:[%s1 + $0x30] sm:$0xf]
      %v394 = vld [vmem:[%s1 + $0x34] sm:$0xf]
      %v395 = vld [vmem:[%s1 + $0x38] sm:$0xf]
      %v396 = vld [vmem:[%s1 + $0x3c] sm:$0xf]
      %v397 = vld [vmem:[%s2] sm:$0x1]
      %v399 = vperm.slane %v397, 0
      %v473 = vunpack.c.l.b16 %v309
      %v474 = vunpack.c.l.b16 %v310
      %v475 = vunpack.c.l.b16 %v311
      %v476 = vunpack.c.l.b16 %v312
      %v477 = vunpack.c.l.b16 %v313
      %v478 = vunpack.c.l.b16 %v314
      %v479 = vunpack.c.l.b16 %v315
      %v480 = vunpack.c.l.b16 %v316
      %v481 = vunpack.c.l.b16 %v317
      %v482 = vunpack.c.l.b16 %v318
      %v483 = vunpack.c.l.b16 %v319
      %v484 = vunpack.c.l.b16 %v320
      %v485 = vunpack.c.l.b16 %v321
      %v486 = vunpack.c.l.b16 %v322
      %v487 = vunpack.c.l.b16 %v323
      %v488 = vunpack.c.l.b16 %v324
      %v489 = vunpack.c.l.b16 %v325
      %v490 = vunpack.c.l.b16 %v326
      %v491 = vunpack.c.l.b16 %v327
      %v492 = vunpack.c.l.b16 %v328
      %v493 = vunpack.c.l.b16 %v329
      %v494 = vunpack.c.l.b16 %v330
      %v495 = vunpack.c.l.b16 %v331
      %v496 = vunpack.c.l.b16 %v332
      %v497 = vunpack.c.l.b16 %v333
      %v498 = vunpack.c.l.b16 %v334
      %v499 = vunpack.c.l.b16 %v335
      %v500 = vunpack.c.l.b16 %v336
      %v501 = vunpack.c.l.b16 %v337
      %v502 = vunpack.c.l.b16 %v338
      %v503 = vunpack.c.l.b16 %v339
      %v504 = vunpack.c.l.b16 %v340
      %v505 = vunpack.c.l.b16 %v341
      %v506 = vunpack.c.l.b16 %v342
      %v507 = vunpack.c.l.b16 %v343
      %v508 = vunpack.c.l.b16 %v344
      %v509 = vunpack.c.l.b16 %v345
      %v510 = vunpack.c.l.b16 %v346
      %v511 = vunpack.c.l.b16 %v347
      %v512 = vunpack.c.l.b16 %v348
      %v513 = vunpack.c.l.b16 %v349
      %v514 = vunpack.c.l.b16 %v350
      %v515 = vunpack.c.l.b16 %v351
      %v516 = vunpack.c.l.b16 %v352
      %v517 = vunpack.c.l.b16 %v353
      %v518 = vunpack.c.l.b16 %v354
      %v519 = vunpack.c.l.b16 %v355
      %v520 = vunpack.c.l.b16 %v356
      %v521 = vunpack.c.l.b16 %v357
      %v522 = vunpack.c.l.b16 %v358
      %v523 = vunpack.c.l.b16 %v359
      %v524 = vunpack.c.l.b16 %v360
      %v525 = vunpack.c.l.b16 %v361
      %v526 = vunpack.c.l.b16 %v362
      %v527 = vunpack.c.l.b16 %v363
      %v528 = vunpack.c.l.b16 %v364
      %v529 = vunpack.c.l.b16 %v365
      %v530 = vunpack.c.l.b16 %v366
      %v531 = vunpack.c.l.b16 %v367
      %v532 = vunpack.c.l.b16 %v368
      %v533 = vunpack.c.l.b16 %v369
      %v534 = vunpack.c.l.b16 %v370
      %v535 = vunpack.c.l.b16 %v371
      %v536 = vunpack.c.l.b16 %v372
      %v537 = vunpack.c.l.b16 %v373
      %v538 = vunpack.c.l.b16 %v374
      %v539 = vunpack.c.l.b16 %v375
      %v540 = vunpack.c.l.b16 %v376
      %v541 = vunpack.c.l.b16 %v377
      %v542 = vunpack.c.l.b16 %v378
      %v543 = vunpack.c.l.b16 %v379
      %v544 = vunpack.c.l.b16 %v380
      %v545 = vpack.c.b16 %v474, %v473
      %v546 = vpack.c.b16 %v476, %v475
      %v547 = vpack.c.b16 %v478, %v477
      %v548 = vpack.c.b16 %v480, %v479
      %v549 = vpack.c.b16 %v482, %v481
      %v550 = vpack.c.b16 %v484, %v483
      %v551 = vpack.c.b16 %v486, %v485
      %v552 = vpack.c.b16 %v488, %v487
      %v553 = vpack.c.b16 %v490, %v489
      %v554 = vpack.c.b16 %v492, %v491
      %v555 = vpack.c.b16 %v494, %v493
      %v556 = vpack.c.b16 %v496, %v495
      %v557 = vpack.c.b16 %v498, %v497
      %v558 = vpack.c.b16 %v500, %v499
      %v559 = vpack.c.b16 %v502, %v501
      %v560 = vpack.c.b16 %v504, %v503
      %v561 = vpack.c.b16 %v506, %v505
      %v562 = vpack.c.b16 %v508, %v507
      %v563 = vpack.c.b16 %v510, %v509
      %v564 = vpack.c.b16 %v512, %v511
      %v565 = vpack.c.b16 %v514, %v513
      %v566 = vpack.c.b16 %v516, %v515
      %v567 = vpack.c.b16 %v518, %v517
      %v568 = vpack.c.b16 %v520, %v519
      %v569 = vpack.c.b16 %v522, %v521
      %v570 = vpack.c.b16 %v524, %v523
      %v571 = vpack.c.b16 %v526, %v525
      %v572 = vpack.c.b16 %v528, %v527
      %v573 = vpack.c.b16 %v530, %v529
      %v574 = vpack.c.b16 %v532, %v531
      %v575 = vpack.c.b16 %v534, %v533
      %v576 = vpack.c.b16 %v536, %v535
      %v577 = vpack.c.b16 %v538, %v537
      %v578 = vpack.c.b16 %v540, %v539
      %v579 = vpack.c.b16 %v542, %v541
      %v580 = vpack.c.b16 %v544, %v543
      %v633 = vunpack.c.l.b16 %v381
      %v634 = vunpack.c.l.b16 %v382
      %v635 = vunpack.c.l.b16 %v383
      %v636 = vunpack.c.l.b16 %v384
      %v637 = vunpack.c.l.b16 %v385
      %v638 = vunpack.c.l.b16 %v386
      %v639 = vunpack.c.l.b16 %v387
      %v640 = vunpack.c.l.b16 %v388
      %v641 = vunpack.c.l.b16 %v389
      %v642 = vunpack.c.l.b16 %v390
      %v643 = vunpack.c.l.b16 %v391
      %v644 = vunpack.c.l.b16 %v392
      %v645 = vunpack.c.l.b16 %v393
      %v646 = vunpack.c.l.b16 %v394
      %v647 = vunpack.c.l.b16 %v395
      %v648 = vunpack.c.l.b16 %v396
      %v649 = vpack.c.b16 %v634, %v633
      %v650 = vpack.c.b16 %v636, %v635
      %v651 = vpack.c.b16 %v638, %v637
      %v652 = vpack.c.b16 %v640, %v639
      %v653 = vpack.c.b16 %v642, %v641
      %v654 = vpack.c.b16 %v644, %v643
      %v655 = vpack.c.b16 %v646, %v645
      %v656 = vpack.c.b16 %v648, %v647
      %665 = vmatpush.bf16.msra.mxu0 %v656
      %666 = vmatpush.bf16.msra.mxu0 %v655
      %667 = vmatpush.bf16.msra.mxu0 %v654
      %668 = vmatpush.bf16.msra.mxu0 %v653
      %669 = vmatpush.bf16.msra.mxu0 %v652
      %670 = vmatpush.bf16.msra.mxu0 %v651
      %671 = vmatpush.bf16.msra.mxu0 %v650
      %672 = vmatpush.bf16.msra.mxu0 %v649
      %673 = vmatmul.bf16.gmra.mxu0 %v545
      %v674 = vpop.f32.mrf.mxu0
      %v675 = vadd.f32 %v399, %v674
      %v676 = vpop.f32.mrf.mxu0
      %v677 = vadd.f32 %v399, %v676
      %678 = vmatmul.bf16.gmra.mxu0 %v546
      %v679 = vpop.f32.mrf.mxu0
      %v680 = vadd.f32 %v399, %v679
      %v681 = vpop.f32.mrf.mxu0
      %v682 = vadd.f32 %v399, %v681
      %683 = vmatmul.bf16.gmra.mxu0 %v547
      %v684 = vpop.f32.mrf.mxu0
      %v685 = vadd.f32 %v399, %v684
      %v686 = vpop.f32.mrf.mxu0
      %v687 = vadd.f32 %v399, %v686
      %688 = vmatmul.bf16.gmra.mxu0 %v548
      %v689 = vpop.f32.mrf.mxu0
      %v690 = vadd.f32 %v399, %v689
      %v691 = vpop.f32.mrf.mxu0
      %v692 = vadd.f32 %v399, %v691
      %693 = vmatmul.bf16.gmra.mxu0 %v549
      %v694 = vpop.f32.mrf.mxu0
      %v695 = vadd.f32 %v399, %v694
      %v696 = vpop.f32.mrf.mxu0
      %v697 = vadd.f32 %v399, %v696
      %698 = vmatmul.bf16.gmra.mxu0 %v550
      %v699 = vpop.f32.mrf.mxu0
      %v700 = vadd.f32 %v399, %v699
      %v701 = vpop.f32.mrf.mxu0
      %v702 = vadd.f32 %v399, %v701
      %703 = vmatmul.bf16.gmra.mxu0 %v551
      %v704 = vpop.f32.mrf.mxu0
      %v705 = vadd.f32 %v399, %v704
      %v706 = vpop.f32.mrf.mxu0
      %v707 = vadd.f32 %v399, %v706
      %708 = vmatmul.bf16.gmra.mxu0 %v552
      %v709 = vpop.f32.mrf.mxu0
      %v710 = vadd.f32 %v399, %v709
      %v711 = vpop.f32.mrf.mxu0
      %v712 = vadd.f32 %v399, %v711
      %713 = vmatmul.bf16.gmra.mxu0 %v553
      %v714 = vpop.f32.mrf.mxu0
      %v715 = vadd.f32 %v399, %v714
      %v716 = vpop.f32.mrf.mxu0
      %v717 = vadd.f32 %v399, %v716
      %718 = vmatmul.bf16.gmra.mxu0 %v554
      %v719 = vpop.f32.mrf.mxu0
      %v720 = vadd.f32 %v399, %v719
      %v721 = vpop.f32.mrf.mxu0
      %v722 = vadd.f32 %v399, %v721
      %723 = vmatmul.bf16.gmra.mxu0 %v555
      %v724 = vpop.f32.mrf.mxu0
      %v725 = vadd.f32 %v399, %v724
      %v726 = vpop.f32.mrf.mxu0
      %v727 = vadd.f32 %v399, %v726
      %728 = vmatmul.bf16.gmra.mxu0 %v556
      %v729 = vpop.f32.mrf.mxu0
      %v730 = vadd.f32 %v399, %v729
      %v731 = vpop.f32.mrf.mxu0
      %v732 = vadd.f32 %v399, %v731
      %733 = vmatmul.bf16.gmra.mxu0 %v557
      %v734 = vpop.f32.mrf.mxu0
      %v735 = vadd.f32 %v399, %v734
      %v736 = vpop.f32.mrf.mxu0
      %v737 = vadd.f32 %v399, %v736
      %738 = vmatmul.bf16.gmra.mxu0 %v558
      %v739 = vpop.f32.mrf.mxu0
      %v740 = vadd.f32 %v399, %v739
      %v741 = vpop.f32.mrf.mxu0
      %v742 = vadd.f32 %v399, %v741
      %743 = vmatmul.bf16.gmra.mxu0 %v559
      %v744 = vpop.f32.mrf.mxu0
      %v745 = vadd.f32 %v399, %v744
      %v746 = vpop.f32.mrf.mxu0
      %v747 = vadd.f32 %v399, %v746
      %748 = vmatmul.bf16.gmra.mxu0 %v560
      %v749 = vpop.f32.mrf.mxu0
      %v750 = vadd.f32 %v399, %v749
      %v751 = vpop.f32.mrf.mxu0
      %v752 = vadd.f32 %v399, %v751
      %753 = vmatmul.bf16.gmra.mxu0 %v561
      %v754 = vpop.f32.mrf.mxu0
      %v755 = vadd.f32 %v399, %v754
      %v756 = vpop.f32.mrf.mxu0
      %v757 = vadd.f32 %v399, %v756
      %758 = vmatmul.bf16.gmra.mxu0 %v562
      %v759 = vpop.f32.mrf.mxu0
      %v760 = vadd.f32 %v399, %v759
      %v761 = vpop.f32.mrf.mxu0
      %v762 = vadd.f32 %v399, %v761
      %763 = vmatmul.bf16.gmra.mxu0 %v563
      %v764 = vpop.f32.mrf.mxu0
      %v765 = vadd.f32 %v399, %v764
      %v766 = vpop.f32.mrf.mxu0
      %v767 = vadd.f32 %v399, %v766
      %768 = vmatmul.bf16.gmra.mxu0 %v564
      %v769 = vpop.f32.mrf.mxu0
      %v770 = vadd.f32 %v399, %v769
      %v771 = vpop.f32.mrf.mxu0
      %v772 = vadd.f32 %v399, %v771
      %773 = vmatmul.bf16.gmra.mxu0 %v565
      %v774 = vpop.f32.mrf.mxu0
      %v775 = vadd.f32 %v399, %v774
      %v776 = vpop.f32.mrf.mxu0
      %v777 = vadd.f32 %v399, %v776
      %778 = vmatmul.bf16.gmra.mxu0 %v566
      %v779 = vpop.f32.mrf.mxu0
      %v780 = vadd.f32 %v399, %v779
      %v781 = vpop.f32.mrf.mxu0
      %v782 = vadd.f32 %v399, %v781
      %783 = vmatmul.bf16.gmra.mxu0 %v567
      %v784 = vpop.f32.mrf.mxu0
      %v785 = vadd.f32 %v399, %v784
      %v786 = vpop.f32.mrf.mxu0
      %v787 = vadd.f32 %v399, %v786
      %788 = vmatmul.bf16.gmra.mxu0 %v568
      %v789 = vpop.f32.mrf.mxu0
      %v790 = vadd.f32 %v399, %v789
      %v791 = vpop.f32.mrf.mxu0
      %v792 = vadd.f32 %v399, %v791
      %793 = vmatmul.bf16.gmra.mxu0 %v569
      %v794 = vpop.f32.mrf.mxu0
      %v795 = vadd.f32 %v399, %v794
      %v796 = vpop.f32.mrf.mxu0
      %v797 = vadd.f32 %v399, %v796
      %798 = vmatmul.bf16.gmra.mxu0 %v570
      %v799 = vpop.f32.mrf.mxu0
      %v800 = vadd.f32 %v399, %v799
      %v801 = vpop.f32.mrf.mxu0
      %v802 = vadd.f32 %v399, %v801
      %803 = vmatmul.bf16.gmra.mxu0 %v571
      %v804 = vpop.f32.mrf.mxu0
      %v805 = vadd.f32 %v399, %v804
      %v806 = vpop.f32.mrf.mxu0
      %v807 = vadd.f32 %v399, %v806
      %808 = vmatmul.bf16.gmra.mxu0 %v572
      %v809 = vpop.f32.mrf.mxu0
      %v810 = vadd.f32 %v399, %v809
      %v811 = vpop.f32.mrf.mxu0
      %v812 = vadd.f32 %v399, %v811
      %813 = vmatmul.bf16.gmra.mxu0 %v573
      %v814 = vpop.f32.mrf.mxu0
      %v815 = vadd.f32 %v399, %v814
      %v816 = vpop.f32.mrf.mxu0
      %v817 = vadd.f32 %v399, %v816
      %818 = vmatmul.bf16.gmra.mxu0 %v574
      %v819 = vpop.f32.mrf.mxu0
      %v820 = vadd.f32 %v399, %v819
      %v821 = vpop.f32.mrf.mxu0
      %v822 = vadd.f32 %v399, %v821
      %823 = vmatmul.bf16.gmra.mxu0 %v575
      %v824 = vpop.f32.mrf.mxu0
      %v825 = vadd.f32 %v399, %v824
      %v826 = vpop.f32.mrf.mxu0
      %v827 = vadd.f32 %v399, %v826
      %828 = vmatmul.bf16.gmra.mxu0 %v576
      %v829 = vpop.f32.mrf.mxu0
      %v830 = vadd.f32 %v399, %v829
      %v831 = vpop.f32.mrf.mxu0
      %v832 = vadd.f32 %v399, %v831
      %833 = vmatmul.bf16.gmra.mxu0 %v577
      %v834 = vpop.f32.mrf.mxu0
      %v835 = vadd.f32 %v399, %v834
      %v836 = vpop.f32.mrf.mxu0
      %v837 = vadd.f32 %v399, %v836
      %838 = vmatmul.bf16.gmra.mxu0 %v578
      %v839 = vpop.f32.mrf.mxu0
      %v840 = vadd.f32 %v399, %v839
      %v841 = vpop.f32.mrf.mxu0
      %v842 = vadd.f32 %v399, %v841
      %843 = vmatmul.bf16.gmra.mxu0 %v579
      %v844 = vpop.f32.mrf.mxu0
      %v845 = vadd.f32 %v399, %v844
      %v846 = vpop.f32.mrf.mxu0
      %v847 = vadd.f32 %v399, %v846
      %848 = vmatmul.bf16.gmra.mxu0 %v580
      %v849 = vpop.f32.mrf.mxu0
      %v850 = vadd.f32 %v399, %v849
      %v851 = vpop.f32.mrf.mxu0
      %v852 = vadd.f32 %v399, %v851
      %853 = vdwg.mxu0
      %v854 = vmax.f32 %v675, 0.0
      %v855 = vmax.f32 %v677, 0.0
      %v856 = vmax.f32 %v680, 0.0
      %v857 = vmax.f32 %v682, 0.0
      %v858 = vmax.f32 %v685, 0.0
      %v859 = vmax.f32 %v687, 0.0
      %v860 = vmax.f32 %v690, 0.0
      %v861 = vmax.f32 %v692, 0.0
      %v862 = vmax.f32 %v695, 0.0
      %v863 = vmax.f32 %v697, 0.0
      %v864 = vmax.f32 %v700, 0.0
      %v865 = vmax.f32 %v702, 0.0
      %v866 = vmax.f32 %v705, 0.0
      %v867 = vmax.f32 %v707, 0.0
      %v868 = vmax.f32 %v710, 0.0
      %v869 = vmax.f32 %v712, 0.0
      %v870 = vmax.f32 %v715, 0.0
      %v871 = vmax.f32 %v717, 0.0
      %v872 = vmax.f32 %v720, 0.0
      %v873 = vmax.f32 %v722, 0.0
      %v874 = vmax.f32 %v725, 0.0
      %v875 = vmax.f32 %v727, 0.0
      %v876 = vmax.f32 %v730, 0.0
      %v877 = vmax.f32 %v732, 0.0
      %v878 = vmax.f32 %v735, 0.0
      %v879 = vmax.f32 %v737, 0.0
      %v880 = vmax.f32 %v740, 0.0
      %v881 = vmax.f32 %v742, 0.0
      %v882 = vmax.f32 %v745, 0.0
      %v883 = vmax.f32 %v747, 0.0
      %v884 = vmax.f32 %v750, 0.0
      %v885 = vmax.f32 %v752, 0.0
      %v886 = vmax.f32 %v755, 0.0
      %v887 = vmax.f32 %v757, 0.0
      %v888 = vmax.f32 %v760, 0.0
      %v889 = vmax.f32 %v762, 0.0
      %v890 = vmax.f32 %v765, 0.0
      %v891 = vmax.f32 %v767, 0.0
      %v892 = vmax.f32 %v770, 0.0
      %v893 = vmax.f32 %v772, 0.0
      %v894 = vmax.f32 %v775, 0.0
      %v895 = vmax.f32 %v777, 0.0
      %v896 = vmax.f32 %v780, 0.0
      %v897 = vmax.f32 %v782, 0.0
      %v898 = vmax.f32 %v785, 0.0
      %v899 = vmax.f32 %v787, 0.0
      %v900 = vmax.f32 %v790, 0.0
      %v901 = vmax.f32 %v792, 0.0
      %v902 = vmax.f32 %v795, 0.0
      %v903 = vmax.f32 %v797, 0.0
      %v904 = vmax.f32 %v800, 0.0
      %v905 = vmax.f32 %v802, 0.0
      %v906 = vmax.f32 %v805, 0.0
      %v907 = vmax.f32 %v807, 0.0
      %v908 = vmax.f32 %v810, 0.0
      %v909 = vmax.f32 %v812, 0.0
      %v910 = vmax.f32 %v815, 0.0
      %v911 = vmax.f32 %v817, 0.0
      %v912 = vmax.f32 %v820, 0.0
      %v913 = vmax.f32 %v822, 0.0
      %v914 = vmax.f32 %v825, 0.0
      %v915 = vmax.f32 %v827, 0.0
      %v916 = vmax.f32 %v830, 0.0
      %v917 = vmax.f32 %v832, 0.0
      %v918 = vmax.f32 %v835, 0.0
      %v919 = vmax.f32 %v837, 0.0
      %v920 = vmax.f32 %v840, 0.0
      %v921 = vmax.f32 %v842, 0.0
      %v922 = vmax.f32 %v845, 0.0
      %v923 = vmax.f32 %v847, 0.0
      %v924 = vmax.f32 %v850, 0.0
      %v925 = vmax.f32 %v852, 0.0
      %v926 = vmin.f32 %v854, 6.0
      %v927 = vmin.f32 %v855, 6.0
      %v928 = vmin.f32 %v856, 6.0
      %v929 = vmin.f32 %v857, 6.0
      %v930 = vmin.f32 %v858, 6.0
      %v931 = vmin.f32 %v859, 6.0
      %v932 = vmin.f32 %v860, 6.0
      %v933 = vmin.f32 %v861, 6.0
      %v934 = vmin.f32 %v862, 6.0
      %v935 = vmin.f32 %v863, 6.0
      %v936 = vmin.f32 %v864, 6.0
      %v937 = vmin.f32 %v865, 6.0
      %v938 = vmin.f32 %v866, 6.0
      %v939 = vmin.f32 %v867, 6.0
      %v940 = vmin.f32 %v868, 6.0
      %v941 = vmin.f32 %v869, 6.0
      %v942 = vmin.f32 %v870, 6.0
      %v943 = vmin.f32 %v871, 6.0
      %v944 = vmin.f32 %v872, 6.0
      %v945 = vmin.f32 %v873, 6.0
      %v946 = vmin.f32 %v874, 6.0
      %v947 = vmin.f32 %v875, 6.0
      %v948 = vmin.f32 %v876, 6.0
      %v949 = vmin.f32 %v877, 6.0
      %v950 = vmin.f32 %v878, 6.0
      %v951 = vmin.f32 %v879, 6.0
      %v952 = vmin.f32 %v880, 6.0
      %v953 = vmin.f32 %v881, 6.0
      %v954 = vmin.f32 %v882, 6.0
      %v955 = vmin.f32 %v883, 6.0
      %v956 = vmin.f32 %v884, 6.0
      %v957 = vmin.f32 %v885, 6.0
      %v958 = vmin.f32 %v886, 6.0
      %v959 = vmin.f32 %v887, 6.0
      %v960 = vmin.f32 %v888, 6.0
      %v961 = vmin.f32 %v889, 6.0
      %v962 = vmin.f32 %v890, 6.0
      %v963 = vmin.f32 %v891, 6.0
      %v964 = vmin.f32 %v892, 6.0
      %v965 = vmin.f32 %v893, 6.0
      %v966 = vmin.f32 %v894, 6.0
      %v967 = vmin.f32 %v895, 6.0
      %v968 = vmin.f32 %v896, 6.0
      %v969 = vmin.f32 %v897, 6.0
      %v970 = vmin.f32 %v898, 6.0
      %v971 = vmin.f32 %v899, 6.0
      %v972 = vmin.f32 %v900, 6.0
      %v973 = vmin.f32 %v901, 6.0
      %v974 = vmin.f32 %v902, 6.0
      %v975 = vmin.f32 %v903, 6.0
      %v976 = vmin.f32 %v904, 6.0
      %v977 = vmin.f32 %v905, 6.0
      %v978 = vmin.f32 %v906, 6.0
      %v979 = vmin.f32 %v907, 6.0
      %v980 = vmin.f32 %v908, 6.0
      %v981 = vmin.f32 %v909, 6.0
      %v982 = vmin.f32 %v910, 6.0
      %v983 = vmin.f32 %v911, 6.0
      %v984 = vmin.f32 %v912, 6.0
      %v985 = vmin.f32 %v913, 6.0
      %v986 = vmin.f32 %v914, 6.0
      %v987 = vmin.f32 %v915, 6.0
      %v988 = vmin.f32 %v916, 6.0
      %v989 = vmin.f32 %v917, 6.0
      %v990 = vmin.f32 %v918, 6.0
      %v991 = vmin.f32 %v919, 6.0
      %v992 = vmin.f32 %v920, 6.0
      %v993 = vmin.f32 %v921, 6.0
      %v994 = vmin.f32 %v922, 6.0
      %v995 = vmin.f32 %v923, 6.0
      %v996 = vmin.f32 %v924, 6.0
      %v997 = vmin.f32 %v925, 6.0
      %v998 = vlaneseq
      %v999 = vshrl.u32 %v998, 7
      %v1000 = vadd.s32 %v999, 8
      %v1001 = vadd.s32 %v999, 16
      %v1002 = vadd.s32 %v999, 24
      %vm1003 = vcmp.ge.s32.totalorder %v999, 1
      %vm1004 = vcmp.ge.s32.totalorder %v1000, 1
      %vm1005 = vcmp.ge.s32.totalorder %v1001, 1
      %vm1006 = vcmp.ge.s32.totalorder %v1002, 1
      %vm1007 = vcmp.le.s32.totalorder %v999, 16
      %vm1008 = vcmp.le.s32.totalorder %v1000, 16
      %vm1009 = vcmp.le.s32.totalorder %v1001, 16
      %vm1010 = vcmp.le.s32.totalorder %v1002, 16
      %vm1011 = vmand %vm1003, %vm1007
      %vm1012 = vmand %vm1004, %vm1008
      %vm1013 = vmand %vm1005, %vm1009
      %vm1014 = vmand %vm1006, %vm1010
      %v1015 = vsel %vm1011, 1, 0
      %v1016 = vsel %vm1012, 1, 0
      %v1017 = vsel %vm1013, 1, 0
      %v1018 = vsel %vm1014, 1, 0
      %vm1019 = vcmp.eq.s32.totalorder %v1015, 1
      %vm1020 = vcmp.eq.s32.totalorder %v1016, 1
      %vm1021 = vcmp.eq.s32.totalorder %v1017, 1
      %vm1022 = vcmp.eq.s32.totalorder %v1018, 1
      %v1023 = vsel %vm1019, %v926, 0.0
      %v1024 = vsel %vm1020, %v927, 0.0
      %v1025 = vsel %vm1021, %v928, 0.0
      %v1026 = vsel %vm1022, %v929, 0.0
      %v1027 = vsel %vm1019, %v930, 0.0
      %v1028 = vsel %vm1020, %v931, 0.0
      %v1029 = vsel %vm1021, %v932, 0.0
      %v1030 = vsel %vm1022, %v933, 0.0
      %v1031 = vsel %vm1019, %v934, 0.0
      %v1032 = vsel %vm1020, %v935, 0.0
      %v1033 = vsel %vm1021, %v936, 0.0
      %v1034 = vsel %vm1022, %v937, 0.0
      %v1035 = vsel %vm1019, %v938, 0.0
      %v1036 = vsel %vm1020, %v939, 0.0
      %v1037 = vsel %vm1021, %v940, 0.0
      %v1038 = vsel %vm1022, %v941, 0.0
      %v1039 = vsel %vm1019, %v942, 0.0
      %v1040 = vsel %vm1020, %v943, 0.0
      %v1041 = vsel %vm1021, %v944, 0.0
      %v1042 = vsel %vm1022, %v945, 0.0
      %v1043 = vsel %vm1019, %v946, 0.0
      %v1044 = vsel %vm1020, %v947, 0.0
      %v1045 = vsel %vm1021, %v948, 0.0
      %v1046 = vsel %vm1022, %v949, 0.0
      %v1047 = vsel %vm1019, %v950, 0.0
      %v1048 = vsel %vm1020, %v951, 0.0
      %v1049 = vsel %vm1021, %v952, 0.0
      %v1050 = vsel %vm1022, %v953, 0.0
      %v1051 = vsel %vm1019, %v954, 0.0
      %v1052 = vsel %vm1020, %v955, 0.0
      %v1053 = vsel %vm1021, %v956, 0.0
      %v1054 = vsel %vm1022, %v957, 0.0
      %v1055 = vsel %vm1019, %v958, 0.0
      %v1056 = vsel %vm1020, %v959, 0.0
      %v1057 = vsel %vm1021, %v960, 0.0
      %v1058 = vsel %vm1022, %v961, 0.0
      %v1059 = vsel %vm1019, %v962, 0.0
      %v1060 = vsel %vm1020, %v963, 0.0
      %v1061 = vsel %vm1021, %v964, 0.0
      %v1062 = vsel %vm1022, %v965, 0.0
      %v1063 = vsel %vm1019, %v966, 0.0
      %v1064 = vsel %vm1020, %v967, 0.0
      %v1065 = vsel %vm1021, %v968, 0.0
      %v1066 = vsel %vm1022, %v969, 0.0
      %v1067 = vsel %vm1019, %v970, 0.0
      %v1068 = vsel %vm1020, %v971, 0.0
      %v1069 = vsel %vm1021, %v972, 0.0
      %v1070 = vsel %vm1022, %v973, 0.0
      %v1071 = vsel %vm1019, %v974, 0.0
      %v1072 = vsel %vm1020, %v975, 0.0
      %v1073 = vsel %vm1021, %v976, 0.0
      %v1074 = vsel %vm1022, %v977, 0.0
      %v1075 = vsel %vm1019, %v978, 0.0
      %v1076 = vsel %vm1020, %v979, 0.0
      %v1077 = vsel %vm1021, %v980, 0.0
      %v1078 = vsel %vm1022, %v981, 0.0
      %v1079 = vsel %vm1019, %v982, 0.0
      %v1080 = vsel %vm1020, %v983, 0.0
      %v1081 = vsel %vm1021, %v984, 0.0
      %v1082 = vsel %vm1022, %v985, 0.0
      %v1083 = vsel %vm1019, %v986, 0.0
      %v1084 = vsel %vm1020, %v987, 0.0
      %v1085 = vsel %vm1021, %v988, 0.0
      %v1086 = vsel %vm1022, %v989, 0.0
      %v1087 = vsel %vm1019, %v990, 0.0
      %v1088 = vsel %vm1020, %v991, 0.0
      %v1089 = vsel %vm1021, %v992, 0.0
      %v1090 = vsel %vm1022, %v993, 0.0
      %v1091 = vsel %vm1019, %v994, 0.0
      %v1092 = vsel %vm1020, %v995, 0.0
      %v1093 = vsel %vm1021, %v996, 0.0
      %v1094 = vsel %vm1022, %v997, 0.0
      %v1095 = vpack.c.bf16 %v1023, %v1023
      %v1096 = vpack.c.bf16 %v1024, %v1024
      %v1097 = vpack.c.bf16 %v1025, %v1025
      %v1098 = vpack.c.bf16 %v1026, %v1026
      %v1099 = vpack.c.bf16 %v1027, %v1027
      %v1100 = vpack.c.bf16 %v1028, %v1028
      %v1101 = vpack.c.bf16 %v1029, %v1029
      %v1102 = vpack.c.bf16 %v1030, %v1030
      %v1103 = vpack.c.bf16 %v1031, %v1031
      %v1104 = vpack.c.bf16 %v1032, %v1032
      %v1105 = vpack.c.bf16 %v1033, %v1033
      %v1106 = vpack.c.bf16 %v1034, %v1034
      %v1107 = vpack.c.bf16 %v1035, %v1035
      %v1108 = vpack.c.bf16 %v1036, %v1036
      %v1109 = vpack.c.bf16 %v1037, %v1037
      %v1110 = vpack.c.bf16 %v1038, %v1038
      %v1111 = vpack.c.bf16 %v1039, %v1039
      %v1112 = vpack.c.bf16 %v1040, %v1040
      %v1113 = vpack.c.bf16 %v1041, %v1041
      %v1114 = vpack.c.bf16 %v1042, %v1042
      %v1115 = vpack.c.bf16 %v1043, %v1043
      %v1116 = vpack.c.bf16 %v1044, %v1044
      %v1117 = vpack.c.bf16 %v1045, %v1045
      %v1118 = vpack.c.bf16 %v1046, %v1046
      %v1119 = vpack.c.bf16 %v1047, %v1047
      %v1120 = vpack.c.bf16 %v1048, %v1048
      %v1121 = vpack.c.bf16 %v1049, %v1049
      %v1122 = vpack.c.bf16 %v1050, %v1050
      %v1123 = vpack.c.bf16 %v1051, %v1051
      %v1124 = vpack.c.bf16 %v1052, %v1052
      %v1125 = vpack.c.bf16 %v1053, %v1053
      %v1126 = vpack.c.bf16 %v1054, %v1054
      %v1127 = vpack.c.bf16 %v1055, %v1055
      %v1128 = vpack.c.bf16 %v1056, %v1056
      %v1129 = vpack.c.bf16 %v1057, %v1057
      %v1130 = vpack.c.bf16 %v1058, %v1058
      %v1131 = vpack.c.bf16 %v1059, %v1059
      %v1132 = vpack.c.bf16 %v1060, %v1060
      %v1133 = vpack.c.bf16 %v1061, %v1061
      %v1134 = vpack.c.bf16 %v1062, %v1062
      %v1135 = vpack.c.bf16 %v1063, %v1063
      %v1136 = vpack.c.bf16 %v1064, %v1064
      %v1137 = vpack.c.bf16 %v1065, %v1065
      %v1138 = vpack.c.bf16 %v1066, %v1066
      %v1139 = vpack.c.bf16 %v1067, %v1067
      %v1140 = vpack.c.bf16 %v1068, %v1068
      %v1141 = vpack.c.bf16 %v1069, %v1069
      %v1142 = vpack.c.bf16 %v1070, %v1070
      %v1143 = vpack.c.bf16 %v1071, %v1071
      %v1144 = vpack.c.bf16 %v1072, %v1072
      %v1145 = vpack.c.bf16 %v1073, %v1073
      %v1146 = vpack.c.bf16 %v1074, %v1074
      %v1147 = vpack.c.bf16 %v1075, %v1075
      %v1148 = vpack.c.bf16 %v1076, %v1076
      %v1149 = vpack.c.bf16 %v1077, %v1077
      %v1150 = vpack.c.bf16 %v1078, %v1078
      %v1151 = vpack.c.bf16 %v1079, %v1079
      %v1152 = vpack.c.bf16 %v1080, %v1080
      %v1153 = vpack.c.bf16 %v1081, %v1081
      %v1154 = vpack.c.bf16 %v1082, %v1082
      %v1155 = vpack.c.bf16 %v1083, %v1083
      %v1156 = vpack.c.bf16 %v1084, %v1084
      %v1157 = vpack.c.bf16 %v1085, %v1085
      %v1158 = vpack.c.bf16 %v1086, %v1086
      %v1159 = vpack.c.bf16 %v1087, %v1087
      %v1160 = vpack.c.bf16 %v1088, %v1088
      %v1161 = vpack.c.bf16 %v1089, %v1089
      %v1162 = vpack.c.bf16 %v1090, %v1090
      %v1163 = vpack.c.bf16 %v1091, %v1091
      %v1164 = vpack.c.bf16 %v1092, %v1092
      %v1165 = vpack.c.bf16 %v1093, %v1093
      %v1166 = vpack.c.bf16 %v1094, %v1094
      %1167 = vst [vmem:[#allocation2] sm:$0xf] %v1095
      %1168 = vst [vmem:[#allocation2 + $0x4] sm:$0xf] %v1096
      %1169 = vst [vmem:[#allocation2 + $0x8] sm:$0xf] %v1097
      %1170 = vst [vmem:[#allocation2 + $0xc] sm:$0xf] %v1098
      %1171 = vst [vmem:[#allocation2 + $0x10] sm:$0xf] %v1099
      %1172 = vst [vmem:[#allocation2 + $0x14] sm:$0xf] %v1100
      %1173 = vst [vmem:[#allocation2 + $0x18] sm:$0xf] %v1101
      %1174 = vst [vmem:[#allocation2 + $0x1c] sm:$0xf] %v1102
      %1175 = vst [vmem:[#allocation2 + $0x20] sm:$0xf] %v1103
      %1176 = vst [vmem:[#allocation2 + $0x24] sm:$0xf] %v1104
      %1177 = vst [vmem:[#allocation2 + $0x28] sm:$0xf] %v1105
      %1178 = vst [vmem:[#allocation2 + $0x2c] sm:$0xf] %v1106
      %1179 = vst [vmem:[#allocation2 + $0x30] sm:$0xf] %v1107
      %1180 = vst [vmem:[#allocation2 + $0x34] sm:$0xf] %v1108
      %1181 = vst [vmem:[#allocation2 + $0x38] sm:$0xf] %v1109
      %1182 = vst [vmem:[#allocation2 + $0x3c] sm:$0xf] %v1110
      %1183 = vst [vmem:[#allocation2 + $0x40] sm:$0xf] %v1111
      %1184 = vst [vmem:[#allocation2 + $0x44] sm:$0xf] %v1112
      %1185 = vst [vmem:[#allocation2 + $0x48] sm:$0xf] %v1113
      %1186 = vst [vmem:[#allocation2 + $0x4c] sm:$0xf] %v1114
      %1187 = vst [vmem:[#allocation2 + $0x50] sm:$0xf] %v1115
      %1188 = vst [vmem:[#allocation2 + $0x54] sm:$0xf] %v1116
      %1189 = vst [vmem:[#allocation2 + $0x58] sm:$0xf] %v1117
      %1190 = vst [vmem:[#allocation2 + $0x5c] sm:$0xf] %v1118
      %1191 = vst [vmem:[#allocation2 + $0x60] sm:$0xf] %v1119
      %1192 = vst [vmem:[#allocation2 + $0x64] sm:$0xf] %v1120
      %1193 = vst [vmem:[#allocation2 + $0x68] sm:$0xf] %v1121
      %1194 = vst [vmem:[#allocation2 + $0x6c] sm:$0xf] %v1122
      %1195 = vst [vmem:[#allocation2 + $0x70] sm:$0xf] %v1123
      %1196 = vst [vmem:[#allocation2 + $0x74] sm:$0xf] %v1124
      %1197 = vst [vmem:[#allocation2 + $0x78] sm:$0xf] %v1125
      %1198 = vst [vmem:[#allocation2 + $0x7c] sm:$0xf] %v1126
      %1199 = vst [vmem:[#allocation2 + $0x80] sm:$0xf] %v1127
      %1200 = vst [vmem:[#allocation2 + $0x84] sm:$0xf] %v1128
      %1201 = vst [vmem:[#allocation2 + $0x88] sm:$0xf] %v1129
      %1202 = vst [vmem:[#allocation2 + $0x8c] sm:$0xf] %v1130
      %1203 = vst [vmem:[#allocation2 + $0x90] sm:$0xf] %v1131
      %1204 = vst [vmem:[#allocation2 + $0x94] sm:$0xf] %v1132
      %1205 = vst [vmem:[#allocation2 + $0x98] sm:$0xf] %v1133
      %1206 = vst [vmem:[#allocation2 + $0x9c] sm:$0xf] %v1134
      %1207 = vst [vmem:[#allocation2 + $0xa0] sm:$0xf] %v1135
      %1208 = vst [vmem:[#allocation2 + $0xa4] sm:$0xf] %v1136
      %1209 = vst [vmem:[#allocation2 + $0xa8] sm:$0xf] %v1137
      %1210 = vst [vmem:[#allocation2 + $0xac] sm:$0xf] %v1138
      %1211 = vst [vmem:[#allocation2 + $0xb0] sm:$0xf] %v1139
      %1212 = vst [vmem:[#allocation2 + $0xb4] sm:$0xf] %v1140
      %1213 = vst [vmem:[#allocation2 + $0xb8] sm:$0xf] %v1141
      %1214 = vst [vmem:[#allocation2 + $0xbc] sm:$0xf] %v1142
      %1215 = vst [vmem:[#allocation2 + $0xc0] sm:$0xf] %v1143
      %1216 = vst [vmem:[#allocation2 + $0xc4] sm:$0xf] %v1144
      %1217 = vst [vmem:[#allocation2 + $0xc8] sm:$0xf] %v1145
      %1218 = vst [vmem:[#allocation2 + $0xcc] sm:$0xf] %v1146
      %1219 = vst [vmem:[#allocation2 + $0xd0] sm:$0xf] %v1147
      %1220 = vst [vmem:[#allocation2 + $0xd4] sm:$0xf] %v1148
      %1221 = vst [vmem:[#allocation2 + $0xd8] sm:$0xf] %v1149
      %1222 = vst [vmem:[#allocation2 + $0xdc] sm:$0xf] %v1150
      %1223 = vst [vmem:[#allocation2 + $0xe0] sm:$0xf] %v1151
      %1224 = vst [vmem:[#allocation2 + $0xe4] sm:$0xf] %v1152
      %1225 = vst [vmem:[#allocation2 + $0xe8] sm:$0xf] %v1153
      %1226 = vst [vmem:[#allocation2 + $0xec] sm:$0xf] %v1154
      %1227 = vst [vmem:[#allocation2 + $0xf0] sm:$0xf] %v1155
      %1228 = vst [vmem:[#allocation2 + $0xf4] sm:$0xf] %v1156
      %1229 = vst [vmem:[#allocation2 + $0xf8] sm:$0xf] %v1157
      %1230 = vst [vmem:[#allocation2 + $0xfc] sm:$0xf] %v1158
      %1231 = vst [vmem:[#allocation2 + $0x100] sm:$0xf] %v1159
      %1232 = vst [vmem:[#allocation2 + $0x104] sm:$0xf] %v1160
      %1233 = vst [vmem:[#allocation2 + $0x108] sm:$0xf] %v1161
      %1234 = vst [vmem:[#allocation2 + $0x10c] sm:$0xf] %v1162
      %1235 = vst [vmem:[#allocation2 + $0x110] sm:$0xf] %v1163
      %1236 = vst [vmem:[#allocation2 + $0x114] sm:$0xf] %v1164
      %1237 = vst [vmem:[#allocation2 + $0x118] sm:$0xf] %v1165
      %1238 = vst [vmem:[#allocation2 + $0x11c] sm:$0xf] %v1166
      %p1239 = scmp.eq.s32.totalorder %s23, 0
      // Predicated region
      $region49: #{inverted_residual_bottleneck.1} parent=47 // pred_check
        %p1240 = pneg %p1239
      $region50: #{inverted_residual_bottleneck.1} parent=47 // pred_check_branch
        %1242 = sbr.rel (%p1240) target = $region52
      $region51: #{inverted_residual_bottleneck.1} parent=47 // pred_region
        %1243 = vst [vmem:[#allocation2] sm:$0xf] 0
        %1244 = vst [vmem:[#allocation2 + $0x4] sm:$0xf] 0
        %1245 = vst [vmem:[#allocation2 + $0x8] sm:$0xf] 0
        %1246 = vst [vmem:[#allocation2 + $0xc] sm:$0xf] 0
        %s1247 = scalar_lea.vmem [#allocation2], 272
        %1248 = vst [vmem:[%s1247] sm:$0xf] 0
        %1249 = vst [vmem:[%s1247 + $0x4] sm:$0xf] 0
        %1250 = vst [vmem:[%s1247 + $0x8] sm:$0xf] 0
        %1251 = vst [vmem:[%s1247 + $0xc] sm:$0xf] 0
      $region52: #{inverted_residual_bottleneck.1} parent=47 // pred_fallthru
        _
      %v1252 = vld [vmem:[%s3] sm:$0x7]
      %v1253 = vld [vmem:[%s3 + $0x4] sm:$0x7]
      %v1254 = vld [vmem:[%s3 + $0x8] sm:$0x7]
      %v1255 = vld [vmem:[#allocation2] sm:$0xf]
      %v1256 = vld [vmem:[#allocation2 + $0x4] sm:$0xf]
      %v1257 = vld [vmem:[#allocation2 + $0x10] sm:$0xf]
      %v1258 = vld [vmem:[#allocation2 + $0x14] sm:$0xf]
      %v1259 = vld [vmem:[#allocation2 + $0x20] sm:$0xf]
      %v1260 = vld [vmem:[#allocation2 + $0x24] sm:$0xf]
      %v1261 = vld [vmem:[#allocation2 + $0x30] sm:$0xf]
      %v1262 = vld [vmem:[#allocation2 + $0x34] sm:$0xf]
      %v1263 = vld [vmem:[#allocation2 + $0x40] sm:$0xf]
      %v1264 = vld [vmem:[#allocation2 + $0x44] sm:$0xf]
      %v1265 = vld [vmem:[#allocation2 + $0x50] sm:$0xf]
      %v1266 = vld [vmem:[#allocation2 + $0x54] sm:$0xf]
      %v1267 = vld [vmem:[#allocation2 + $0x60] sm:$0xf]
      %v1268 = vld [vmem:[#allocation2 + $0x64] sm:$0xf]
      %v1269 = vld [vmem:[#allocation2 + $0x70] sm:$0xf]
      %v1270 = vld [vmem:[#allocation2 + $0x74] sm:$0xf]
      %v1271 = vld [vmem:[#allocation2 + $0x80] sm:$0xf]
      %v1272 = vld [vmem:[#allocation2 + $0x84] sm:$0xf]
      %v1273 = vld [vmem:[#allocation2 + $0x90] sm:$0xf]
      %v1274 = vld [vmem:[#allocation2 + $0x94] sm:$0xf]
      %v1275 = vld [vmem:[#allocation2 + $0xa0] sm:$0xf]
      %v1276 = vld [vmem:[#allocation2 + $0xa4] sm:$0xf]
      %v1277 = vld [vmem:[#allocation2 + $0xb0] sm:$0xf]
      %v1278 = vld [vmem:[#allocation2 + $0xb4] sm:$0xf]
      %v1279 = vld [vmem:[#allocation2 + $0xc0] sm:$0xf]
      %v1280 = vld [vmem:[#allocation2 + $0xc4] sm:$0xf]
      %v1281 = vld [vmem:[#allocation2 + $0xd0] sm:$0xf]
      %v1282 = vld [vmem:[#allocation2 + $0xd4] sm:$0xf]
      %v1283 = vld [vmem:[#allocation2 + $0xe0] sm:$0xf]
      %v1284 = vld [vmem:[#allocation2 + $0xe4] sm:$0xf]
      %v1285 = vld [vmem:[#allocation2 + $0xf0] sm:$0xf]
      %v1286 = vld [vmem:[#allocation2 + $0xf4] sm:$0xf]
      %v1287 = vunpack.c.l.bf16 %v1255
      %v1288 = vunpack.c.l.bf16 %v1256
      %v1289 = vunpack.c.l.bf16 %v1257
      %v1290 = vunpack.c.l.bf16 %v1258
      %v1291 = vunpack.c.l.bf16 %v1259
      %v1292 = vunpack.c.l.bf16 %v1260
      %v1293 = vunpack.c.l.bf16 %v1261
      %v1294 = vunpack.c.l.bf16 %v1262
      %v1295 = vunpack.c.l.bf16 %v1263
      %v1296 = vunpack.c.l.bf16 %v1264
      %v1297 = vunpack.c.l.bf16 %v1265
      %v1298 = vunpack.c.l.bf16 %v1266
      %v1299 = vunpack.c.l.bf16 %v1267
      %v1300 = vunpack.c.l.bf16 %v1268
      %v1301 = vunpack.c.l.bf16 %v1269
      %v1302 = vunpack.c.l.bf16 %v1270
      %v1303 = vunpack.c.l.bf16 %v1271
      %v1304 = vunpack.c.l.bf16 %v1272
      %v1305 = vunpack.c.l.bf16 %v1273
      %v1306 = vunpack.c.l.bf16 %v1274
      %v1307 = vunpack.c.l.bf16 %v1275
      %v1308 = vunpack.c.l.bf16 %v1276
      %v1309 = vunpack.c.l.bf16 %v1277
      %v1310 = vunpack.c.l.bf16 %v1278
      %v1311 = vunpack.c.l.bf16 %v1279
      %v1312 = vunpack.c.l.bf16 %v1280
      %v1313 = vunpack.c.l.bf16 %v1281
      %v1314 = vunpack.c.l.bf16 %v1282
      %v1315 = vunpack.c.l.bf16 %v1283
      %v1316 = vunpack.c.l.bf16 %v1284
      %v1317 = vunpack.c.l.bf16 %v1285
      %v1318 = vunpack.c.l.bf16 %v1286
      %v1319 = vperm.slane %v1252, 0
      %v1320 = vmul.f32 %v1287, %v1319
      %v1321 = vmul.f32 %v1288, %v1319
      %v1322 = vmul.f32 %v1289, %v1319
      %v1323 = vmul.f32 %v1290, %v1319
      %v1324 = vmul.f32 %v1291, %v1319
      %v1325 = vmul.f32 %v1292, %v1319
      %v1326 = vmul.f32 %v1293, %v1319
      %v1327 = vmul.f32 %v1294, %v1319
      %v1328 = vmul.f32 %v1295, %v1319
      %v1329 = vmul.f32 %v1296, %v1319
      %v1330 = vmul.f32 %v1297, %v1319
      %v1331 = vmul.f32 %v1298, %v1319
      %v1332 = vmul.f32 %v1299, %v1319
      %v1333 = vmul.f32 %v1300, %v1319
      %v1334 = vmul.f32 %v1301, %v1319
      %v1335 = vmul.f32 %v1302, %v1319
      %v1336 = vmul.f32 %v1303, %v1319
      %v1337 = vmul.f32 %v1304, %v1319
      %v1338 = vmul.f32 %v1305, %v1319
      %v1339 = vmul.f32 %v1306, %v1319
      %v1340 = vmul.f32 %v1307, %v1319
      %v1341 = vmul.f32 %v1308, %v1319
      %v1342 = vmul.f32 %v1309, %v1319
      %v1343 = vmul.f32 %v1310, %v1319
      %v1344 = vmul.f32 %v1311, %v1319
      %v1345 = vmul.f32 %v1312, %v1319
      %v1346 = vmul.f32 %v1313, %v1319
      %v1347 = vmul.f32 %v1314, %v1319
      %v1348 = vmul.f32 %v1315, %v1319
      %v1349 = vmul.f32 %v1316, %v1319
      %v1350 = vmul.f32 %v1317, %v1319
      %v1351 = vmul.f32 %v1318, %v1319
      %v1352 = vld [vmem:[#allocation2 + $0x8] sm:$0x1]
      %v1353 = vld [vmem:[#allocation2 + $0x18] sm:$0x1]
      %v1354 = vld [vmem:[#allocation2 + $0x28] sm:$0x1]
      %v1355 = vld [vmem:[#allocation2 + $0x38] sm:$0x1]
      %v1356 = vld [vmem:[#allocation2 + $0x48] sm:$0x1]
      %v1357 = vld [vmem:[#allocation2 + $0x58] sm:$0x1]
      %v1358 = vld [vmem:[#allocation2 + $0x68] sm:$0x1]
      %v1359 = vld [vmem:[#allocation2 + $0x78] sm:$0x1]
      %v1360 = vld [vmem:[#allocation2 + $0x88] sm:$0x1]
      %v1361 = vld [vmem:[#allocation2 + $0x98] sm:$0x1]
      %v1362 = vld [vmem:[#allocation2 + $0xa8] sm:$0x1]
      %v1363 = vld [vmem:[#allocation2 + $0xb8] sm:$0x1]
      %v1364 = vld [vmem:[#allocation2 + $0xc8] sm:$0x1]
      %v1365 = vld [vmem:[#allocation2 + $0xd8] sm:$0x1]
      %v1366 = vld [vmem:[#allocation2 + $0xe8] sm:$0x1]
      %v1367 = vld [vmem:[#allocation2 + $0xf8] sm:$0x1]
      %v1368 = vunpack.c.l.bf16 %v1352
      %v1369 = vunpack.c.l.bf16 %v1353
      %v1370 = vunpack.c.l.bf16 %v1354
      %v1371 = vunpack.c.l.bf16 %v1355
      %v1372 = vunpack.c.l.bf16 %v1356
      %v1373 = vunpack.c.l.bf16 %v1357
      %v1374 = vunpack.c.l.bf16 %v1358
      %v1375 = vunpack.c.l.bf16 %v1359
      %v1376 = vunpack.c.l.bf16 %v1360
      %v1377 = vunpack.c.l.bf16 %v1361
      %v1378 = vunpack.c.l.bf16 %v1362
      %v1379 = vunpack.c.l.bf16 %v1363
      %v1380 = vunpack.c.l.bf16 %v1364
      %v1381 = vunpack.c.l.bf16 %v1365
      %v1382 = vunpack.c.l.bf16 %v1366
      %v1383 = vunpack.c.l.bf16 %v1367
      %v1384 = vperm.slane %v1252, 1
      %v1385 = vmul.f32 %v1287, %v1384
      %v1386 = vmul.f32 %v1288, %v1384
      %v1387 = vmul.f32 %v1368, %v1384
      %v1388 = vmul.f32 %v1289, %v1384
      %v1389 = vmul.f32 %v1290, %v1384
      %v1390 = vmul.f32 %v1369, %v1384
      %v1391 = vmul.f32 %v1291, %v1384
      %v1392 = vmul.f32 %v1292, %v1384
      %v1393 = vmul.f32 %v1370, %v1384
      %v1394 = vmul.f32 %v1293, %v1384
      %v1395 = vmul.f32 %v1294, %v1384
      %v1396 = vmul.f32 %v1371, %v1384
      %v1397 = vmul.f32 %v1295, %v1384
      %v1398 = vmul.f32 %v1296, %v1384
      %v1399 = vmul.f32 %v1372, %v1384
      %v1400 = vmul.f32 %v1297, %v1384
      %v1401 = vmul.f32 %v1298, %v1384
      %v1402 = vmul.f32 %v1373, %v1384
      %v1403 = vmul.f32 %v1299, %v1384
      %v1404 = vmul.f32 %v1300, %v1384
      %v1405 = vmul.f32 %v1374, %v1384
      %v1406 = vmul.f32 %v1301, %v1384
      %v1407 = vmul.f32 %v1302, %v1384
      %v1408 = vmul.f32 %v1375, %v1384
      %v1409 = vmul.f32 %v1303, %v1384
      %v1410 = vmul.f32 %v1304, %v1384
      %v1411 = vmul.f32 %v1376, %v1384
      %v1412 = vmul.f32 %v1305, %v1384
      %v1413 = vmul.f32 %v1306, %v1384
      %v1414 = vmul.f32 %v1377, %v1384
      %v1415 = vmul.f32 %v1307, %v1384
      %v1416 = vmul.f32 %v1308, %v1384
      %v1417 = vmul.f32 %v1378, %v1384
      %v1418 = vmul.f32 %v1309, %v1384
      %v1419 = vmul.f32 %v1310, %v1384
      %v1420 = vmul.f32 %v1379, %v1384
      %v1421 = vmul.f32 %v1311, %v1384
      %v1422 = vmul.f32 %v1312, %v1384
      %v1423 = vmul.f32 %v1380, %v1384
      %v1424 = vmul.f32 %v1313, %v1384
      %v1425 = vmul.f32 %v1314, %v1384
      %v1426 = vmul.f32 %v1381, %v1384
      %v1427 = vmul.f32 %v1315, %v1384
      %v1428 = vmul.f32 %v1316, %v1384
      %v1429 = vmul.f32 %v1382, %v1384
      %v1430 = vmul.f32 %v1317, %v1384
      %v1431 = vmul.f32 %v1318, %v1384
      %v1432 = vmul.f32 %v1383, %v1384
      %vm1481 = vcmask 1046528
      %v1482 = vrot.slane %v1385, 1
      %v1483 = vrot.slane %v1386, 1
      %v1484 = vsel %vm1481, %v1482, %v1483
      %v1485 = vrot.slane %v1387, 1
      %v1486 = vsel %vm1481, %v1483, %v1485
      %v1487 = vrot.slane %v1388, 1
      %v1488 = vrot.slane %v1389, 1
      %v1489 = vsel %vm1481, %v1487, %v1488
      %v1490 = vrot.slane %v1390, 1
      %v1491 = vsel %vm1481, %v1488, %v1490
      %v1492 = vrot.slane %v1391, 1
      %v1493 = vrot.slane %v1392, 1
      %v1494 = vsel %vm1481, %v1492, %v1493
      %v1495 = vrot.slane %v1393, 1
      %v1496 = vsel %vm1481, %v1493, %v1495
      %v1497 = vrot.slane %v1394, 1
      %v1498 = vrot.slane %v1395, 1
      %v1499 = vsel %vm1481, %v1497, %v1498
      %v1500 = vrot.slane %v1396, 1
      %v1501 = vsel %vm1481, %v1498, %v1500
      %v1502 = vrot.slane %v1397, 1
      %v1503 = vrot.slane %v1398, 1
      %v1504 = vsel %vm1481, %v1502, %v1503
      %v1505 = vrot.slane %v1399, 1
      %v1506 = vsel %vm1481, %v1503, %v1505
      %v1507 = vrot.slane %v1400, 1
      %v1508 = vrot.slane %v1401, 1
      %v1509 = vsel %vm1481, %v1507, %v1508
      %v1510 = vrot.slane %v1402, 1
      %v1511 = vsel %vm1481, %v1508, %v1510
      %v1512 = vrot.slane %v1403, 1
      %v1513 = vrot.slane %v1404, 1
      %v1514 = vsel %vm1481, %v1512, %v1513
      %v1515 = vrot.slane %v1405, 1
      %v1516 = vsel %vm1481, %v1513, %v1515
      %v1517 = vrot.slane %v1406, 1
      %v1518 = vrot.slane %v1407, 1
      %v1519 = vsel %vm1481, %v1517, %v1518
      %v1520 = vrot.slane %v1408, 1
      %v1521 = vsel %vm1481, %v1518, %v1520
      %v1522 = vrot.slane %v1409, 1
      %v1523 = vrot.slane %v1410, 1
      %v1524 = vsel %vm1481, %v1522, %v1523
      %v1525 = vrot.slane %v1411, 1
      %v1526 = vsel %vm1481, %v1523, %v1525
      %v1527 = vrot.slane %v1412, 1
      %v1528 = vrot.slane %v1413, 1
      %v1529 = vsel %vm1481, %v1527, %v1528
      %v1530 = vrot.slane %v1414, 1
      %v1531 = vsel %vm1481, %v1528, %v1530
      %v1532 = vrot.slane %v1415, 1
      %v1533 = vrot.slane %v1416, 1
      %v1534 = vsel %vm1481, %v1532, %v1533
      %v1535 = vrot.slane %v1417, 1
      %v1536 = vsel %vm1481, %v1533, %v1535
      %v1537 = vrot.slane %v1418, 1
      %v1538 = vrot.slane %v1419, 1
      %v1539 = vsel %vm1481, %v1537, %v1538
      %v1540 = vrot.slane %v1420, 1
      %v1541 = vsel %vm1481, %v1538, %v1540
      %v1542 = vrot.slane %v1421, 1
      %v1543 = vrot.slane %v1422, 1
      %v1544 = vsel %vm1481, %v1542, %v1543
      %v1545 = vrot.slane %v1423, 1
      %v1546 = vsel %vm1481, %v1543, %v1545
      %v1547 = vrot.slane %v1424, 1
      %v1548 = vrot.slane %v1425, 1
      %v1549 = vsel %vm1481, %v1547, %v1548
      %v1550 = vrot.slane %v1426, 1
      %v1551 = vsel %vm1481, %v1548, %v1550
      %v1552 = vrot.slane %v1427, 1
      %v1553 = vrot.slane %v1428, 1
      %v1554 = vsel %vm1481, %v1552, %v1553
      %v1555 = vrot.slane %v1429, 1
      %v1556 = vsel %vm1481, %v1553, %v1555
      %v1557 = vrot.slane %v1430, 1
      %v1558 = vrot.slane %v1431, 1
      %v1559 = vsel %vm1481, %v1557, %v1558
      %v1560 = vrot.slane %v1432, 1
      %v1561 = vsel %vm1481, %v1558, %v1560
      %v1594 = vadd.f32 %v1320, %v1484
      %v1595 = vadd.f32 %v1321, %v1486
      %v1596 = vadd.f32 %v1322, %v1489
      %v1597 = vadd.f32 %v1323, %v1491
      %v1598 = vadd.f32 %v1324, %v1494
      %v1599 = vadd.f32 %v1325, %v1496
      %v1600 = vadd.f32 %v1326, %v1499
      %v1601 = vadd.f32 %v1327, %v1501
      %v1602 = vadd.f32 %v1328, %v1504
      %v1603 = vadd.f32 %v1329, %v1506
      %v1604 = vadd.f32 %v1330, %v1509
      %v1605 = vadd.f32 %v1331, %v1511
      %v1606 = vadd.f32 %v1332, %v1514
      %v1607 = vadd.f32 %v1333, %v1516
      %v1608 = vadd.f32 %v1334, %v1519
      %v1609 = vadd.f32 %v1335, %v1521
      %v1610 = vadd.f32 %v1336, %v1524
      %v1611 = vadd.f32 %v1337, %v1526
      %v1612 = vadd.f32 %v1338, %v1529
      %v1613 = vadd.f32 %v1339, %v1531
      %v1614 = vadd.f32 %v1340, %v1534
      %v1615 = vadd.f32 %v1341, %v1536
      %v1616 = vadd.f32 %v1342, %v1539
      %v1617 = vadd.f32 %v1343, %v1541
      %v1618 = vadd.f32 %v1344, %v1544
      %v1619 = vadd.f32 %v1345, %v1546
      %v1620 = vadd.f32 %v1346, %v1549
      %v1621 = vadd.f32 %v1347, %v1551
      %v1622 = vadd.f32 %v1348, %v1554
      %v1623 = vadd.f32 %v1349, %v1556
      %v1624 = vadd.f32 %v1350, %v1559
      %v1625 = vadd.f32 %v1351, %v1561
      %v1626 = vld [vmem:[#allocation2] sm:$0xe]
      %v1627 = vld [vmem:[#allocation2 + $0x10] sm:$0xe]
      %v1628 = vld [vmem:[#allocation2 + $0x20] sm:$0xe]
      %v1629 = vld [vmem:[#allocation2 + $0x30] sm:$0xe]
      %v1630 = vld [vmem:[#allocation2 + $0x40] sm:$0xe]
      %v1631 = vld [vmem:[#allocation2 + $0x50] sm:$0xe]
      %v1632 = vld [vmem:[#allocation2 + $0x60] sm:$0xe]
      %v1633 = vld [vmem:[#allocation2 + $0x70] sm:$0xe]
      %v1634 = vld [vmem:[#allocation2 + $0x80] sm:$0xe]
      %v1635 = vld [vmem:[#allocation2 + $0x90] sm:$0xe]
      %v1636 = vld [vmem:[#allocation2 + $0xa0] sm:$0xe]
      %v1637 = vld [vmem:[#allocation2 + $0xb0] sm:$0xe]
      %v1638 = vld [vmem:[#allocation2 + $0xc0] sm:$0xe]
      %v1639 = vld [vmem:[#allocation2 + $0xd0] sm:$0xe]
      %v1640 = vld [vmem:[#allocation2 + $0xe0] sm:$0xe]
      %v1641 = vld [vmem:[#allocation2 + $0xf0] sm:$0xe]
      %v1642 = vunpack.c.l.bf16 %v1626
      %v1643 = vunpack.c.l.bf16 %v1627
      %v1644 = vunpack.c.l.bf16 %v1628
      %v1645 = vunpack.c.l.bf16 %v1629
      %v1646 = vunpack.c.l.bf16 %v1630
      %v1647 = vunpack.c.l.bf16 %v1631
      %v1648 = vunpack.c.l.bf16 %v1632
      %v1649 = vunpack.c.l.bf16 %v1633
      %v1650 = vunpack.c.l.bf16 %v1634
      %v1651 = vunpack.c.l.bf16 %v1635
      %v1652 = vunpack.c.l.bf16 %v1636
      %v1653 = vunpack.c.l.bf16 %v1637
      %v1654 = vunpack.c.l.bf16 %v1638
      %v1655 = vunpack.c.l.bf16 %v1639
      %v1656 = vunpack.c.l.bf16 %v1640
      %v1657 = vunpack.c.l.bf16 %v1641
      %v1658 = vperm.slane %v1252, 2
      %v1659 = vmul.f32 %v1642, %v1658
      %v1660 = vmul.f32 %v1288, %v1658
      %v1661 = vmul.f32 %v1368, %v1658
      %v1662 = vmul.f32 %v1643, %v1658
      %v1663 = vmul.f32 %v1290, %v1658
      %v1664 = vmul.f32 %v1369, %v1658
      %v1665 = vmul.f32 %v1644, %v1658
      %v1666 = vmul.f32 %v1292, %v1658
      %v1667 = vmul.f32 %v1370, %v1658
      %v1668 = vmul.f32 %v1645, %v1658
      %v1669 = vmul.f32 %v1294, %v1658
      %v1670 = vmul.f32 %v1371, %v1658
      %v1671 = vmul.f32 %v1646, %v1658
      %v1672 = vmul.f32 %v1296, %v1658
      %v1673 = vmul.f32 %v1372, %v1658
      %v1674 = vmul.f32 %v1647, %v1658
      %v1675 = vmul.f32 %v1298, %v1658
      %v1676 = vmul.f32 %v1373, %v1658
      %v1677 = vmul.f32 %v1648, %v1658
      %v1678 = vmul.f32 %v1300, %v1658
      %v1679 = vmul.f32 %v1374, %v1658
      %v1680 = vmul.f32 %v1649, %v1658
      %v1681 = vmul.f32 %v1302, %v1658
      %v1682 = vmul.f32 %v1375, %v1658
      %v1683 = vmul.f32 %v1650, %v1658
      %v1684 = vmul.f32 %v1304, %v1658
      %v1685 = vmul.f32 %v1376, %v1658
      %v1686 = vmul.f32 %v1651, %v1658
      %v1687 = vmul.f32 %v1306, %v1658
      %v1688 = vmul.f32 %v1377, %v1658
      %v1689 = vmul.f32 %v1652, %v1658
      %v1690 = vmul.f32 %v1308, %v1658
      %v1691 = vmul.f32 %v1378, %v1658
      %v1692 = vmul.f32 %v1653, %v1658
      %v1693 = vmul.f32 %v1310, %v1658
      %v1694 = vmul.f32 %v1379, %v1658
      %v1695 = vmul.f32 %v1654, %v1658
      %v1696 = vmul.f32 %v1312, %v1658
      %v1697 = vmul.f32 %v1380, %v1658
      %v1698 = vmul.f32 %v1655, %v1658
      %v1699 = vmul.f32 %v1314, %v1658
      %v1700 = vmul.f32 %v1381, %v1658
      %v1701 = vmul.f32 %v1656, %v1658
      %v1702 = vmul.f32 %v1316, %v1658
      %v1703 = vmul.f32 %v1382, %v1658
      %v1704 = vmul.f32 %v1657, %v1658
      %v1705 = vmul.f32 %v1318, %v1658
      %v1706 = vmul.f32 %v1383, %v1658
      %vm1755 = vcmask 1045504
      %v1756 = vrot.slane %v1659, 2
      %v1757 = vrot.slane %v1660, 2
      %v1758 = vsel %vm1755, %v1756, %v1757
      %v1759 = vrot.slane %v1661, 2
      %v1760 = vsel %vm1755, %v1757, %v1759
      %v1761 = vrot.slane %v1662, 2
      %v1762 = vrot.slane %v1663, 2
      %v1763 = vsel %vm1755, %v1761, %v1762
      %v1764 = vrot.slane %v1664, 2
      %v1765 = vsel %vm1755, %v1762, %v1764
      %v1766 = vrot.slane %v1665, 2
      %v1767 = vrot.slane %v1666, 2
      %v1768 = vsel %vm1755, %v1766, %v1767
      %v1769 = vrot.slane %v1667, 2
      %v1770 = vsel %vm1755, %v1767, %v1769
      %v1771 = vrot.slane %v1668, 2
      %v1772 = vrot.slane %v1669, 2
      %v1773 = vsel %vm1755, %v1771, %v1772
      %v1774 = vrot.slane %v1670, 2
      %v1775 = vsel %vm1755, %v1772, %v1774
      %v1776 = vrot.slane %v1671, 2
      %v1777 = vrot.slane %v1672, 2
      %v1778 = vsel %vm1755, %v1776, %v1777
      %v1779 = vrot.slane %v1673, 2
      %v1780 = vsel %vm1755, %v1777, %v1779
      %v1781 = vrot.slane %v1674, 2
      %v1782 = vrot.slane %v1675, 2
      %v1783 = vsel %vm1755, %v1781, %v1782
      %v1784 = vrot.slane %v1676, 2
      %v1785 = vsel %vm1755, %v1782, %v1784
      %v1786 = vrot.slane %v1677, 2
      %v1787 = vrot.slane %v1678, 2
      %v1788 = vsel %vm1755, %v1786, %v1787
      %v1789 = vrot.slane %v1679, 2
      %v1790 = vsel %vm1755, %v1787, %v1789
      %v1791 = vrot.slane %v1680, 2
      %v1792 = vrot.slane %v1681, 2
      %v1793 = vsel %vm1755, %v1791, %v1792
      %v1794 = vrot.slane %v1682, 2
      %v1795 = vsel %vm1755, %v1792, %v1794
      %v1796 = vrot.slane %v1683, 2
      %v1797 = vrot.slane %v1684, 2
      %v1798 = vsel %vm1755, %v1796, %v1797
      %v1799 = vrot.slane %v1685, 2
      %v1800 = vsel %vm1755, %v1797, %v1799
      %v1801 = vrot.slane %v1686, 2
      %v1802 = vrot.slane %v1687, 2
      %v1803 = vsel %vm1755, %v1801, %v1802
      %v1804 = vrot.slane %v1688, 2
      %v1805 = vsel %vm1755, %v1802, %v1804
      %v1806 = vrot.slane %v1689, 2
      %v1807 = vrot.slane %v1690, 2
      %v1808 = vsel %vm1755, %v1806, %v1807
      %v1809 = vrot.slane %v1691, 2
      %v1810 = vsel %vm1755, %v1807, %v1809
      %v1811 = vrot.slane %v1692, 2
      %v1812 = vrot.slane %v1693, 2
      %v1813 = vsel %vm1755, %v1811, %v1812
      %v1814 = vrot.slane %v1694, 2
      %v1815 = vsel %vm1755, %v1812, %v1814
      %v1816 = vrot.slane %v1695, 2
      %v1817 = vrot.slane %v1696, 2
      %v1818 = vsel %vm1755, %v1816, %v1817
      %v1819 = vrot.slane %v1697, 2
      %v1820 = vsel %vm1755, %v1817, %v1819
      %v1821 = vrot.slane %v1698, 2
      %v1822 = vrot.slane %v1699, 2
      %v1823 = vsel %vm1755, %v1821, %v1822
      %v1824 = vrot.slane %v1700, 2
      %v1825 = vsel %vm1755, %v1822, %v1824
      %v1826 = vrot.slane %v1701, 2
      %v1827 = vrot.slane %v1702, 2
      %v1828 = vsel %vm1755, %v1826, %v1827
      %v1829 = vrot.slane %v1703, 2
      %v1830 = vsel %vm1755, %v1827, %v1829
      %v1831 = vrot.slane %v1704, 2
      %v1832 = vrot.slane %v1705, 2
      %v1833 = vsel %vm1755, %v1831, %v1832
      %v1834 = vrot.slane %v1706, 2
      %v1835 = vsel %vm1755, %v1832, %v1834
      %v1868 = vadd.f32 %v1594, %v1758
      %v1869 = vadd.f32 %v1595, %v1760
      %v1870 = vadd.f32 %v1596, %v1763
      %v1871 = vadd.f32 %v1597, %v1765
      %v1872 = vadd.f32 %v1598, %v1768
      %v1873 = vadd.f32 %v1599, %v1770
      %v1874 = vadd.f32 %v1600, %v1773
      %v1875 = vadd.f32 %v1601, %v1775
      %v1876 = vadd.f32 %v1602, %v1778
      %v1877 = vadd.f32 %v1603, %v1780
      %v1878 = vadd.f32 %v1604, %v1783
      %v1879 = vadd.f32 %v1605, %v1785
      %v1880 = vadd.f32 %v1606, %v1788
      %v1881 = vadd.f32 %v1607, %v1790
      %v1882 = vadd.f32 %v1608, %v1793
      %v1883 = vadd.f32 %v1609, %v1795
      %v1884 = vadd.f32 %v1610, %v1798
      %v1885 = vadd.f32 %v1611, %v1800
      %v1886 = vadd.f32 %v1612, %v1803
      %v1887 = vadd.f32 %v1613, %v1805
      %v1888 = vadd.f32 %v1614, %v1808
      %v1889 = vadd.f32 %v1615, %v1810
      %v1890 = vadd.f32 %v1616, %v1813
      %v1891 = vadd.f32 %v1617, %v1815
      %v1892 = vadd.f32 %v1618, %v1818
      %v1893 = vadd.f32 %v1619, %v1820
      %v1894 = vadd.f32 %v1620, %v1823
      %v1895 = vadd.f32 %v1621, %v1825
      %v1896 = vadd.f32 %v1622, %v1828
      %v1897 = vadd.f32 %v1623, %v1830
      %v1898 = vadd.f32 %v1624, %v1833
      %v1899 = vadd.f32 %v1625, %v1835
      %s1900 = scalar_lea.vmem [#allocation2], 16
      %v1901 = vld [vmem:[%s1900] sm:$0xf]
      %v1902 = vld [vmem:[%s1900 + $0x4] sm:$0xf]
      %v1903 = vld [vmem:[%s1900 + $0x10] sm:$0xf]
      %v1904 = vld [vmem:[%s1900 + $0x14] sm:$0xf]
      %v1905 = vld [vmem:[%s1900 + $0x20] sm:$0xf]
      %v1906 = vld [vmem:[%s1900 + $0x24] sm:$0xf]
      %v1907 = vld [vmem:[%s1900 + $0x30] sm:$0xf]
      %v1908 = vld [vmem:[%s1900 + $0x34] sm:$0xf]
      %v1909 = vld [vmem:[%s1900 + $0x40] sm:$0xf]
      %v1910 = vld [vmem:[%s1900 + $0x44] sm:$0xf]
      %v1911 = vld [vmem:[%s1900 + $0x50] sm:$0xf]
      %v1912 = vld [vmem:[%s1900 + $0x54] sm:$0xf]
      %v1913 = vld [vmem:[%s1900 + $0x60] sm:$0xf]
      %v1914 = vld [vmem:[%s1900 + $0x64] sm:$0xf]
      %v1915 = vld [vmem:[%s1900 + $0x70] sm:$0xf]
      %v1916 = vld [vmem:[%s1900 + $0x74] sm:$0xf]
      %v1917 = vld [vmem:[%s1900 + $0x80] sm:$0xf]
      %v1918 = vld [vmem:[%s1900 + $0x84] sm:$0xf]
      %v1919 = vld [vmem:[%s1900 + $0x90] sm:$0xf]
      %v1920 = vld [vmem:[%s1900 + $0x94] sm:$0xf]
      %v1921 = vld [vmem:[%s1900 + $0xa0] sm:$0xf]
      %v1922 = vld [vmem:[%s1900 + $0xa4] sm:$0xf]
      %v1923 = vld [vmem:[%s1900 + $0xb0] sm:$0xf]
      %v1924 = vld [vmem:[%s1900 + $0xb4] sm:$0xf]
      %v1925 = vld [vmem:[%s1900 + $0xc0] sm:$0xf]
      %v1926 = vld [vmem:[%s1900 + $0xc4] sm:$0xf]
      %v1927 = vld [vmem:[%s1900 + $0xd0] sm:$0xf]
      %v1928 = vld [vmem:[%s1900 + $0xd4] sm:$0xf]
      %v1929 = vld [vmem:[%s1900 + $0xe0] sm:$0xf]
      %v1930 = vld [vmem:[%s1900 + $0xe4] sm:$0xf]
      %v1931 = vld [vmem:[%s1900 + $0xf0] sm:$0xf]
      %v1932 = vld [vmem:[%s1900 + $0xf4] sm:$0xf]
      %v1933 = vunpack.c.l.bf16 %v1901
      %v1934 = vunpack.c.l.bf16 %v1902
      %v1935 = vunpack.c.l.bf16 %v1903
      %v1936 = vunpack.c.l.bf16 %v1904
      %v1937 = vunpack.c.l.bf16 %v1905
      %v1938 = vunpack.c.l.bf16 %v1906
      %v1939 = vunpack.c.l.bf16 %v1907
      %v1940 = vunpack.c.l.bf16 %v1908
      %v1941 = vunpack.c.l.bf16 %v1909
      %v1942 = vunpack.c.l.bf16 %v1910
      %v1943 = vunpack.c.l.bf16 %v1911
      %v1944 = vunpack.c.l.bf16 %v1912
      %v1945 = vunpack.c.l.bf16 %v1913
      %v1946 = vunpack.c.l.bf16 %v1914
      %v1947 = vunpack.c.l.bf16 %v1915
      %v1948 = vunpack.c.l.bf16 %v1916
      %v1949 = vunpack.c.l.bf16 %v1917
      %v1950 = vunpack.c.l.bf16 %v1918
      %v1951 = vunpack.c.l.bf16 %v1919
      %v1952 = vunpack.c.l.bf16 %v1920
      %v1953 = vunpack.c.l.bf16 %v1921
      %v1954 = vunpack.c.l.bf16 %v1922
      %v1955 = vunpack.c.l.bf16 %v1923
      %v1956 = vunpack.c.l.bf16 %v1924
      %v1957 = vunpack.c.l.bf16 %v1925
      %v1958 = vunpack.c.l.bf16 %v1926
      %v1959 = vunpack.c.l.bf16 %v1927
      %v1960 = vunpack.c.l.bf16 %v1928
      %v1961 = vunpack.c.l.bf16 %v1929
      %v1962 = vunpack.c.l.bf16 %v1930
      %v1963 = vunpack.c.l.bf16 %v1931
      %v1964 = vunpack.c.l.bf16 %v1932
      %v1965 = vperm.slane %v1253, 0
      %v1966 = vmul.f32 %v1933, %v1965
      %v1967 = vmul.f32 %v1934, %v1965
      %v1968 = vmul.f32 %v1935, %v1965
      %v1969 = vmul.f32 %v1936, %v1965
      %v1970 = vmul.f32 %v1937, %v1965
      %v1971 = vmul.f32 %v1938, %v1965
      %v1972 = vmul.f32 %v1939, %v1965
      %v1973 = vmul.f32 %v1940, %v1965
      %v1974 = vmul.f32 %v1941, %v1965
      %v1975 = vmul.f32 %v1942, %v1965
      %v1976 = vmul.f32 %v1943, %v1965
      %v1977 = vmul.f32 %v1944, %v1965
      %v1978 = vmul.f32 %v1945, %v1965
      %v1979 = vmul.f32 %v1946, %v1965
      %v1980 = vmul.f32 %v1947, %v1965
      %v1981 = vmul.f32 %v1948, %v1965
      %v1982 = vmul.f32 %v1949, %v1965
      %v1983 = vmul.f32 %v1950, %v1965
      %v1984 = vmul.f32 %v1951, %v1965
      %v1985 = vmul.f32 %v1952, %v1965
      %v1986 = vmul.f32 %v1953, %v1965
      %v1987 = vmul.f32 %v1954, %v1965
      %v1988 = vmul.f32 %v1955, %v1965
      %v1989 = vmul.f32 %v1956, %v1965
      %v1990 = vmul.f32 %v1957, %v1965
      %v1991 = vmul.f32 %v1958, %v1965
      %v1992 = vmul.f32 %v1959, %v1965
      %v1993 = vmul.f32 %v1960, %v1965
      %v1994 = vmul.f32 %v1961, %v1965
      %v1995 = vmul.f32 %v1962, %v1965
      %v1996 = vmul.f32 %v1963, %v1965
      %v1997 = vmul.f32 %v1964, %v1965
      %v1998 = vadd.f32 %v1868, %v1966
      %v1999 = vadd.f32 %v1869, %v1967
      %v2000 = vadd.f32 %v1870, %v1968
      %v2001 = vadd.f32 %v1871, %v1969
      %v2002 = vadd.f32 %v1872, %v1970
      %v2003 = vadd.f32 %v1873, %v1971
      %v2004 = vadd.f32 %v1874, %v1972
      %v2005 = vadd.f32 %v1875, %v1973
      %v2006 = vadd.f32 %v1876, %v1974
      %v2007 = vadd.f32 %v1877, %v1975
      %v2008 = vadd.f32 %v1878, %v1976
      %v2009 = vadd.f32 %v1879, %v1977
      %v2010 = vadd.f32 %v1880, %v1978
      %v2011 = vadd.f32 %v1881, %v1979
      %v2012 = vadd.f32 %v1882, %v1980
      %v2013 = vadd.f32 %v1883, %v1981
      %v2014 = vadd.f32 %v1884, %v1982
      %v2015 = vadd.f32 %v1885, %v1983
      %v2016 = vadd.f32 %v1886, %v1984
      %v2017 = vadd.f32 %v1887, %v1985
      %v2018 = vadd.f32 %v1888, %v1986
      %v2019 = vadd.f32 %v1889, %v1987
      %v2020 = vadd.f32 %v1890, %v1988
      %v2021 = vadd.f32 %v1891, %v1989
      %v2022 = vadd.f32 %v1892, %v1990
      %v2023 = vadd.f32 %v1893, %v1991
      %v2024 = vadd.f32 %v1894, %v1992
      %v2025 = vadd.f32 %v1895, %v1993
      %v2026 = vadd.f32 %v1896, %v1994
      %v2027 = vadd.f32 %v1897, %v1995
      %v2028 = vadd.f32 %v1898, %v1996
      %v2029 = vadd.f32 %v1899, %v1997
      %v2030 = vld [vmem:[%s1900 + $0x8] sm:$0x1]
      %v2031 = vld [vmem:[%s1900 + $0x18] sm:$0x1]
      %v2032 = vld [vmem:[%s1900 + $0x28] sm:$0x1]
      %v2033 = vld [vmem:[%s1900 + $0x38] sm:$0x1]
      %v2034 = vld [vmem:[%s1900 + $0x48] sm:$0x1]
      %v2035 = vld [vmem:[%s1900 + $0x58] sm:$0x1]
      %v2036 = vld [vmem:[%s1900 + $0x68] sm:$0x1]
      %v2037 = vld [vmem:[%s1900 + $0x78] sm:$0x1]
      %v2038 = vld [vmem:[%s1900 + $0x88] sm:$0x1]
      %v2039 = vld [vmem:[%s1900 + $0x98] sm:$0x1]
      %v2040 = vld [vmem:[%s1900 + $0xa8] sm:$0x1]
      %v2041 = vld [vmem:[%s1900 + $0xb8] sm:$0x1]
      %v2042 = vld [vmem:[%s1900 + $0xc8] sm:$0x1]
      %v2043 = vld [vmem:[%s1900 + $0xd8] sm:$0x1]
      %v2044 = vld [vmem:[%s1900 + $0xe8] sm:$0x1]
      %v2045 = vld [vmem:[%s1900 + $0xf8] sm:$0x1]
      %v2046 = vunpack.c.l.bf16 %v2030
      %v2047 = vunpack.c.l.bf16 %v2031
      %v2048 = vunpack.c.l.bf16 %v2032
      %v2049 = vunpack.c.l.bf16 %v2033
      %v2050 = vunpack.c.l.bf16 %v2034
      %v2051 = vunpack.c.l.bf16 %v2035
      %v2052 = vunpack.c.l.bf16 %v2036
      %v2053 = vunpack.c.l.bf16 %v2037
      %v2054 = vunpack.c.l.bf16 %v2038
      %v2055 = vunpack.c.l.bf16 %v2039
      %v2056 = vunpack.c.l.bf16 %v2040
      %v2057 = vunpack.c.l.bf16 %v2041
      %v2058 = vunpack.c.l.bf16 %v2042
      %v2059 = vunpack.c.l.bf16 %v2043
      %v2060 = vunpack.c.l.bf16 %v2044
      %v2061 = vunpack.c.l.bf16 %v2045
      %v2062 = vperm.slane %v1253, 1
      %v2063 = vmul.f32 %v1933, %v2062
      %v2064 = vmul.f32 %v1934, %v2062
      %v2065 = vmul.f32 %v2046, %v2062
      %v2066 = vmul.f32 %v1935, %v2062
      %v2067 = vmul.f32 %v1936, %v2062
      %v2068 = vmul.f32 %v2047, %v2062
      %v2069 = vmul.f32 %v1937, %v2062
      %v2070 = vmul.f32 %v1938, %v2062
      %v2071 = vmul.f32 %v2048, %v2062
      %v2072 = vmul.f32 %v1939, %v2062
      %v2073 = vmul.f32 %v1940, %v2062
      %v2074 = vmul.f32 %v2049, %v2062
      %v2075 = vmul.f32 %v1941, %v2062
      %v2076 = vmul.f32 %v1942, %v2062
      %v2077 = vmul.f32 %v2050, %v2062
      %v2078 = vmul.f32 %v1943, %v2062
      %v2079 = vmul.f32 %v1944, %v2062
      %v2080 = vmul.f32 %v2051, %v2062
      %v2081 = vmul.f32 %v1945, %v2062
      %v2082 = vmul.f32 %v1946, %v2062
      %v2083 = vmul.f32 %v2052, %v2062
      %v2084 = vmul.f32 %v1947, %v2062
      %v2085 = vmul.f32 %v1948, %v2062
      %v2086 = vmul.f32 %v2053, %v2062
      %v2087 = vmul.f32 %v1949, %v2062
      %v2088 = vmul.f32 %v1950, %v2062
      %v2089 = vmul.f32 %v2054, %v2062
      %v2090 = vmul.f32 %v1951, %v2062
      %v2091 = vmul.f32 %v1952, %v2062
      %v2092 = vmul.f32 %v2055, %v2062
      %v2093 = vmul.f32 %v1953, %v2062
      %v2094 = vmul.f32 %v1954, %v2062
      %v2095 = vmul.f32 %v2056, %v2062
      %v2096 = vmul.f32 %v1955, %v2062
      %v2097 = vmul.f32 %v1956, %v2062
      %v2098 = vmul.f32 %v2057, %v2062
      %v2099 = vmul.f32 %v1957, %v2062
      %v2100 = vmul.f32 %v1958, %v2062
      %v2101 = vmul.f32 %v2058, %v2062
      %v2102 = vmul.f32 %v1959, %v2062
      %v2103 = vmul.f32 %v1960, %v2062
      %v2104 = vmul.f32 %v2059, %v2062
      %v2105 = vmul.f32 %v1961, %v2062
      %v2106 = vmul.f32 %v1962, %v2062
      %v2107 = vmul.f32 %v2060, %v2062
      %v2108 = vmul.f32 %v1963, %v2062
      %v2109 = vmul.f32 %v1964, %v2062
      %v2110 = vmul.f32 %v2061, %v2062
      %v2159 = vrot.slane %v2063, 1
      %v2160 = vrot.slane %v2064, 1
      %v2161 = vsel %vm1481, %v2159, %v2160
      %v2162 = vrot.slane %v2065, 1
      %v2163 = vsel %vm1481, %v2160, %v2162
      %v2164 = vrot.slane %v2066, 1
      %v2165 = vrot.slane %v2067, 1
      %v2166 = vsel %vm1481, %v2164, %v2165
      %v2167 = vrot.slane %v2068, 1
      %v2168 = vsel %vm1481, %v2165, %v2167
      %v2169 = vrot.slane %v2069, 1
      %v2170 = vrot.slane %v2070, 1
      %v2171 = vsel %vm1481, %v2169, %v2170
      %v2172 = vrot.slane %v2071, 1
      %v2173 = vsel %vm1481, %v2170, %v2172
      %v2174 = vrot.slane %v2072, 1
      %v2175 = vrot.slane %v2073, 1
      %v2176 = vsel %vm1481, %v2174, %v2175
      %v2177 = vrot.slane %v2074, 1
      %v2178 = vsel %vm1481, %v2175, %v2177
      %v2179 = vrot.slane %v2075, 1
      %v2180 = vrot.slane %v2076, 1
      %v2181 = vsel %vm1481, %v2179, %v2180
      %v2182 = vrot.slane %v2077, 1
      %v2183 = vsel %vm1481, %v2180, %v2182
      %v2184 = vrot.slane %v2078, 1
      %v2185 = vrot.slane %v2079, 1
      %v2186 = vsel %vm1481, %v2184, %v2185
      %v2187 = vrot.slane %v2080, 1
      %v2188 = vsel %vm1481, %v2185, %v2187
      %v2189 = vrot.slane %v2081, 1
      %v2190 = vrot.slane %v2082, 1
      %v2191 = vsel %vm1481, %v2189, %v2190
      %v2192 = vrot.slane %v2083, 1
      %v2193 = vsel %vm1481, %v2190, %v2192
      %v2194 = vrot.slane %v2084, 1
      %v2195 = vrot.slane %v2085, 1
      %v2196 = vsel %vm1481, %v2194, %v2195
      %v2197 = vrot.slane %v2086, 1
      %v2198 = vsel %vm1481, %v2195, %v2197
      %v2199 = vrot.slane %v2087, 1
      %v2200 = vrot.slane %v2088, 1
      %v2201 = vsel %vm1481, %v2199, %v2200
      %v2202 = vrot.slane %v2089, 1
      %v2203 = vsel %vm1481, %v2200, %v2202
      %v2204 = vrot.slane %v2090, 1
      %v2205 = vrot.slane %v2091, 1
      %v2206 = vsel %vm1481, %v2204, %v2205
      %v2207 = vrot.slane %v2092, 1
      %v2208 = vsel %vm1481, %v2205, %v2207
      %v2209 = vrot.slane %v2093, 1
      %v2210 = vrot.slane %v2094, 1
      %v2211 = vsel %vm1481, %v2209, %v2210
      %v2212 = vrot.slane %v2095, 1
      %v2213 = vsel %vm1481, %v2210, %v2212
      %v2214 = vrot.slane %v2096, 1
      %v2215 = vrot.slane %v2097, 1
      %v2216 = vsel %vm1481, %v2214, %v2215
      %v2217 = vrot.slane %v2098, 1
      %v2218 = vsel %vm1481, %v2215, %v2217
      %v2219 = vrot.slane %v2099, 1
      %v2220 = vrot.slane %v2100, 1
      %v2221 = vsel %vm1481, %v2219, %v2220
      %v2222 = vrot.slane %v2101, 1
      %v2223 = vsel %vm1481, %v2220, %v2222
      %v2224 = vrot.slane %v2102, 1
      %v2225 = vrot.slane %v2103, 1
      %v2226 = vsel %vm1481, %v2224, %v2225
      %v2227 = vrot.slane %v2104, 1
      %v2228 = vsel %vm1481, %v2225, %v2227
      %v2229 = vrot.slane %v2105, 1
      %v2230 = vrot.slane %v2106, 1
      %v2231 = vsel %vm1481, %v2229, %v2230
      %v2232 = vrot.slane %v2107, 1
      %v2233 = vsel %vm1481, %v2230, %v2232
      %v2234 = vrot.slane %v2108, 1
      %v2235 = vrot.slane %v2109, 1
      %v2236 = vsel %vm1481, %v2234, %v2235
      %v2237 = vrot.slane %v2110, 1
      %v2238 = vsel %vm1481, %v2235, %v2237
      %v2271 = vadd.f32 %v1998, %v2161
      %v2272 = vadd.f32 %v1999, %v2163
      %v2273 = vadd.f32 %v2000, %v2166
      %v2274 = vadd.f32 %v2001, %v2168
      %v2275 = vadd.f32 %v2002, %v2171
      %v2276 = vadd.f32 %v2003, %v2173
      %v2277 = vadd.f32 %v2004, %v2176
      %v2278 = vadd.f32 %v2005, %v2178
      %v2279 = vadd.f32 %v2006, %v2181
      %v2280 = vadd.f32 %v2007, %v2183
      %v2281 = vadd.f32 %v2008, %v2186
      %v2282 = vadd.f32 %v2009, %v2188
      %v2283 = vadd.f32 %v2010, %v2191
      %v2284 = vadd.f32 %v2011, %v2193
      %v2285 = vadd.f32 %v2012, %v2196
      %v2286 = vadd.f32 %v2013, %v2198
      %v2287 = vadd.f32 %v2014, %v2201
      %v2288 = vadd.f32 %v2015, %v2203
      %v2289 = vadd.f32 %v2016, %v2206
      %v2290 = vadd.f32 %v2017, %v2208
      %v2291 = vadd.f32 %v2018, %v2211
      %v2292 = vadd.f32 %v2019, %v2213
      %v2293 = vadd.f32 %v2020, %v2216
      %v2294 = vadd.f32 %v2021, %v2218
      %v2295 = vadd.f32 %v2022, %v2221
      %v2296 = vadd.f32 %v2023, %v2223
      %v2297 = vadd.f32 %v2024, %v2226
      %v2298 = vadd.f32 %v2025, %v2228
      %v2299 = vadd.f32 %v2026, %v2231
      %v2300 = vadd.f32 %v2027, %v2233
      %v2301 = vadd.f32 %v2028, %v2236
      %v2302 = vadd.f32 %v2029, %v2238
      %v2303 = vld [vmem:[%s1900] sm:$0xe]
      %v2304 = vld [vmem:[%s1900 + $0x10] sm:$0xe]
      %v2305 = vld [vmem:[%s1900 + $0x20] sm:$0xe]
      %v2306 = vld [vmem:[%s1900 + $0x30] sm:$0xe]
      %v2307 = vld [vmem:[%s1900 + $0x40] sm:$0xe]
      %v2308 = vld [vmem:[%s1900 + $0x50] sm:$0xe]
      %v2309 = vld [vmem:[%s1900 + $0x60] sm:$0xe]
      %v2310 = vld [vmem:[%s1900 + $0x70] sm:$0xe]
      %v2311 = vld [vmem:[%s1900 + $0x80] sm:$0xe]
      %v2312 = vld [vmem:[%s1900 + $0x90] sm:$0xe]
      %v2313 = vld [vmem:[%s1900 + $0xa0] sm:$0xe]
      %v2314 = vld [vmem:[%s1900 + $0xb0] sm:$0xe]
      %v2315 = vld [vmem:[%s1900 + $0xc0] sm:$0xe]
      %v2316 = vld [vmem:[%s1900 + $0xd0] sm:$0xe]
      %v2317 = vld [vmem:[%s1900 + $0xe0] sm:$0xe]
      %v2318 = vld [vmem:[%s1900 + $0xf0] sm:$0xe]
      %v2319 = vunpack.c.l.bf16 %v2303
      %v2320 = vunpack.c.l.bf16 %v2304
      %v2321 = vunpack.c.l.bf16 %v2305
      %v2322 = vunpack.c.l.bf16 %v2306
      %v2323 = vunpack.c.l.bf16 %v2307
      %v2324 = vunpack.c.l.bf16 %v2308
      %v2325 = vunpack.c.l.bf16 %v2309
      %v2326 = vunpack.c.l.bf16 %v2310
      %v2327 = vunpack.c.l.bf16 %v2311
      %v2328 = vunpack.c.l.bf16 %v2312
      %v2329 = vunpack.c.l.bf16 %v2313
      %v2330 = vunpack.c.l.bf16 %v2314
      %v2331 = vunpack.c.l.bf16 %v2315
      %v2332 = vunpack.c.l.bf16 %v2316
      %v2333 = vunpack.c.l.bf16 %v2317
      %v2334 = vunpack.c.l.bf16 %v2318
      %v2335 = vperm.slane %v1253, 2
      %v2336 = vmul.f32 %v2319, %v2335
      %v2337 = vmul.f32 %v1934, %v2335
      %v2338 = vmul.f32 %v2046, %v2335
      %v2339 = vmul.f32 %v2320, %v2335
      %v2340 = vmul.f32 %v1936, %v2335
      %v2341 = vmul.f32 %v2047, %v2335
      %v2342 = vmul.f32 %v2321, %v2335
      %v2343 = vmul.f32 %v1938, %v2335
      %v2344 = vmul.f32 %v2048, %v2335
      %v2345 = vmul.f32 %v2322, %v2335
      %v2346 = vmul.f32 %v1940, %v2335
      %v2347 = vmul.f32 %v2049, %v2335
      %v2348 = vmul.f32 %v2323, %v2335
      %v2349 = vmul.f32 %v1942, %v2335
      %v2350 = vmul.f32 %v2050, %v2335
      %v2351 = vmul.f32 %v2324, %v2335
      %v2352 = vmul.f32 %v1944, %v2335
      %v2353 = vmul.f32 %v2051, %v2335
      %v2354 = vmul.f32 %v2325, %v2335
      %v2355 = vmul.f32 %v1946, %v2335
      %v2356 = vmul.f32 %v2052, %v2335
      %v2357 = vmul.f32 %v2326, %v2335
      %v2358 = vmul.f32 %v1948, %v2335
      %v2359 = vmul.f32 %v2053, %v2335
      %v2360 = vmul.f32 %v2327, %v2335
      %v2361 = vmul.f32 %v1950, %v2335
      %v2362 = vmul.f32 %v2054, %v2335
      %v2363 = vmul.f32 %v2328, %v2335
      %v2364 = vmul.f32 %v1952, %v2335
      %v2365 = vmul.f32 %v2055, %v2335
      %v2366 = vmul.f32 %v2329, %v2335
      %v2367 = vmul.f32 %v1954, %v2335
      %v2368 = vmul.f32 %v2056, %v2335
      %v2369 = vmul.f32 %v2330, %v2335
      %v2370 = vmul.f32 %v1956, %v2335
      %v2371 = vmul.f32 %v2057, %v2335
      %v2372 = vmul.f32 %v2331, %v2335
      %v2373 = vmul.f32 %v1958, %v2335
      %v2374 = vmul.f32 %v2058, %v2335
      %v2375 = vmul.f32 %v2332, %v2335
      %v2376 = vmul.f32 %v1960, %v2335
      %v2377 = vmul.f32 %v2059, %v2335
      %v2378 = vmul.f32 %v2333, %v2335
      %v2379 = vmul.f32 %v1962, %v2335
      %v2380 = vmul.f32 %v2060, %v2335
      %v2381 = vmul.f32 %v2334, %v2335
      %v2382 = vmul.f32 %v1964, %v2335
      %v2383 = vmul.f32 %v2061, %v2335
      %v2432 = vrot.slane %v2336, 2
      %v2433 = vrot.slane %v2337, 2
      %v2434 = vsel %vm1755, %v2432, %v2433
      %v2435 = vrot.slane %v2338, 2
      %v2436 = vsel %vm1755, %v2433, %v2435
      %v2437 = vrot.slane %v2339, 2
      %v2438 = vrot.slane %v2340, 2
      %v2439 = vsel %vm1755, %v2437, %v2438
      %v2440 = vrot.slane %v2341, 2
      %v2441 = vsel %vm1755, %v2438, %v2440
      %v2442 = vrot.slane %v2342, 2
      %v2443 = vrot.slane %v2343, 2
      %v2444 = vsel %vm1755, %v2442, %v2443
      %v2445 = vrot.slane %v2344, 2
      %v2446 = vsel %vm1755, %v2443, %v2445
      %v2447 = vrot.slane %v2345, 2
      %v2448 = vrot.slane %v2346, 2
      %v2449 = vsel %vm1755, %v2447, %v2448
      %v2450 = vrot.slane %v2347, 2
      %v2451 = vsel %vm1755, %v2448, %v2450
      %v2452 = vrot.slane %v2348, 2
      %v2453 = vrot.slane %v2349, 2
      %v2454 = vsel %vm1755, %v2452, %v2453
      %v2455 = vrot.slane %v2350, 2
      %v2456 = vsel %vm1755, %v2453, %v2455
      %v2457 = vrot.slane %v2351, 2
      %v2458 = vrot.slane %v2352, 2
      %v2459 = vsel %vm1755, %v2457, %v2458
      %v2460 = vrot.slane %v2353, 2
      %v2461 = vsel %vm1755, %v2458, %v2460
      %v2462 = vrot.slane %v2354, 2
      %v2463 = vrot.slane %v2355, 2
      %v2464 = vsel %vm1755, %v2462, %v2463
      %v2465 = vrot.slane %v2356, 2
      %v2466 = vsel %vm1755, %v2463, %v2465
      %v2467 = vrot.slane %v2357, 2
      %v2468 = vrot.slane %v2358, 2
      %v2469 = vsel %vm1755, %v2467, %v2468
      %v2470 = vrot.slane %v2359, 2
      %v2471 = vsel %vm1755, %v2468, %v2470
      %v2472 = vrot.slane %v2360, 2
      %v2473 = vrot.slane %v2361, 2
      %v2474 = vsel %vm1755, %v2472, %v2473
      %v2475 = vrot.slane %v2362, 2
      %v2476 = vsel %vm1755, %v2473, %v2475
      %v2477 = vrot.slane %v2363, 2
      %v2478 = vrot.slane %v2364, 2
      %v2479 = vsel %vm1755, %v2477, %v2478
      %v2480 = vrot.slane %v2365, 2
      %v2481 = vsel %vm1755, %v2478, %v2480
      %v2482 = vrot.slane %v2366, 2
      %v2483 = vrot.slane %v2367, 2
      %v2484 = vsel %vm1755, %v2482, %v2483
      %v2485 = vrot.slane %v2368, 2
      %v2486 = vsel %vm1755, %v2483, %v2485
      %v2487 = vrot.slane %v2369, 2
      %v2488 = vrot.slane %v2370, 2
      %v2489 = vsel %vm1755, %v2487, %v2488
      %v2490 = vrot.slane %v2371, 2
      %v2491 = vsel %vm1755, %v2488, %v2490
      %v2492 = vrot.slane %v2372, 2
      %v2493 = vrot.slane %v2373, 2
      %v2494 = vsel %vm1755, %v2492, %v2493
      %v2495 = vrot.slane %v2374, 2
      %v2496 = vsel %vm1755, %v2493, %v2495
      %v2497 = vrot.slane %v2375, 2
      %v2498 = vrot.slane %v2376, 2
      %v2499 = vsel %vm1755, %v2497, %v2498
      %v2500 = vrot.slane %v2377, 2
      %v2501 = vsel %vm1755, %v2498, %v2500
      %v2502 = vrot.slane %v2378, 2
      %v2503 = vrot.slane %v2379, 2
      %v2504 = vsel %vm1755, %v2502, %v2503
      %v2505 = vrot.slane %v2380, 2
      %v2506 = vsel %vm1755, %v2503, %v2505
      %v2507 = vrot.slane %v2381, 2
      %v2508 = vrot.slane %v2382, 2
      %v2509 = vsel %vm1755, %v2507, %v2508
      %v2510 = vrot.slane %v2383, 2
      %v2511 = vsel %vm1755, %v2508, %v2510
      %v2544 = vadd.f32 %v2271, %v2434
      %v2545 = vadd.f32 %v2272, %v2436
      %v2546 = vadd.f32 %v2273, %v2439
      %v2547 = vadd.f32 %v2274, %v2441
      %v2548 = vadd.f32 %v2275, %v2444
      %v2549 = vadd.f32 %v2276, %v2446
      %v2550 = vadd.f32 %v2277, %v2449
      %v2551 = vadd.f32 %v2278, %v2451
      %v2552 = vadd.f32 %v2279, %v2454
      %v2553 = vadd.f32 %v2280, %v2456
      %v2554 = vadd.f32 %v2281, %v2459
      %v2555 = vadd.f32 %v2282, %v2461
      %v2556 = vadd.f32 %v2283, %v2464
      %v2557 = vadd.f32 %v2284, %v2466
      %v2558 = vadd.f32 %v2285, %v2469
      %v2559 = vadd.f32 %v2286, %v2471
      %v2560 = vadd.f32 %v2287, %v2474
      %v2561 = vadd.f32 %v2288, %v2476
      %v2562 = vadd.f32 %v2289, %v2479
      %v2563 = vadd.f32 %v2290, %v2481
      %v2564 = vadd.f32 %v2291, %v2484
      %v2565 = vadd.f32 %v2292, %v2486
      %v2566 = vadd.f32 %v2293, %v2489
      %v2567 = vadd.f32 %v2294, %v2491
      %v2568 = vadd.f32 %v2295, %v2494
      %v2569 = vadd.f32 %v2296, %v2496
      %v2570 = vadd.f32 %v2297, %v2499
      %v2571 = vadd.f32 %v2298, %v2501
      %v2572 = vadd.f32 %v2299, %v2504
      %v2573 = vadd.f32 %v2300, %v2506
      %v2574 = vadd.f32 %v2301, %v2509
      %v2575 = vadd.f32 %v2302, %v2511
      %s2576 = scalar_lea.vmem [#allocation2], 32
      %v2577 = vld [vmem:[%s2576] sm:$0xf]
      %v2578 = vld [vmem:[%s2576 + $0x4] sm:$0xf]
      %v2579 = vld [vmem:[%s2576 + $0x10] sm:$0xf]
      %v2580 = vld [vmem:[%s2576 + $0x14] sm:$0xf]
      %v2581 = vld [vmem:[%s2576 + $0x20] sm:$0xf]
      %v2582 = vld [vmem:[%s2576 + $0x24] sm:$0xf]
      %v2583 = vld [vmem:[%s2576 + $0x30] sm:$0xf]
      %v2584 = vld [vmem:[%s2576 + $0x34] sm:$0xf]
      %v2585 = vld [vmem:[%s2576 + $0x40] sm:$0xf]
      %v2586 = vld [vmem:[%s2576 + $0x44] sm:$0xf]
      %v2587 = vld [vmem:[%s2576 + $0x50] sm:$0xf]
      %v2588 = vld [vmem:[%s2576 + $0x54] sm:$0xf]
      %v2589 = vld [vmem:[%s2576 + $0x60] sm:$0xf]
      %v2590 = vld [vmem:[%s2576 + $0x64] sm:$0xf]
      %v2591 = vld [vmem:[%s2576 + $0x70] sm:$0xf]
      %v2592 = vld [vmem:[%s2576 + $0x74] sm:$0xf]
      %v2593 = vld [vmem:[%s2576 + $0x80] sm:$0xf]
      %v2594 = vld [vmem:[%s2576 + $0x84] sm:$0xf]
      %v2595 = vld [vmem:[%s2576 + $0x90] sm:$0xf]
      %v2596 = vld [vmem:[%s2576 + $0x94] sm:$0xf]
      %v2597 = vld [vmem:[%s2576 + $0xa0] sm:$0xf]
      %v2598 = vld [vmem:[%s2576 + $0xa4] sm:$0xf]
      %v2599 = vld [vmem:[%s2576 + $0xb0] sm:$0xf]
      %v2600 = vld [vmem:[%s2576 + $0xb4] sm:$0xf]
      %v2601 = vld [vmem:[%s2576 + $0xc0] sm:$0xf]
      %v2602 = vld [vmem:[%s2576 + $0xc4] sm:$0xf]
      %v2603 = vld [vmem:[%s2576 + $0xd0] sm:$0xf]
      %v2604 = vld [vmem:[%s2576 + $0xd4] sm:$0xf]
      %v2605 = vld [vmem:[%s2576 + $0xe0] sm:$0xf]
      %v2606 = vld [vmem:[%s2576 + $0xe4] sm:$0xf]
      %v2607 = vld [vmem:[%s2576 + $0xf0] sm:$0xf]
      %v2608 = vld [vmem:[%s2576 + $0xf4] sm:$0xf]
      %v2609 = vunpack.c.l.bf16 %v2577
      %v2610 = vunpack.c.l.bf16 %v2578
      %v2611 = vunpack.c.l.bf16 %v2579
      %v2612 = vunpack.c.l.bf16 %v2580
      %v2613 = vunpack.c.l.bf16 %v2581
      %v2614 = vunpack.c.l.bf16 %v2582
      %v2615 = vunpack.c.l.bf16 %v2583
      %v2616 = vunpack.c.l.bf16 %v2584
      %v2617 = vunpack.c.l.bf16 %v2585
      %v2618 = vunpack.c.l.bf16 %v2586
      %v2619 = vunpack.c.l.bf16 %v2587
      %v2620 = vunpack.c.l.bf16 %v2588
      %v2621 = vunpack.c.l.bf16 %v2589
      %v2622 = vunpack.c.l.bf16 %v2590
      %v2623 = vunpack.c.l.bf16 %v2591
      %v2624 = vunpack.c.l.bf16 %v2592
      %v2625 = vunpack.c.l.bf16 %v2593
      %v2626 = vunpack.c.l.bf16 %v2594
      %v2627 = vunpack.c.l.bf16 %v2595
      %v2628 = vunpack.c.l.bf16 %v2596
      %v2629 = vunpack.c.l.bf16 %v2597
      %v2630 = vunpack.c.l.bf16 %v2598
      %v2631 = vunpack.c.l.bf16 %v2599
      %v2632 = vunpack.c.l.bf16 %v2600
      %v2633 = vunpack.c.l.bf16 %v2601
      %v2634 = vunpack.c.l.bf16 %v2602
      %v2635 = vunpack.c.l.bf16 %v2603
      %v2636 = vunpack.c.l.bf16 %v2604
      %v2637 = vunpack.c.l.bf16 %v2605
      %v2638 = vunpack.c.l.bf16 %v2606
      %v2639 = vunpack.c.l.bf16 %v2607
      %v2640 = vunpack.c.l.bf16 %v2608
      %v2641 = vperm.slane %v1254, 0
      %v2642 = vmul.f32 %v2609, %v2641
      %v2643 = vmul.f32 %v2610, %v2641
      %v2644 = vmul.f32 %v2611, %v2641
      %v2645 = vmul.f32 %v2612, %v2641
      %v2646 = vmul.f32 %v2613, %v2641
      %v2647 = vmul.f32 %v2614, %v2641
      %v2648 = vmul.f32 %v2615, %v2641
      %v2649 = vmul.f32 %v2616, %v2641
      %v2650 = vmul.f32 %v2617, %v2641
      %v2651 = vmul.f32 %v2618, %v2641
      %v2652 = vmul.f32 %v2619, %v2641
      %v2653 = vmul.f32 %v2620, %v2641
      %v2654 = vmul.f32 %v2621, %v2641
      %v2655 = vmul.f32 %v2622, %v2641
      %v2656 = vmul.f32 %v2623, %v2641
      %v2657 = vmul.f32 %v2624, %v2641
      %v2658 = vmul.f32 %v2625, %v2641
      %v2659 = vmul.f32 %v2626, %v2641
      %v2660 = vmul.f32 %v2627, %v2641
      %v2661 = vmul.f32 %v2628, %v2641
      %v2662 = vmul.f32 %v2629, %v2641
      %v2663 = vmul.f32 %v2630, %v2641
      %v2664 = vmul.f32 %v2631, %v2641
      %v2665 = vmul.f32 %v2632, %v2641
      %v2666 = vmul.f32 %v2633, %v2641
      %v2667 = vmul.f32 %v2634, %v2641
      %v2668 = vmul.f32 %v2635, %v2641
      %v2669 = vmul.f32 %v2636, %v2641
      %v2670 = vmul.f32 %v2637, %v2641
      %v2671 = vmul.f32 %v2638, %v2641
      %v2672 = vmul.f32 %v2639, %v2641
      %v2673 = vmul.f32 %v2640, %v2641
      %v2674 = vadd.f32 %v2544, %v2642
      %v2675 = vadd.f32 %v2545, %v2643
      %v2676 = vadd.f32 %v2546, %v2644
      %v2677 = vadd.f32 %v2547, %v2645
      %v2678 = vadd.f32 %v2548, %v2646
      %v2679 = vadd.f32 %v2549, %v2647
      %v2680 = vadd.f32 %v2550, %v2648
      %v2681 = vadd.f32 %v2551, %v2649
      %v2682 = vadd.f32 %v2552, %v2650
      %v2683 = vadd.f32 %v2553, %v2651
      %v2684 = vadd.f32 %v2554, %v2652
      %v2685 = vadd.f32 %v2555, %v2653
      %v2686 = vadd.f32 %v2556, %v2654
      %v2687 = vadd.f32 %v2557, %v2655
      %v2688 = vadd.f32 %v2558, %v2656
      %v2689 = vadd.f32 %v2559, %v2657
      %v2690 = vadd.f32 %v2560, %v2658
      %v2691 = vadd.f32 %v2561, %v2659
      %v2692 = vadd.f32 %v2562, %v2660
      %v2693 = vadd.f32 %v2563, %v2661
      %v2694 = vadd.f32 %v2564, %v2662
      %v2695 = vadd.f32 %v2565, %v2663
      %v2696 = vadd.f32 %v2566, %v2664
      %v2697 = vadd.f32 %v2567, %v2665
      %v2698 = vadd.f32 %v2568, %v2666
      %v2699 = vadd.f32 %v2569, %v2667
      %v2700 = vadd.f32 %v2570, %v2668
      %v2701 = vadd.f32 %v2571, %v2669
      %v2702 = vadd.f32 %v2572, %v2670
      %v2703 = vadd.f32 %v2573, %v2671
      %v2704 = vadd.f32 %v2574, %v2672
      %v2705 = vadd.f32 %v2575, %v2673
      %v2706 = vld [vmem:[%s2576 + $0x8] sm:$0x1]
      %v2707 = vld [vmem:[%s2576 + $0x18] sm:$0x1]
      %v2708 = vld [vmem:[%s2576 + $0x28] sm:$0x1]
      %v2709 = vld [vmem:[%s2576 + $0x38] sm:$0x1]
      %v2710 = vld [vmem:[%s2576 + $0x48] sm:$0x1]
      %v2711 = vld [vmem:[%s2576 + $0x58] sm:$0x1]
      %v2712 = vld [vmem:[%s2576 + $0x68] sm:$0x1]
      %v2713 = vld [vmem:[%s2576 + $0x78] sm:$0x1]
      %v2714 = vld [vmem:[%s2576 + $0x88] sm:$0x1]
      %v2715 = vld [vmem:[%s2576 + $0x98] sm:$0x1]
      %v2716 = vld [vmem:[%s2576 + $0xa8] sm:$0x1]
      %v2717 = vld [vmem:[%s2576 + $0xb8] sm:$0x1]
      %v2718 = vld [vmem:[%s2576 + $0xc8] sm:$0x1]
      %v2719 = vld [vmem:[%s2576 + $0xd8] sm:$0x1]
      %v2720 = vld [vmem:[%s2576 + $0xe8] sm:$0x1]
      %v2721 = vld [vmem:[%s2576 + $0xf8] sm:$0x1]
      %v2722 = vunpack.c.l.bf16 %v2706
      %v2723 = vunpack.c.l.bf16 %v2707
      %v2724 = vunpack.c.l.bf16 %v2708
      %v2725 = vunpack.c.l.bf16 %v2709
      %v2726 = vunpack.c.l.bf16 %v2710
      %v2727 = vunpack.c.l.bf16 %v2711
      %v2728 = vunpack.c.l.bf16 %v2712
      %v2729 = vunpack.c.l.bf16 %v2713
      %v2730 = vunpack.c.l.bf16 %v2714
      %v2731 = vunpack.c.l.bf16 %v2715
      %v2732 = vunpack.c.l.bf16 %v2716
      %v2733 = vunpack.c.l.bf16 %v2717
      %v2734 = vunpack.c.l.bf16 %v2718
      %v2735 = vunpack.c.l.bf16 %v2719
      %v2736 = vunpack.c.l.bf16 %v2720
      %v2737 = vunpack.c.l.bf16 %v2721
      %v2738 = vperm.slane %v1254, 1
      %v2739 = vmul.f32 %v2609, %v2738
      %v2740 = vmul.f32 %v2610, %v2738
      %v2741 = vmul.f32 %v2722, %v2738
      %v2742 = vmul.f32 %v2611, %v2738
      %v2743 = vmul.f32 %v2612, %v2738
      %v2744 = vmul.f32 %v2723, %v2738
      %v2745 = vmul.f32 %v2613, %v2738
      %v2746 = vmul.f32 %v2614, %v2738
      %v2747 = vmul.f32 %v2724, %v2738
      %v2748 = vmul.f32 %v2615, %v2738
      %v2749 = vmul.f32 %v2616, %v2738
      %v2750 = vmul.f32 %v2725, %v2738
      %v2751 = vmul.f32 %v2617, %v2738
      %v2752 = vmul.f32 %v2618, %v2738
      %v2753 = vmul.f32 %v2726, %v2738
      %v2754 = vmul.f32 %v2619, %v2738
      %v2755 = vmul.f32 %v2620, %v2738
      %v2756 = vmul.f32 %v2727, %v2738
      %v2757 = vmul.f32 %v2621, %v2738
      %v2758 = vmul.f32 %v2622, %v2738
      %v2759 = vmul.f32 %v2728, %v2738
      %v2760 = vmul.f32 %v2623, %v2738
      %v2761 = vmul.f32 %v2624, %v2738
      %v2762 = vmul.f32 %v2729, %v2738
      %v2763 = vmul.f32 %v2625, %v2738
      %v2764 = vmul.f32 %v2626, %v2738
      %v2765 = vmul.f32 %v2730, %v2738
      %v2766 = vmul.f32 %v2627, %v2738
      %v2767 = vmul.f32 %v2628, %v2738
      %v2768 = vmul.f32 %v2731, %v2738
      %v2769 = vmul.f32 %v2629, %v2738
      %v2770 = vmul.f32 %v2630, %v2738
      %v2771 = vmul.f32 %v2732, %v2738
      %v2772 = vmul.f32 %v2631, %v2738
      %v2773 = vmul.f32 %v2632, %v2738
      %v2774 = vmul.f32 %v2733, %v2738
      %v2775 = vmul.f32 %v2633, %v2738
      %v2776 = vmul.f32 %v2634, %v2738
      %v2777 = vmul.f32 %v2734, %v2738
      %v2778 = vmul.f32 %v2635, %v2738
      %v2779 = vmul.f32 %v2636, %v2738
      %v2780 = vmul.f32 %v2735, %v2738
      %v2781 = vmul.f32 %v2637, %v2738
      %v2782 = vmul.f32 %v2638, %v2738
      %v2783 = vmul.f32 %v2736, %v2738
      %v2784 = vmul.f32 %v2639, %v2738
      %v2785 = vmul.f32 %v2640, %v2738
      %v2786 = vmul.f32 %v2737, %v2738
      %v2835 = vrot.slane %v2739, 1
      %v2836 = vrot.slane %v2740, 1
      %v2837 = vsel %vm1481, %v2835, %v2836
      %v2838 = vrot.slane %v2741, 1
      %v2839 = vsel %vm1481, %v2836, %v2838
      %v2840 = vrot.slane %v2742, 1
      %v2841 = vrot.slane %v2743, 1
      %v2842 = vsel %vm1481, %v2840, %v2841
      %v2843 = vrot.slane %v2744, 1
      %v2844 = vsel %vm1481, %v2841, %v2843
      %v2845 = vrot.slane %v2745, 1
      %v2846 = vrot.slane %v2746, 1
      %v2847 = vsel %vm1481, %v2845, %v2846
      %v2848 = vrot.slane %v2747, 1
      %v2849 = vsel %vm1481, %v2846, %v2848
      %v2850 = vrot.slane %v2748, 1
      %v2851 = vrot.slane %v2749, 1
      %v2852 = vsel %vm1481, %v2850, %v2851
      %v2853 = vrot.slane %v2750, 1
      %v2854 = vsel %vm1481, %v2851, %v2853
      %v2855 = vrot.slane %v2751, 1
      %v2856 = vrot.slane %v2752, 1
      %v2857 = vsel %vm1481, %v2855, %v2856
      %v2858 = vrot.slane %v2753, 1
      %v2859 = vsel %vm1481, %v2856, %v2858
      %v2860 = vrot.slane %v2754, 1
      %v2861 = vrot.slane %v2755, 1
      %v2862 = vsel %vm1481, %v2860, %v2861
      %v2863 = vrot.slane %v2756, 1
      %v2864 = vsel %vm1481, %v2861, %v2863
      %v2865 = vrot.slane %v2757, 1
      %v2866 = vrot.slane %v2758, 1
      %v2867 = vsel %vm1481, %v2865, %v2866
      %v2868 = vrot.slane %v2759, 1
      %v2869 = vsel %vm1481, %v2866, %v2868
      %v2870 = vrot.slane %v2760, 1
      %v2871 = vrot.slane %v2761, 1
      %v2872 = vsel %vm1481, %v2870, %v2871
      %v2873 = vrot.slane %v2762, 1
      %v2874 = vsel %vm1481, %v2871, %v2873
      %v2875 = vrot.slane %v2763, 1
      %v2876 = vrot.slane %v2764, 1
      %v2877 = vsel %vm1481, %v2875, %v2876
      %v2878 = vrot.slane %v2765, 1
      %v2879 = vsel %vm1481, %v2876, %v2878
      %v2880 = vrot.slane %v2766, 1
      %v2881 = vrot.slane %v2767, 1
      %v2882 = vsel %vm1481, %v2880, %v2881
      %v2883 = vrot.slane %v2768, 1
      %v2884 = vsel %vm1481, %v2881, %v2883
      %v2885 = vrot.slane %v2769, 1
      %v2886 = vrot.slane %v2770, 1
      %v2887 = vsel %vm1481, %v2885, %v2886
      %v2888 = vrot.slane %v2771, 1
      %v2889 = vsel %vm1481, %v2886, %v2888
      %v2890 = vrot.slane %v2772, 1
      %v2891 = vrot.slane %v2773, 1
      %v2892 = vsel %vm1481, %v2890, %v2891
      %v2893 = vrot.slane %v2774, 1
      %v2894 = vsel %vm1481, %v2891, %v2893
      %v2895 = vrot.slane %v2775, 1
      %v2896 = vrot.slane %v2776, 1
      %v2897 = vsel %vm1481, %v2895, %v2896
      %v2898 = vrot.slane %v2777, 1
      %v2899 = vsel %vm1481, %v2896, %v2898
      %v2900 = vrot.slane %v2778, 1
      %v2901 = vrot.slane %v2779, 1
      %v2902 = vsel %vm1481, %v2900, %v2901
      %v2903 = vrot.slane %v2780, 1
      %v2904 = vsel %vm1481, %v2901, %v2903
      %v2905 = vrot.slane %v2781, 1
      %v2906 = vrot.slane %v2782, 1
      %v2907 = vsel %vm1481, %v2905, %v2906
      %v2908 = vrot.slane %v2783, 1
      %v2909 = vsel %vm1481, %v2906, %v2908
      %v2910 = vrot.slane %v2784, 1
      %v2911 = vrot.slane %v2785, 1
      %v2912 = vsel %vm1481, %v2910, %v2911
      %v2913 = vrot.slane %v2786, 1
      %v2914 = vsel %vm1481, %v2911, %v2913
      %v2947 = vadd.f32 %v2674, %v2837
      %v2948 = vadd.f32 %v2675, %v2839
      %v2949 = vadd.f32 %v2676, %v2842
      %v2950 = vadd.f32 %v2677, %v2844
      %v2951 = vadd.f32 %v2678, %v2847
      %v2952 = vadd.f32 %v2679, %v2849
      %v2953 = vadd.f32 %v2680, %v2852
      %v2954 = vadd.f32 %v2681, %v2854
      %v2955 = vadd.f32 %v2682, %v2857
      %v2956 = vadd.f32 %v2683, %v2859
      %v2957 = vadd.f32 %v2684, %v2862
      %v2958 = vadd.f32 %v2685, %v2864
      %v2959 = vadd.f32 %v2686, %v2867
      %v2960 = vadd.f32 %v2687, %v2869
      %v2961 = vadd.f32 %v2688, %v2872
      %v2962 = vadd.f32 %v2689, %v2874
      %v2963 = vadd.f32 %v2690, %v2877
      %v2964 = vadd.f32 %v2691, %v2879
      %v2965 = vadd.f32 %v2692, %v2882
      %v2966 = vadd.f32 %v2693, %v2884
      %v2967 = vadd.f32 %v2694, %v2887
      %v2968 = vadd.f32 %v2695, %v2889
      %v2969 = vadd.f32 %v2696, %v2892
      %v2970 = vadd.f32 %v2697, %v2894
      %v2971 = vadd.f32 %v2698, %v2897
      %v2972 = vadd.f32 %v2699, %v2899
      %v2973 = vadd.f32 %v2700, %v2902
      %v2974 = vadd.f32 %v2701, %v2904
      %v2975 = vadd.f32 %v2702, %v2907
      %v2976 = vadd.f32 %v2703, %v2909
      %v2977 = vadd.f32 %v2704, %v2912
      %v2978 = vadd.f32 %v2705, %v2914
      %v2979 = vld [vmem:[%s2576] sm:$0xe]
      %v2980 = vld [vmem:[%s2576 + $0x10] sm:$0xe]
      %v2981 = vld [vmem:[%s2576 + $0x20] sm:$0xe]
      %v2982 = vld [vmem:[%s2576 + $0x30] sm:$0xe]
      %v2983 = vld [vmem:[%s2576 + $0x40] sm:$0xe]
      %v2984 = vld [vmem:[%s2576 + $0x50] sm:$0xe]
      %v2985 = vld [vmem:[%s2576 + $0x60] sm:$0xe]
      %v2986 = vld [vmem:[%s2576 + $0x70] sm:$0xe]
      %v2987 = vld [vmem:[%s2576 + $0x80] sm:$0xe]
      %v2988 = vld [vmem:[%s2576 + $0x90] sm:$0xe]
      %v2989 = vld [vmem:[%s2576 + $0xa0] sm:$0xe]
      %v2990 = vld [vmem:[%s2576 + $0xb0] sm:$0xe]
      %v2991 = vld [vmem:[%s2576 + $0xc0] sm:$0xe]
      %v2992 = vld [vmem:[%s2576 + $0xd0] sm:$0xe]
      %v2993 = vld [vmem:[%s2576 + $0xe0] sm:$0xe]
      %v2994 = vld [vmem:[%s2576 + $0xf0] sm:$0xe]
      %v2995 = vunpack.c.l.bf16 %v2979
      %v2996 = vunpack.c.l.bf16 %v2980
      %v2997 = vunpack.c.l.bf16 %v2981
      %v2998 = vunpack.c.l.bf16 %v2982
      %v2999 = vunpack.c.l.bf16 %v2983
      %v3000 = vunpack.c.l.bf16 %v2984
      %v3001 = vunpack.c.l.bf16 %v2985
      %v3002 = vunpack.c.l.bf16 %v2986
      %v3003 = vunpack.c.l.bf16 %v2987
      %v3004 = vunpack.c.l.bf16 %v2988
      %v3005 = vunpack.c.l.bf16 %v2989
      %v3006 = vunpack.c.l.bf16 %v2990
      %v3007 = vunpack.c.l.bf16 %v2991
      %v3008 = vunpack.c.l.bf16 %v2992
      %v3009 = vunpack.c.l.bf16 %v2993
      %v3010 = vunpack.c.l.bf16 %v2994
      %v3011 = vperm.slane %v1254, 2
      %v3012 = vmul.f32 %v2995, %v3011
      %v3013 = vmul.f32 %v2610, %v3011
      %v3014 = vmul.f32 %v2722, %v3011
      %v3015 = vmul.f32 %v2996, %v3011
      %v3016 = vmul.f32 %v2612, %v3011
      %v3017 = vmul.f32 %v2723, %v3011
      %v3018 = vmul.f32 %v2997, %v3011
      %v3019 = vmul.f32 %v2614, %v3011
      %v3020 = vmul.f32 %v2724, %v3011
      %v3021 = vmul.f32 %v2998, %v3011
      %v3022 = vmul.f32 %v2616, %v3011
      %v3023 = vmul.f32 %v2725, %v3011
      %v3024 = vmul.f32 %v2999, %v3011
      %v3025 = vmul.f32 %v2618, %v3011
      %v3026 = vmul.f32 %v2726, %v3011
      %v3027 = vmul.f32 %v3000, %v3011
      %v3028 = vmul.f32 %v2620, %v3011
      %v3029 = vmul.f32 %v2727, %v3011
      %v3030 = vmul.f32 %v3001, %v3011
      %v3031 = vmul.f32 %v2622, %v3011
      %v3032 = vmul.f32 %v2728, %v3011
      %v3033 = vmul.f32 %v3002, %v3011
      %v3034 = vmul.f32 %v2624, %v3011
      %v3035 = vmul.f32 %v2729, %v3011
      %v3036 = vmul.f32 %v3003, %v3011
      %v3037 = vmul.f32 %v2626, %v3011
      %v3038 = vmul.f32 %v2730, %v3011
      %v3039 = vmul.f32 %v3004, %v3011
      %v3040 = vmul.f32 %v2628, %v3011
      %v3041 = vmul.f32 %v2731, %v3011
      %v3042 = vmul.f32 %v3005, %v3011
      %v3043 = vmul.f32 %v2630, %v3011
      %v3044 = vmul.f32 %v2732, %v3011
      %v3045 = vmul.f32 %v3006, %v3011
      %v3046 = vmul.f32 %v2632, %v3011
      %v3047 = vmul.f32 %v2733, %v3011
      %v3048 = vmul.f32 %v3007, %v3011
      %v3049 = vmul.f32 %v2634, %v3011
      %v3050 = vmul.f32 %v2734, %v3011
      %v3051 = vmul.f32 %v3008, %v3011
      %v3052 = vmul.f32 %v2636, %v3011
      %v3053 = vmul.f32 %v2735, %v3011
      %v3054 = vmul.f32 %v3009, %v3011
      %v3055 = vmul.f32 %v2638, %v3011
      %v3056 = vmul.f32 %v2736, %v3011
      %v3057 = vmul.f32 %v3010, %v3011
      %v3058 = vmul.f32 %v2640, %v3011
      %v3059 = vmul.f32 %v2737, %v3011
      %v3108 = vrot.slane %v3012, 2
      %v3109 = vrot.slane %v3013, 2
      %v3110 = vsel %vm1755, %v3108, %v3109
      %v3111 = vrot.slane %v3014, 2
      %v3112 = vsel %vm1755, %v3109, %v3111
      %v3113 = vrot.slane %v3015, 2
      %v3114 = vrot.slane %v3016, 2
      %v3115 = vsel %vm1755, %v3113, %v3114
      %v3116 = vrot.slane %v3017, 2
      %v3117 = vsel %vm1755, %v3114, %v3116
      %v3118 = vrot.slane %v3018, 2
      %v3119 = vrot.slane %v3019, 2
      %v3120 = vsel %vm1755, %v3118, %v3119
      %v3121 = vrot.slane %v3020, 2
      %v3122 = vsel %vm1755, %v3119, %v3121
      %v3123 = vrot.slane %v3021, 2
      %v3124 = vrot.slane %v3022, 2
      %v3125 = vsel %vm1755, %v3123, %v3124
      %v3126 = vrot.slane %v3023, 2
      %v3127 = vsel %vm1755, %v3124, %v3126
      %v3128 = vrot.slane %v3024, 2
      %v3129 = vrot.slane %v3025, 2
      %v3130 = vsel %vm1755, %v3128, %v3129
      %v3131 = vrot.slane %v3026, 2
      %v3132 = vsel %vm1755, %v3129, %v3131
      %v3133 = vrot.slane %v3027, 2
      %v3134 = vrot.slane %v3028, 2
      %v3135 = vsel %vm1755, %v3133, %v3134
      %v3136 = vrot.slane %v3029, 2
      %v3137 = vsel %vm1755, %v3134, %v3136
      %v3138 = vrot.slane %v3030, 2
      %v3139 = vrot.slane %v3031, 2
      %v3140 = vsel %vm1755, %v3138, %v3139
      %v3141 = vrot.slane %v3032, 2
      %v3142 = vsel %vm1755, %v3139, %v3141
      %v3143 = vrot.slane %v3033, 2
      %v3144 = vrot.slane %v3034, 2
      %v3145 = vsel %vm1755, %v3143, %v3144
      %v3146 = vrot.slane %v3035, 2
      %v3147 = vsel %vm1755, %v3144, %v3146
      %v3148 = vrot.slane %v3036, 2
      %v3149 = vrot.slane %v3037, 2
      %v3150 = vsel %vm1755, %v3148, %v3149
      %v3151 = vrot.slane %v3038, 2
      %v3152 = vsel %vm1755, %v3149, %v3151
      %v3153 = vrot.slane %v3039, 2
      %v3154 = vrot.slane %v3040, 2
      %v3155 = vsel %vm1755, %v3153, %v3154
      %v3156 = vrot.slane %v3041, 2
      %v3157 = vsel %vm1755, %v3154, %v3156
      %v3158 = vrot.slane %v3042, 2
      %v3159 = vrot.slane %v3043, 2
      %v3160 = vsel %vm1755, %v3158, %v3159
      %v3161 = vrot.slane %v3044, 2
      %v3162 = vsel %vm1755, %v3159, %v3161
      %v3163 = vrot.slane %v3045, 2
      %v3164 = vrot.slane %v3046, 2
      %v3165 = vsel %vm1755, %v3163, %v3164
      %v3166 = vrot.slane %v3047, 2
      %v3167 = vsel %vm1755, %v3164, %v3166
      %v3168 = vrot.slane %v3048, 2
      %v3169 = vrot.slane %v3049, 2
      %v3170 = vsel %vm1755, %v3168, %v3169
      %v3171 = vrot.slane %v3050, 2
      %v3172 = vsel %vm1755, %v3169, %v3171
      %v3173 = vrot.slane %v3051, 2
      %v3174 = vrot.slane %v3052, 2
      %v3175 = vsel %vm1755, %v3173, %v3174
      %v3176 = vrot.slane %v3053, 2
      %v3177 = vsel %vm1755, %v3174, %v3176
      %v3178 = vrot.slane %v3054, 2
      %v3179 = vrot.slane %v3055, 2
      %v3180 = vsel %vm1755, %v3178, %v3179
      %v3181 = vrot.slane %v3056, 2
      %v3182 = vsel %vm1755, %v3179, %v3181
      %v3183 = vrot.slane %v3057, 2
      %v3184 = vrot.slane %v3058, 2
      %v3185 = vsel %vm1755, %v3183, %v3184
      %v3186 = vrot.slane %v3059, 2
      %v3187 = vsel %vm1755, %v3184, %v3186
      %v3220 = vadd.f32 %v2947, %v3110
      %v3221 = vadd.f32 %v2948, %v3112
      %v3222 = vadd.f32 %v2949, %v3115
      %v3223 = vadd.f32 %v2950, %v3117
      %v3224 = vadd.f32 %v2951, %v3120
      %v3225 = vadd.f32 %v2952, %v3122
      %v3226 = vadd.f32 %v2953, %v3125
      %v3227 = vadd.f32 %v2954, %v3127
      %v3228 = vadd.f32 %v2955, %v3130
      %v3229 = vadd.f32 %v2956, %v3132
      %v3230 = vadd.f32 %v2957, %v3135
      %v3231 = vadd.f32 %v2958, %v3137
      %v3232 = vadd.f32 %v2959, %v3140
      %v3233 = vadd.f32 %v2960, %v3142
      %v3234 = vadd.f32 %v2961, %v3145
      %v3235 = vadd.f32 %v2962, %v3147
      %v3236 = vadd.f32 %v2963, %v3150
      %v3237 = vadd.f32 %v2964, %v3152
      %v3238 = vadd.f32 %v2965, %v3155
      %v3239 = vadd.f32 %v2966, %v3157
      %v3240 = vadd.f32 %v2967, %v3160
      %v3241 = vadd.f32 %v2968, %v3162
      %v3242 = vadd.f32 %v2969, %v3165
      %v3243 = vadd.f32 %v2970, %v3167
      %v3244 = vadd.f32 %v2971, %v3170
      %v3245 = vadd.f32 %v2972, %v3172
      %v3246 = vadd.f32 %v2973, %v3175
      %v3247 = vadd.f32 %v2974, %v3177
      %v3248 = vadd.f32 %v2975, %v3180
      %v3249 = vadd.f32 %v2976, %v3182
      %v3250 = vadd.f32 %v2977, %v3185
      %v3251 = vadd.f32 %v2978, %v3187
      %v3252 = vld [vmem:[%s4] sm:$0x1]
      %v3254 = vperm.slane %v3252, 0
      %v3256 = vadd.f32 %v3220, %v3254
      %v3257 = vadd.f32 %v3221, %v3254
      %v3258 = vadd.f32 %v3222, %v3254
      %v3259 = vadd.f32 %v3223, %v3254
      %v3260 = vadd.f32 %v3224, %v3254
      %v3261 = vadd.f32 %v3225, %v3254
      %v3262 = vadd.f32 %v3226, %v3254
      %v3263 = vadd.f32 %v3227, %v3254
      %v3264 = vadd.f32 %v3228, %v3254
      %v3265 = vadd.f32 %v3229, %v3254
      %v3266 = vadd.f32 %v3230, %v3254
      %v3267 = vadd.f32 %v3231, %v3254
      %v3268 = vadd.f32 %v3232, %v3254
      %v3269 = vadd.f32 %v3233, %v3254
      %v3270 = vadd.f32 %v3234, %v3254
      %v3271 = vadd.f32 %v3235, %v3254
      %v3272 = vadd.f32 %v3236, %v3254
      %v3273 = vadd.f32 %v3237, %v3254
      %v3274 = vadd.f32 %v3238, %v3254
      %v3275 = vadd.f32 %v3239, %v3254
      %v3276 = vadd.f32 %v3240, %v3254
      %v3277 = vadd.f32 %v3241, %v3254
      %v3278 = vadd.f32 %v3242, %v3254
      %v3279 = vadd.f32 %v3243, %v3254
      %v3280 = vadd.f32 %v3244, %v3254
      %v3281 = vadd.f32 %v3245, %v3254
      %v3282 = vadd.f32 %v3246, %v3254
      %v3283 = vadd.f32 %v3247, %v3254
      %v3284 = vadd.f32 %v3248, %v3254
      %v3285 = vadd.f32 %v3249, %v3254
      %v3286 = vadd.f32 %v3250, %v3254
      %v3287 = vadd.f32 %v3251, %v3254
      %v3288 = vmax.f32 %v3256, 0.0
      %v3289 = vmax.f32 %v3257, 0.0
      %v3290 = vmax.f32 %v3258, 0.0
      %v3291 = vmax.f32 %v3259, 0.0
      %v3292 = vmax.f32 %v3260, 0.0
      %v3293 = vmax.f32 %v3261, 0.0
      %v3294 = vmax.f32 %v3262, 0.0
      %v3295 = vmax.f32 %v3263, 0.0
      %v3296 = vmax.f32 %v3264, 0.0
      %v3297 = vmax.f32 %v3265, 0.0
      %v3298 = vmax.f32 %v3266, 0.0
      %v3299 = vmax.f32 %v3267, 0.0
      %v3300 = vmax.f32 %v3268, 0.0
      %v3301 = vmax.f32 %v3269, 0.0
      %v3302 = vmax.f32 %v3270, 0.0
      %v3303 = vmax.f32 %v3271, 0.0
      %v3304 = vmax.f32 %v3272, 0.0
      %v3305 = vmax.f32 %v3273, 0.0
      %v3306 = vmax.f32 %v3274, 0.0
      %v3307 = vmax.f32 %v3275, 0.0
      %v3308 = vmax.f32 %v3276, 0.0
      %v3309 = vmax.f32 %v3277, 0.0
      %v3310 = vmax.f32 %v3278, 0.0
      %v3311 = vmax.f32 %v3279, 0.0
      %v3312 = vmax.f32 %v3280, 0.0
      %v3313 = vmax.f32 %v3281, 0.0
      %v3314 = vmax.f32 %v3282, 0.0
      %v3315 = vmax.f32 %v3283, 0.0
      %v3316 = vmax.f32 %v3284, 0.0
      %v3317 = vmax.f32 %v3285, 0.0
      %v3318 = vmax.f32 %v3286, 0.0
      %v3319 = vmax.f32 %v3287, 0.0
      %v3320 = vmin.f32 %v3288, 6.0
      %v3321 = vmin.f32 %v3289, 6.0
      %v3322 = vmin.f32 %v3290, 6.0
      %v3323 = vmin.f32 %v3291, 6.0
      %v3324 = vmin.f32 %v3292, 6.0
      %v3325 = vmin.f32 %v3293, 6.0
      %v3326 = vmin.f32 %v3294, 6.0
      %v3327 = vmin.f32 %v3295, 6.0
      %v3328 = vmin.f32 %v3296, 6.0
      %v3329 = vmin.f32 %v3297, 6.0
      %v3330 = vmin.f32 %v3298, 6.0
      %v3331 = vmin.f32 %v3299, 6.0
      %v3332 = vmin.f32 %v3300, 6.0
      %v3333 = vmin.f32 %v3301, 6.0
      %v3334 = vmin.f32 %v3302, 6.0
      %v3335 = vmin.f32 %v3303, 6.0
      %v3336 = vmin.f32 %v3304, 6.0
      %v3337 = vmin.f32 %v3305, 6.0
      %v3338 = vmin.f32 %v3306, 6.0
      %v3339 = vmin.f32 %v3307, 6.0
      %v3340 = vmin.f32 %v3308, 6.0
      %v3341 = vmin.f32 %v3309, 6.0
      %v3342 = vmin.f32 %v3310, 6.0
      %v3343 = vmin.f32 %v3311, 6.0
      %v3344 = vmin.f32 %v3312, 6.0
      %v3345 = vmin.f32 %v3313, 6.0
      %v3346 = vmin.f32 %v3314, 6.0
      %v3347 = vmin.f32 %v3315, 6.0
      %v3348 = vmin.f32 %v3316, 6.0
      %v3349 = vmin.f32 %v3317, 6.0
      %v3350 = vmin.f32 %v3318, 6.0
      %v3351 = vmin.f32 %v3319, 6.0
      %v3352 = vpack.c.bf16 %v3321, %v3320
      %v3353 = vpack.c.bf16 %v3323, %v3322
      %v3354 = vpack.c.bf16 %v3325, %v3324
      %v3355 = vpack.c.bf16 %v3327, %v3326
      %v3356 = vpack.c.bf16 %v3329, %v3328
      %v3357 = vpack.c.bf16 %v3331, %v3330
      %v3358 = vpack.c.bf16 %v3333, %v3332
      %v3359 = vpack.c.bf16 %v3335, %v3334
      %v3360 = vpack.c.bf16 %v3337, %v3336
      %v3361 = vpack.c.bf16 %v3339, %v3338
      %v3362 = vpack.c.bf16 %v3341, %v3340
      %v3363 = vpack.c.bf16 %v3343, %v3342
      %v3364 = vpack.c.bf16 %v3345, %v3344
      %v3365 = vpack.c.bf16 %v3347, %v3346
      %v3366 = vpack.c.bf16 %v3349, %v3348
      %v3367 = vpack.c.bf16 %v3351, %v3350
      %v3368 = vld [vmem:[%s5] sm:$0xf]
      %v3369 = vld [vmem:[%s5 + $0x4] sm:$0xf]
      %v3370 = vld [vmem:[%s5 + $0x8] sm:$0xf]
      %v3371 = vld [vmem:[%s5 + $0xc] sm:$0xf]
      %v3372 = vld [vmem:[%s5 + $0x10] sm:$0xf]
      %v3373 = vld [vmem:[%s5 + $0x14] sm:$0xf]
      %v3374 = vld [vmem:[%s5 + $0x18] sm:$0xf]
      %v3375 = vld [vmem:[%s5 + $0x1c] sm:$0xf]
      %v3376 = vld [vmem:[%s5 + $0x20] sm:$0xf]
      %v3377 = vld [vmem:[%s5 + $0x24] sm:$0xf]
      %v3378 = vld [vmem:[%s5 + $0x28] sm:$0xf]
      %v3379 = vld [vmem:[%s5 + $0x2c] sm:$0xf]
      %v3380 = vld [vmem:[%s5 + $0x30] sm:$0xf]
      %v3381 = vld [vmem:[%s5 + $0x34] sm:$0xf]
      %v3382 = vld [vmem:[%s5 + $0x38] sm:$0xf]
      %v3383 = vld [vmem:[%s5 + $0x3c] sm:$0xf]
      %v3384 = vld [vmem:[%s6] sm:$0x1]
      %v3386 = vperm.slane %v3384, 0
      %v3404 = vunpack.c.l.b16 %v3368
      %v3405 = vunpack.c.l.b16 %v3369
      %v3406 = vunpack.c.l.b16 %v3370
      %v3407 = vunpack.c.l.b16 %v3371
      %v3408 = vunpack.c.l.b16 %v3372
      %v3409 = vunpack.c.l.b16 %v3373
      %v3410 = vunpack.c.l.b16 %v3374
      %v3411 = vunpack.c.l.b16 %v3375
      %v3412 = vunpack.c.l.b16 %v3376
      %v3413 = vunpack.c.l.b16 %v3377
      %v3414 = vunpack.c.l.b16 %v3378
      %v3415 = vunpack.c.l.b16 %v3379
      %v3416 = vunpack.c.l.b16 %v3380
      %v3417 = vunpack.c.l.b16 %v3381
      %v3418 = vunpack.c.l.b16 %v3382
      %v3419 = vunpack.c.l.b16 %v3383
      %v3420 = vpack.c.b16 %v3405, %v3404
      %v3421 = vpack.c.b16 %v3407, %v3406
      %v3422 = vpack.c.b16 %v3409, %v3408
      %v3423 = vpack.c.b16 %v3411, %v3410
      %v3424 = vpack.c.b16 %v3413, %v3412
      %v3425 = vpack.c.b16 %v3415, %v3414
      %v3426 = vpack.c.b16 %v3417, %v3416
      %v3427 = vpack.c.b16 %v3419, %v3418
      %3436 = vmatpush.bf16.msra.mxu0 %v3427
      %3437 = vmatpush.bf16.msra.mxu0 %v3426
      %3438 = vmatpush.bf16.msra.mxu0 %v3425
      %3439 = vmatpush.bf16.msra.mxu0 %v3424
      %3440 = vmatpush.bf16.msra.mxu0 %v3423
      %3441 = vmatpush.bf16.msra.mxu0 %v3422
      %3442 = vmatpush.bf16.msra.mxu0 %v3421
      %3443 = vmatpush.bf16.msra.mxu0 %v3420
      %3444 = vmatmul.bf16.gmra.mxu0 %v3352
      %v3445 = vpop.f32.mrf.mxu0
      %v3446 = vadd.f32 %v3386, %v3445
      %v3447 = vpop.f32.mrf.mxu0
      %v3448 = vadd.f32 %v3386, %v3447
      %3449 = vmatmul.bf16.gmra.mxu0 %v3353
      %v3450 = vpop.f32.mrf.mxu0
      %v3451 = vadd.f32 %v3386, %v3450
      %v3452 = vpop.f32.mrf.mxu0
      %v3453 = vadd.f32 %v3386, %v3452
      %3454 = vmatmul.bf16.gmra.mxu0 %v3354
      %v3455 = vpop.f32.mrf.mxu0
      %v3456 = vadd.f32 %v3386, %v3455
      %v3457 = vpop.f32.mrf.mxu0
      %v3458 = vadd.f32 %v3386, %v3457
      %3459 = vmatmul.bf16.gmra.mxu0 %v3355
      %v3460 = vpop.f32.mrf.mxu0
      %v3461 = vadd.f32 %v3386, %v3460
      %v3462 = vpop.f32.mrf.mxu0
      %v3463 = vadd.f32 %v3386, %v3462
      %3464 = vmatmul.bf16.gmra.mxu0 %v3356
      %v3465 = vpop.f32.mrf.mxu0
      %v3466 = vadd.f32 %v3386, %v3465
      %v3467 = vpop.f32.mrf.mxu0
      %v3468 = vadd.f32 %v3386, %v3467
      %3469 = vmatmul.bf16.gmra.mxu0 %v3357
      %v3470 = vpop.f32.mrf.mxu0
      %v3471 = vadd.f32 %v3386, %v3470
      %v3472 = vpop.f32.mrf.mxu0
      %v3473 = vadd.f32 %v3386, %v3472
      %3474 = vmatmul.bf16.gmra.mxu0 %v3358
      %v3475 = vpop.f32.mrf.mxu0
      %v3476 = vadd.f32 %v3386, %v3475
      %v3477 = vpop.f32.mrf.mxu0
      %v3478 = vadd.f32 %v3386, %v3477
      %3479 = vmatmul.bf16.gmra.mxu0 %v3359
      %v3480 = vpop.f32.mrf.mxu0
      %v3481 = vadd.f32 %v3386, %v3480
      %v3482 = vpop.f32.mrf.mxu0
      %v3483 = vadd.f32 %v3386, %v3482
      %3484 = vmatmul.bf16.gmra.mxu0 %v3360
      %v3485 = vpop.f32.mrf.mxu0
      %v3486 = vadd.f32 %v3386, %v3485
      %v3487 = vpop.f32.mrf.mxu0
      %v3488 = vadd.f32 %v3386, %v3487
      %3489 = vmatmul.bf16.gmra.mxu0 %v3361
      %v3490 = vpop.f32.mrf.mxu0
      %v3491 = vadd.f32 %v3386, %v3490
      %v3492 = vpop.f32.mrf.mxu0
      %v3493 = vadd.f32 %v3386, %v3492
      %3494 = vmatmul.bf16.gmra.mxu0 %v3362
      %v3495 = vpop.f32.mrf.mxu0
      %v3496 = vadd.f32 %v3386, %v3495
      %v3497 = vpop.f32.mrf.mxu0
      %v3498 = vadd.f32 %v3386, %v3497
      %3499 = vmatmul.bf16.gmra.mxu0 %v3363
      %v3500 = vpop.f32.mrf.mxu0
      %v3501 = vadd.f32 %v3386, %v3500
      %v3502 = vpop.f32.mrf.mxu0
      %v3503 = vadd.f32 %v3386, %v3502
      %3504 = vmatmul.bf16.gmra.mxu0 %v3364
      %v3505 = vpop.f32.mrf.mxu0
      %v3506 = vadd.f32 %v3386, %v3505
      %v3507 = vpop.f32.mrf.mxu0
      %v3508 = vadd.f32 %v3386, %v3507
      %3509 = vmatmul.bf16.gmra.mxu0 %v3365
      %v3510 = vpop.f32.mrf.mxu0
      %v3511 = vadd.f32 %v3386, %v3510
      %v3512 = vpop.f32.mrf.mxu0
      %v3513 = vadd.f32 %v3386, %v3512
      %3514 = vmatmul.bf16.gmra.mxu0 %v3366
      %v3515 = vpop.f32.mrf.mxu0
      %v3516 = vadd.f32 %v3386, %v3515
      %v3517 = vpop.f32.mrf.mxu0
      %v3518 = vadd.f32 %v3386, %v3517
      %3519 = vmatmul.bf16.gmra.mxu0 %v3367
      %v3520 = vpop.f32.mrf.mxu0
      %v3521 = vadd.f32 %v3386, %v3520
      %v3522 = vpop.f32.mrf.mxu0
      %v3523 = vadd.f32 %v3386, %v3522
      %3524 = vdwg.mxu0
      %s3525 = sadd.s32 %s305, 1
      %s3526 = smul.u32 %s3525, 4
      %s3527 = smul.addr %s3526, 4
      %s3528 = scalar_lea.vmem %s292, %s3527
      %v3529 = vld [vmem:[%s3528] sm:$0xf]
      %v3530 = vld [vmem:[%s3528 + $0x4] sm:$0xf]
      %v3531 = vld [vmem:[%s3528 + $0x8] sm:$0x1]
      %v3532 = vld [vmem:[%s3528 + $0x10] sm:$0xf]
      %v3533 = vld [vmem:[%s3528 + $0x14] sm:$0xf]
      %v3534 = vld [vmem:[%s3528 + $0x18] sm:$0x1]
      %v3535 = vld [vmem:[%s3528 + $0x20] sm:$0xf]
      %v3536 = vld [vmem:[%s3528 + $0x24] sm:$0xf]
      %v3537 = vld [vmem:[%s3528 + $0x28] sm:$0x1]
      %v3538 = vld [vmem:[%s3528 + $0x30] sm:$0xf]
      %v3539 = vld [vmem:[%s3528 + $0x34] sm:$0xf]
      %v3540 = vld [vmem:[%s3528 + $0x38] sm:$0x1]
      %v3541 = vld [vmem:[%s3528 + $0x40] sm:$0xf]
      %v3542 = vld [vmem:[%s3528 + $0x44] sm:$0xf]
      %v3543 = vld [vmem:[%s3528 + $0x48] sm:$0x1]
      %v3544 = vld [vmem:[%s3528 + $0x50] sm:$0xf]
      %v3545 = vld [vmem:[%s3528 + $0x54] sm:$0xf]
      %v3546 = vld [vmem:[%s3528 + $0x58] sm:$0x1]
      %v3547 = vld [vmem:[%s3528 + $0x60] sm:$0xf]
      %v3548 = vld [vmem:[%s3528 + $0x64] sm:$0xf]
      %v3549 = vld [vmem:[%s3528 + $0x68] sm:$0x1]
      %v3550 = vld [vmem:[%s3528 + $0x70] sm:$0xf]
      %v3551 = vld [vmem:[%s3528 + $0x74] sm:$0xf]
      %v3552 = vld [vmem:[%s3528 + $0x78] sm:$0x1]
      %v3553 = vld [vmem:[%s3528 + $0x80] sm:$0xf]
      %v3554 = vld [vmem:[%s3528 + $0x84] sm:$0xf]
      %v3555 = vld [vmem:[%s3528 + $0x88] sm:$0x1]
      %v3556 = vld [vmem:[%s3528 + $0x90] sm:$0xf]
      %v3557 = vld [vmem:[%s3528 + $0x94] sm:$0xf]
      %v3558 = vld [vmem:[%s3528 + $0x98] sm:$0x1]
      %v3559 = vld [vmem:[%s3528 + $0xa0] sm:$0xf]
      %v3560 = vld [vmem:[%s3528 + $0xa4] sm:$0xf]
      %v3561 = vld [vmem:[%s3528 + $0xa8] sm:$0x1]
      %v3562 = vld [vmem:[%s3528 + $0xb0] sm:$0xf]
      %v3563 = vld [vmem:[%s3528 + $0xb4] sm:$0xf]
      %v3564 = vld [vmem:[%s3528 + $0xb8] sm:$0x1]
      %v3565 = vld [vmem:[%s3528 + $0xc0] sm:$0xf]
      %v3566 = vld [vmem:[%s3528 + $0xc4] sm:$0xf]
      %v3567 = vld [vmem:[%s3528 + $0xc8] sm:$0x1]
      %v3568 = vld [vmem:[%s3528 + $0xd0] sm:$0xf]
      %v3569 = vld [vmem:[%s3528 + $0xd4] sm:$0xf]
      %v3570 = vld [vmem:[%s3528 + $0xd8] sm:$0x1]
      %v3571 = vld [vmem:[%s3528 + $0xe0] sm:$0xf]
      %v3572 = vld [vmem:[%s3528 + $0xe4] sm:$0xf]
      %v3573 = vld [vmem:[%s3528 + $0xe8] sm:$0x1]
      %v3574 = vld [vmem:[%s3528 + $0xf0] sm:$0xf]
      %v3575 = vld [vmem:[%s3528 + $0xf4] sm:$0xf]
      %v3576 = vld [vmem:[%s3528 + $0xf8] sm:$0x1]
      %v3577 = vunpack.c.l.bf16 %v3529
      %v3578 = vunpack.c.l.bf16 %v3530
      %v3579 = vunpack.c.l.bf16 %v3531
      %v3580 = vunpack.c.l.bf16 %v3532
      %v3581 = vunpack.c.l.bf16 %v3533
      %v3582 = vunpack.c.l.bf16 %v3534
      %v3583 = vunpack.c.l.bf16 %v3535
      %v3584 = vunpack.c.l.bf16 %v3536
      %v3585 = vunpack.c.l.bf16 %v3537
      %v3586 = vunpack.c.l.bf16 %v3538
      %v3587 = vunpack.c.l.bf16 %v3539
      %v3588 = vunpack.c.l.bf16 %v3540
      %v3589 = vunpack.c.l.bf16 %v3541
      %v3590 = vunpack.c.l.bf16 %v3542
      %v3591 = vunpack.c.l.bf16 %v3543
      %v3592 = vunpack.c.l.bf16 %v3544
      %v3593 = vunpack.c.l.bf16 %v3545
      %v3594 = vunpack.c.l.bf16 %v3546
      %v3595 = vunpack.c.l.bf16 %v3547
      %v3596 = vunpack.c.l.bf16 %v3548
      %v3597 = vunpack.c.l.bf16 %v3549
      %v3598 = vunpack.c.l.bf16 %v3550
      %v3599 = vunpack.c.l.bf16 %v3551
      %v3600 = vunpack.c.l.bf16 %v3552
      %v3601 = vunpack.c.l.bf16 %v3553
      %v3602 = vunpack.c.l.bf16 %v3554
      %v3603 = vunpack.c.l.bf16 %v3555
      %v3604 = vunpack.c.l.bf16 %v3556
      %v3605 = vunpack.c.l.bf16 %v3557
      %v3606 = vunpack.c.l.bf16 %v3558
      %v3607 = vunpack.c.l.bf16 %v3559
      %v3608 = vunpack.c.l.bf16 %v3560
      %v3609 = vunpack.c.l.bf16 %v3561
      %v3610 = vunpack.c.l.bf16 %v3562
      %v3611 = vunpack.c.l.bf16 %v3563
      %v3612 = vunpack.c.l.bf16 %v3564
      %v3613 = vunpack.c.l.bf16 %v3565
      %v3614 = vunpack.c.l.bf16 %v3566
      %v3615 = vunpack.c.l.bf16 %v3567
      %v3616 = vunpack.c.l.bf16 %v3568
      %v3617 = vunpack.c.l.bf16 %v3569
      %v3618 = vunpack.c.l.bf16 %v3570
      %v3619 = vunpack.c.l.bf16 %v3571
      %v3620 = vunpack.c.l.bf16 %v3572
      %v3621 = vunpack.c.l.bf16 %v3573
      %v3622 = vunpack.c.l.bf16 %v3574
      %v3623 = vunpack.c.l.bf16 %v3575
      %v3624 = vunpack.c.l.bf16 %v3576
      %v3673 = vrot.slane %v3577, 1
      %v3674 = vrot.slane %v3578, 1
      %v3675 = vsel %vm1481, %v3673, %v3674
      %v3676 = vrot.slane %v3579, 1
      %v3677 = vsel %vm1481, %v3674, %v3676
      %v3678 = vrot.slane %v3580, 1
      %v3679 = vrot.slane %v3581, 1
      %v3680 = vsel %vm1481, %v3678, %v3679
      %v3681 = vrot.slane %v3582, 1
      %v3682 = vsel %vm1481, %v3679, %v3681
      %v3683 = vrot.slane %v3583, 1
      %v3684 = vrot.slane %v3584, 1
      %v3685 = vsel %vm1481, %v3683, %v3684
      %v3686 = vrot.slane %v3585, 1
      %v3687 = vsel %vm1481, %v3684, %v3686
      %v3688 = vrot.slane %v3586, 1
      %v3689 = vrot.slane %v3587, 1
      %v3690 = vsel %vm1481, %v3688, %v3689
      %v3691 = vrot.slane %v3588, 1
      %v3692 = vsel %vm1481, %v3689, %v3691
      %v3693 = vrot.slane %v3589, 1
      %v3694 = vrot.slane %v3590, 1
      %v3695 = vsel %vm1481, %v3693, %v3694
      %v3696 = vrot.slane %v3591, 1
      %v3697 = vsel %vm1481, %v3694, %v3696
      %v3698 = vrot.slane %v3592, 1
      %v3699 = vrot.slane %v3593, 1
      %v3700 = vsel %vm1481, %v3698, %v3699
      %v3701 = vrot.slane %v3594, 1
      %v3702 = vsel %vm1481, %v3699, %v3701
      %v3703 = vrot.slane %v3595, 1
      %v3704 = vrot.slane %v3596, 1
      %v3705 = vsel %vm1481, %v3703, %v3704
      %v3706 = vrot.slane %v3597, 1
      %v3707 = vsel %vm1481, %v3704, %v3706
      %v3708 = vrot.slane %v3598, 1
      %v3709 = vrot.slane %v3599, 1
      %v3710 = vsel %vm1481, %v3708, %v3709
      %v3711 = vrot.slane %v3600, 1
      %v3712 = vsel %vm1481, %v3709, %v3711
      %v3713 = vrot.slane %v3601, 1
      %v3714 = vrot.slane %v3602, 1
      %v3715 = vsel %vm1481, %v3713, %v3714
      %v3716 = vrot.slane %v3603, 1
      %v3717 = vsel %vm1481, %v3714, %v3716
      %v3718 = vrot.slane %v3604, 1
      %v3719 = vrot.slane %v3605, 1
      %v3720 = vsel %vm1481, %v3718, %v3719
      %v3721 = vrot.slane %v3606, 1
      %v3722 = vsel %vm1481, %v3719, %v3721
      %v3723 = vrot.slane %v3607, 1
      %v3724 = vrot.slane %v3608, 1
      %v3725 = vsel %vm1481, %v3723, %v3724
      %v3726 = vrot.slane %v3609, 1
      %v3727 = vsel %vm1481, %v3724, %v3726
      %v3728 = vrot.slane %v3610, 1
      %v3729 = vrot.slane %v3611, 1
      %v3730 = vsel %vm1481, %v3728, %v3729
      %v3731 = vrot.slane %v3612, 1
      %v3732 = vsel %vm1481, %v3729, %v3731
      %v3733 = vrot.slane %v3613, 1
      %v3734 = vrot.slane %v3614, 1
      %v3735 = vsel %vm1481, %v3733, %v3734
      %v3736 = vrot.slane %v3615, 1
      %v3737 = vsel %vm1481, %v3734, %v3736
      %v3738 = vrot.slane %v3616, 1
      %v3739 = vrot.slane %v3617, 1
      %v3740 = vsel %vm1481, %v3738, %v3739
      %v3741 = vrot.slane %v3618, 1
      %v3742 = vsel %vm1481, %v3739, %v3741
      %v3743 = vrot.slane %v3619, 1
      %v3744 = vrot.slane %v3620, 1
      %v3745 = vsel %vm1481, %v3743, %v3744
      %v3746 = vrot.slane %v3621, 1
      %v3747 = vsel %vm1481, %v3744, %v3746
      %v3748 = vrot.slane %v3622, 1
      %v3749 = vrot.slane %v3623, 1
      %v3750 = vsel %vm1481, %v3748, %v3749
      %v3751 = vrot.slane %v3624, 1
      %v3752 = vsel %vm1481, %v3749, %v3751
      %v3785 = vadd.f32 %v3446, %v3675
      %v3786 = vadd.f32 %v3448, %v3677
      %v3787 = vadd.f32 %v3451, %v3680
      %v3788 = vadd.f32 %v3453, %v3682
      %v3789 = vadd.f32 %v3456, %v3685
      %v3790 = vadd.f32 %v3458, %v3687
      %v3791 = vadd.f32 %v3461, %v3690
      %v3792 = vadd.f32 %v3463, %v3692
      %v3793 = vadd.f32 %v3466, %v3695
      %v3794 = vadd.f32 %v3468, %v3697
      %v3795 = vadd.f32 %v3471, %v3700
      %v3796 = vadd.f32 %v3473, %v3702
      %v3797 = vadd.f32 %v3476, %v3705
      %v3798 = vadd.f32 %v3478, %v3707
      %v3799 = vadd.f32 %v3481, %v3710
      %v3800 = vadd.f32 %v3483, %v3712
      %v3801 = vadd.f32 %v3486, %v3715
      %v3802 = vadd.f32 %v3488, %v3717
      %v3803 = vadd.f32 %v3491, %v3720
      %v3804 = vadd.f32 %v3493, %v3722
      %v3805 = vadd.f32 %v3496, %v3725
      %v3806 = vadd.f32 %v3498, %v3727
      %v3807 = vadd.f32 %v3501, %v3730
      %v3808 = vadd.f32 %v3503, %v3732
      %v3809 = vadd.f32 %v3506, %v3735
      %v3810 = vadd.f32 %v3508, %v3737
      %v3811 = vadd.f32 %v3511, %v3740
      %v3812 = vadd.f32 %v3513, %v3742
      %v3813 = vadd.f32 %v3516, %v3745
      %v3814 = vadd.f32 %v3518, %v3747
      %v3815 = vadd.f32 %v3521, %v3750
      %v3816 = vadd.f32 %v3523, %v3752
      %v3817 = vpack.c.bf16 %v3785, %v3785
      %v3818 = vpack.c.bf16 %v3786, %v3786
      %v3819 = vpack.c.bf16 %v3787, %v3787
      %v3820 = vpack.c.bf16 %v3788, %v3788
      %v3821 = vpack.c.bf16 %v3789, %v3789
      %v3822 = vpack.c.bf16 %v3790, %v3790
      %v3823 = vpack.c.bf16 %v3791, %v3791
      %v3824 = vpack.c.bf16 %v3792, %v3792
      %v3825 = vpack.c.bf16 %v3793, %v3793
      %v3826 = vpack.c.bf16 %v3794, %v3794
      %v3827 = vpack.c.bf16 %v3795, %v3795
      %v3828 = vpack.c.bf16 %v3796, %v3796
      %v3829 = vpack.c.bf16 %v3797, %v3797
      %v3830 = vpack.c.bf16 %v3798, %v3798
      %v3831 = vpack.c.bf16 %v3799, %v3799
      %v3832 = vpack.c.bf16 %v3800, %v3800
      %v3833 = vpack.c.bf16 %v3801, %v3801
      %v3834 = vpack.c.bf16 %v3802, %v3802
      %v3835 = vpack.c.bf16 %v3803, %v3803
      %v3836 = vpack.c.bf16 %v3804, %v3804
      %v3837 = vpack.c.bf16 %v3805, %v3805
      %v3838 = vpack.c.bf16 %v3806, %v3806
      %v3839 = vpack.c.bf16 %v3807, %v3807
      %v3840 = vpack.c.bf16 %v3808, %v3808
      %v3841 = vpack.c.bf16 %v3809, %v3809
      %v3842 = vpack.c.bf16 %v3810, %v3810
      %v3843 = vpack.c.bf16 %v3811, %v3811
      %v3844 = vpack.c.bf16 %v3812, %v3812
      %v3845 = vpack.c.bf16 %v3813, %v3813
      %v3846 = vpack.c.bf16 %v3814, %v3814
      %v3847 = vpack.c.bf16 %v3815, %v3815
      %v3848 = vpack.c.bf16 %v3816, %v3816
      %3849 = vst [vmem:[%s302] sm:$0xf] %v3817
      %3850 = vst [vmem:[%s302 + $0x4] sm:$0xf] %v3818
      %3851 = vst [vmem:[%s302 + $0x8] sm:$0xf] %v3819
      %3852 = vst [vmem:[%s302 + $0xc] sm:$0xf] %v3820
      %3853 = vst [vmem:[%s302 + $0x10] sm:$0xf] %v3821
      %3854 = vst [vmem:[%s302 + $0x14] sm:$0xf] %v3822
      %3855 = vst [vmem:[%s302 + $0x18] sm:$0xf] %v3823
      %3856 = vst [vmem:[%s302 + $0x1c] sm:$0xf] %v3824
      %3857 = vst [vmem:[%s302 + $0x20] sm:$0xf] %v3825
      %3858 = vst [vmem:[%s302 + $0x24] sm:$0xf] %v3826
      %3859 = vst [vmem:[%s302 + $0x28] sm:$0xf] %v3827
      %3860 = vst [vmem:[%s302 + $0x2c] sm:$0xf] %v3828
      %3861 = vst [vmem:[%s302 + $0x30] sm:$0xf] %v3829
      %3862 = vst [vmem:[%s302 + $0x34] sm:$0xf] %v3830
      %3863 = vst [vmem:[%s302 + $0x38] sm:$0xf] %v3831
      %3864 = vst [vmem:[%s302 + $0x3c] sm:$0xf] %v3832
      %3865 = vst [vmem:[%s302 + $0x40] sm:$0xf] %v3833
      %3866 = vst [vmem:[%s302 + $0x44] sm:$0xf] %v3834
      %3867 = vst [vmem:[%s302 + $0x48] sm:$0xf] %v3835
      %3868 = vst [vmem:[%s302 + $0x4c] sm:$0xf] %v3836
      %3869 = vst [vmem:[%s302 + $0x50] sm:$0xf] %v3837
      %3870 = vst [vmem:[%s302 + $0x54] sm:$0xf] %v3838
      %3871 = vst [vmem:[%s302 + $0x58] sm:$0xf] %v3839
      %3872 = vst [vmem:[%s302 + $0x5c] sm:$0xf] %v3840
      %3873 = vst [vmem:[%s302 + $0x60] sm:$0xf] %v3841
      %3874 = vst [vmem:[%s302 + $0x64] sm:$0xf] %v3842
      %3875 = vst [vmem:[%s302 + $0x68] sm:$0xf] %v3843
      %3876 = vst [vmem:[%s302 + $0x6c] sm:$0xf] %v3844
      %3877 = vst [vmem:[%s302 + $0x70] sm:$0xf] %v3845
      %3878 = vst [vmem:[%s302 + $0x74] sm:$0xf] %v3846
      %3879 = vst [vmem:[%s302 + $0x78] sm:$0xf] %v3847
      %3880 = vst [vmem:[%s302 + $0x7c] sm:$0xf] %v3848
      %s3881 = smul.u32 16, %s23
      %p3882 = scmp.lt.s32.totalorder %s22, 1
      %s3883 = scalar_select %p3882, %s22, 1
      %p3884 = scmp.lt.s32.totalorder %s3881, 15
      %s3885 = scalar_select %p3884, %s3881, 15
      %s3886 = smul.addr %s3885, 2
      %s3887 = smul.addr %s3883, 32
      %s3888 = sadd.s32 %s3886, %s3887
      %s3889 = smul.addr %s3888, 4
      %s3890 = scalar_lea.vmem %s7, %s3889
      // Predicated region
      $region53: #{inverted_residual_bottleneck.1} parent=47 // pred_check
        %p3891 = pneg %p202
      $region54: #{inverted_residual_bottleneck.1} parent=47 // pred_check_branch
        %3893 = sbr.rel (%p3891) target = $region56
      $region55: #{inverted_residual_bottleneck.1} parent=47 // pred_region
        %s3894 = smul.u32 16, %s23
      $region56: #{inverted_residual_bottleneck.1} parent=47 // pred_fallthru
        _
    $region48: #{inverted_residual_bottleneck.1} parent=5 // pred_fallthru
      _
    %p3895 = scmp.le.s32.totalorder 2, %s13
    // Predicated region
    $region57: #{inverted_residual_bottleneck.1} parent=5 // pred_check
      %p3896 = pneg %p3895
    $region58: #{inverted_residual_bottleneck.1} parent=5 // pred_check_branch
      %3898 = sbr.rel (%p3896) target = $region60
    $region59: #{inverted_residual_bottleneck.1} parent=5 // pred_region
      %s3899 = ssub.s32 %s13, 2
      // Predicated region
      $region61: #{inverted_residual_bottleneck.1} parent=59 // pred_check
        %p3900 = pneg %p208
      $region62: #{inverted_residual_bottleneck.1} parent=59 // pred_check_branch
        %3902 = sbr.rel (%p3900) target = $region64
      $region63: #{inverted_residual_bottleneck.1} parent=59 // pred_region
        %s3903 = smul.u32 16, %s25
        %p3904 = scmp.lt.s32.totalorder %s24, 1
        %s3905 = scalar_select %p3904, %s24, 1
        %p3906 = scmp.lt.s32.totalorder %s3903, 15
        %s3907 = scalar_select %p3906, %s3903, 15
        %s3908 = smul.addr %s3907, 2
        %s3909 = smul.addr %s3905, 32
        %s3910 = sadd.s32 %s3908, %s3909
        %s3911 = smul.addr %s3910, 4
        %s3912 = scalar_lea.vmem %s7, %s3911
      $region64: #{inverted_residual_bottleneck.1} parent=59 // pred_fallthru
        _
    $region60: #{inverted_residual_bottleneck.1} parent=5 // pred_fallthru
      _
  $region6: #{inverted_residual_bottleneck.1} parent=0 // loop_footer
    %s17 = sadd.s32 1, %s13
  $region7: #{inverted_residual_bottleneck.1} parent=0 // loop_footer_branch
    %12 = sbr.rel target = $region3
  $region8: #{inverted_residual_bottleneck.1} parent=0 // loop_exit
    _

</llo_original>
